<compile_context>
chip_gen: v6e
topology: v6e:2x2x1
jax: 0.10.0
libtpu: 0.0.40
codegen_flags: <defaults>
</compile_context>

<pallas_src>
import functools

import jax
import jax.numpy as jnp
from jax.experimental import pallas as pl
from jax.experimental.pallas import tpu as pltpu

NFTS = 768
H1, H2, H3 = 700, 250, 180


def _round_up(x, m):
    return (x + m - 1) // m * m


NFTS_P = _round_up(NFTS, 128)  # 768 (already aligned)
H1_P = _round_up(H1, 128)      # 768
H2_P = _round_up(H2, 128)      # 256
H3_P = _round_up(H3, 128)      # 256


def _sigmoid_fast(z):
    # 1 / (1 + exp(-z)); exp and the approximate reciprocal both issue on the
    # EUP slot, keeping the epilogue off the VALU.
    return pl.reciprocal(1.0 + jnp.exp(-z), approx=True)


def _mlp_kernel(x_ref, w1_ref, b1_ref, w2_ref, b2_ref, w3_ref, b3_ref, o_ref):
    x = x_ref[...]  # (TB, 768), compute dtype
    # layer 1: (TB, 768) @ (768, 768) ; f32 accumulate, f32 epilogue
    h = jnp.dot(x, w1_ref[...], preferred_element_type=jnp.float32)
    h = _sigmoid_fast(h + b1_ref[...])
    # layer 2: (TB, 768) @ (768, 256)
    h = jnp.dot(h.astype(w2_ref.dtype), w2_ref[...], preferred_element_type=jnp.float32)
    h = _sigmoid_fast(h + b2_ref[...])
    # layer 3: (TB, 256) @ (256, 256) ; exact f32 sigmoid on the output layer
    h = jnp.dot(h.astype(w3_ref.dtype), w3_ref[...], preferred_element_type=jnp.float32)
    o_ref[...] = jax.nn.sigmoid(h + b3_ref[...]).astype(o_ref.dtype)


def prepare_params(params, compute_dtype=jnp.float32):
    """Zero-pad params to lane-aligned shapes and cast weights ONCE (not per call)."""

    def pad(a, shape):
        out = jnp.zeros(shape, a.dtype)
        return out.at[tuple(slice(0, s) for s in a.shape)].set(a)

    return dict(
        w1=pad(params["w1"], (NFTS_P, H1_P)).astype(compute_dtype),
        b1=pad(params["b1"], (1, H1_P)).astype(jnp.float32),
        w2=pad(params["w2"], (H1_P, H2_P)).astype(compute_dtype),
        b2=pad(params["b2"], (1, H2_P)).astype(jnp.float32),
        w3=pad(params["w3"], (H2_P, H3_P)).astype(compute_dtype),
        b3=pad(params["b3"], (1, H3_P)).astype(jnp.float32),
    )


@functools.partial(jax.jit, static_argnames=("block_b",))
def base_model_forward(x, padded_params, *, block_b=128):
    """x: (B, 768). padded_params: output of prepare_params. Returns (B, 180) f32."""
    assert x.shape[1] == NFTS
    B = x.shape[0]
    p = padded_params
    compute_dtype = p["w1"].dtype

    # Batch tile: multiple of 8 (f32 sublane), capped at block_b.
    tb = min(block_b, _round_up(max(B, 1), 8))
    Bp = _round_up(B, tb)
    nb = Bp // tb

    xp = x.astype(compute_dtype)
    if Bp != B:
        xp = jnp.pad(xp, ((0, Bp - B), (0, 0)))

    itemsize = jnp.dtype(compute_dtype).itemsize
    flops = 2 * Bp * (NFTS_P * H1_P + H1_P * H2_P + H2_P * H3_P)
    transcendentals = Bp * (H1_P + H2_P + H3_P)
    bytes_accessed = (
        Bp * NFTS_P * itemsize
        + (NFTS_P * H1_P + H1_P * H2_P + H2_P * H3_P) * itemsize
        + (H1_P + H2_P + H3_P) * 4
        + Bp * H3_P * 4
    )

    def resident(shape):  # full-array block, same index every grid step -> stays in VMEM
        return pl.BlockSpec(shape, lambda i: (0, 0))

    out_padded = pl.pallas_call(
        _mlp_kernel,
        out_shape=jax.ShapeDtypeStruct((Bp, H3_P), jnp.float32),
        grid=(nb,),
        in_specs=[
            pl.BlockSpec((tb, NFTS_P), lambda i: (i, 0)),   # x: streamed per batch tile
            resident((NFTS_P, H1_P)), resident((1, H1_P)),
            resident((H1_P, H2_P)), resident((1, H2_P)),
            resident((H2_P, H3_P)), resident((1, H3_P)),
        ],
        out_specs=pl.BlockSpec((tb, H3_P), lambda i: (i, 0)),
        compiler_params=pltpu.CompilerParams(
            dimension_semantics=("parallel",),  # lets v7x split batch tiles across its 2 TCs
            vmem_limit_bytes=16 << 20,
        ),
        cost_estimate=pl.CostEstimate(
            flops=flops, transcendentals=transcendentals, bytes_accessed=bytes_accessed
        ),
    )(xp, p["w1"], p["b1"], p["w2"], p["b2"], p["w3"], p["b3"])

    return out_padded[:B, :H3]


def init_params(key):
    """Deterministic init mimicking nn.Linear's U(-1/sqrt(fan_in), 1/sqrt(fan_in)).
    Weights stored transposed vs PyTorch, i.e. (in_features, out_features)."""
    ks = jax.random.split(key, 6)

    def linear(kw, kb, fan_in, fan_out):
        bound = 1.0 / jnp.sqrt(jnp.float32(fan_in))
        w = jax.random.uniform(kw, (fan_in, fan_out), jnp.float32, -bound, bound)
        b = jax.random.uniform(kb, (1, fan_out), jnp.float32, -bound, bound)
        return w, b

    w1, b1 = linear(ks[0], ks[1], NFTS, H1)
    w2, b2 = linear(ks[2], ks[3], H1, H2)
    w3, b3 = linear(ks[4], ks[5], H2, H3)
    return dict(w1=w1, b1=b1, w2=w2, b2=b2, w3=w3, b3=b3)


def reference_forward(x, p):
    h = jax.nn.sigmoid(x @ p["w1"] + p["b1"])
    h = jax.nn.sigmoid(h @ p["w2"] + p["b2"])
    return jax.nn.sigmoid(h @ p["w3"] + p["b3"])


if __name__ == "__main__":
    key = jax.random.PRNGKey(0)
    kx, kp = jax.random.split(key)

    B = 256  # exercises the batch grid (2 tiles of 128)
    x = jax.random.normal(kx, (B, NFTS), jnp.float32)
    params = init_params(kp)
    ref = reference_forward(x, params)

    # f32 weight path (exact weights; tolerance covers approx-reciprocal sigmoid).
    p_f32 = prepare_params(params, jnp.float32)
    out_f32 = jax.block_until_ready(base_model_forward(x, p_f32, block_b=128))
    assert out_f32.shape == (B, H3)
    assert jnp.allclose(out_f32, ref, atol=2e-3, rtol=0), "f32 path mismatch vs reference"

    # bf16 weight path (halved weight HBM traffic, native MXU bf16 rate, f32 accumulate).
    p_bf16 = prepare_params(params, jnp.bfloat16)
    out_bf16 = jax.block_until_ready(base_model_forward(x, p_bf16, block_b=128))
    assert out_bf16.shape == (B, H3)
    assert jnp.allclose(out_bf16, ref, atol=3e-2, rtol=0), "bf16 path mismatch vs reference"

    print("KERNEL_OK")
</pallas_src>

<mosaic_0001>
module attributes {stable_mosaic.version = 11 : i64} {
  func.func @_mlp_kernel(%arg0: i32, %arg1: memref<128x768xf32, #tpu.memory_space<vmem>>, %arg2: memref<768x768xf32, #tpu.memory_space<vmem>>, %arg3: memref<1x768xf32, #tpu.memory_space<vmem>>, %arg4: memref<768x256xf32, #tpu.memory_space<vmem>>, %arg5: memref<1x256xf32, #tpu.memory_space<vmem>>, %arg6: memref<256x256xf32, #tpu.memory_space<vmem>>, %arg7: memref<1x256xf32, #tpu.memory_space<vmem>>, %arg8: memref<128x256xf32, #tpu.memory_space<vmem>>) attributes {dimension_semantics = [#tpu.dimension_semantics<parallel>], iteration_bounds = array<i64: 2>, scalar_prefetch = 0 : i64, scratch_operands = 0 : i64, tpu.core_type = #tpu.core_type<tc>, window_params = [{transform_indices = @transform_0, window_bounds = array<i64: 128, 768>}, {pipeline_mode = #tpu.pipeline_mode<synchronous>, transform_indices = @transform_1, window_bounds = array<i64: 768, 768>}, {pipeline_mode = #tpu.pipeline_mode<synchronous>, transform_indices = @transform_2, window_bounds = array<i64: 1, 768>}, {pipeline_mode = #tpu.pipeline_mode<synchronous>, transform_indices = @transform_3, window_bounds = array<i64: 768, 256>}, {pipeline_mode = #tpu.pipeline_mode<synchronous>, transform_indices = @transform_4, window_bounds = array<i64: 1, 256>}, {pipeline_mode = #tpu.pipeline_mode<synchronous>, transform_indices = @transform_5, window_bounds = array<i64: 256, 256>}, {pipeline_mode = #tpu.pipeline_mode<synchronous>, transform_indices = @transform_6, window_bounds = array<i64: 1, 256>}, {transform_indices = @transform_7, window_bounds = array<i64: 128, 256>}]} {
    %c0 = arith.constant 0 : index
    %c0_0 = arith.constant 0 : index
    %0 = vector.load %arg1[%c0, %c0_0] : memref<128x768xf32, #tpu.memory_space<vmem>>, vector<128x768xf32>
    %c0_1 = arith.constant 0 : index
    %c0_2 = arith.constant 0 : index
    %1 = vector.load %arg2[%c0_1, %c0_2] : memref<768x768xf32, #tpu.memory_space<vmem>>, vector<768x768xf32>
    %cst = arith.constant dense<0.000000e+00> : vector<128x768xf32>
    %2 = tpu.matmul %0, %1, %cst {dimension_numbers = #tpu.dot_dimension_numbers<[1], [0], [0], [1], [0, 0, 1, 1], [], []>} : vector<128x768xf32>, vector<768x768xf32>, vector<128x768xf32> -> vector<128x768xf32>
    %c0_3 = arith.constant 0 : index
    %c0_4 = arith.constant 0 : index
    %3 = vector.load %arg3[%c0_3, %c0_4] : memref<1x768xf32, #tpu.memory_space<vmem>>, vector<1x768xf32>
    %4 = vector.broadcast %3 : vector<1x768xf32> to vector<128x768xf32>
    %5 = arith.addf %2, %4 : vector<128x768xf32>
    %cst_5 = arith.constant 0.000000e+00 : f32
    %6 = vector.broadcast %cst_5 : f32 to vector<128x768xf32>
    %7 = arith.subf %6, %5 : vector<128x768xf32>
    %8 = math.exp %7 : vector<128x768xf32>
    %cst_6 = arith.constant 1.000000e+00 : f32
    %9 = vector.broadcast %cst_6 : f32 to vector<128x768xf32>
    %10 = arith.addf %9, %8 : vector<128x768xf32>
    %11 = tpu.reciprocal %10 {approx = true} : vector<128x768xf32> -> vector<128x768xf32>
    %c0_7 = arith.constant 0 : index
    %c0_8 = arith.constant 0 : index
    %12 = vector.load %arg4[%c0_7, %c0_8] : memref<768x256xf32, #tpu.memory_space<vmem>>, vector<768x256xf32>
    %cst_9 = arith.constant dense<0.000000e+00> : vector<128x256xf32>
    %13 = tpu.matmul %11, %12, %cst_9 {dimension_numbers = #tpu.dot_dimension_numbers<[1], [0], [0], [1], [0, 0, 1, 1], [], []>} : vector<128x768xf32>, vector<768x256xf32>, vector<128x256xf32> -> vector<128x256xf32>
    %c0_10 = arith.constant 0 : index
    %c0_11 = arith.constant 0 : index
    %14 = vector.load %arg5[%c0_10, %c0_11] : memref<1x256xf32, #tpu.memory_space<vmem>>, vector<1x256xf32>
    %15 = vector.broadcast %14 : vector<1x256xf32> to vector<128x256xf32>
    %16 = arith.addf %13, %15 : vector<128x256xf32>
    %cst_12 = arith.constant 0.000000e+00 : f32
    %17 = vector.broadcast %cst_12 : f32 to vector<128x256xf32>
    %18 = arith.subf %17, %16 : vector<128x256xf32>
    %19 = math.exp %18 : vector<128x256xf32>
    %cst_13 = arith.constant 1.000000e+00 : f32
    %20 = vector.broadcast %cst_13 : f32 to vector<128x256xf32>
    %21 = arith.addf %20, %19 : vector<128x256xf32>
    %22 = tpu.reciprocal %21 {approx = true} : vector<128x256xf32> -> vector<128x256xf32>
    %c0_14 = arith.constant 0 : index
    %c0_15 = arith.constant 0 : index
    %23 = vector.load %arg6[%c0_14, %c0_15] : memref<256x256xf32, #tpu.memory_space<vmem>>, vector<256x256xf32>
    %cst_16 = arith.constant dense<0.000000e+00> : vector<128x256xf32>
    %24 = tpu.matmul %22, %23, %cst_16 {dimension_numbers = #tpu.dot_dimension_numbers<[1], [0], [0], [1], [0, 0, 1, 1], [], []>} : vector<128x256xf32>, vector<256x256xf32>, vector<128x256xf32> -> vector<128x256xf32>
    %c0_17 = arith.constant 0 : index
    %c0_18 = arith.constant 0 : index
    %25 = vector.load %arg7[%c0_17, %c0_18] : memref<1x256xf32, #tpu.memory_space<vmem>>, vector<1x256xf32>
    %26 = vector.broadcast %25 : vector<1x256xf32> to vector<128x256xf32>
    %27 = arith.addf %24, %26 : vector<128x256xf32>
    %28 = arith.negf %27 : vector<128x256xf32>
    %29 = math.exp %28 : vector<128x256xf32>
    %cst_19 = arith.constant 1.000000e+00 : f32
    %30 = vector.broadcast %cst_19 : f32 to vector<128x256xf32>
    %31 = arith.addf %30, %29 : vector<128x256xf32>
    %32 = arith.divf %30, %31 : vector<128x256xf32>
    %c0_20 = arith.constant 0 : index
    %c0_21 = arith.constant 0 : index
    %33 = vector.load %arg8[%c0_20, %c0_21] : memref<128x256xf32, #tpu.memory_space<vmem>>, vector<128x256xf32>
    tpu.vector_store %arg8[%c0_20, %c0_21], %32 {strides = array<i32>} : memref<128x256xf32, #tpu.memory_space<vmem>>, vector<128x256xf32>,
    return
  }
  func.func @transform_0(%arg0: i32) -> (i32, i32) {
    %c0_i32 = arith.constant 0 : i32
    %c0_i32_0 = arith.constant 0 : i32
    return %arg0, %c0_i32 : i32, i32
  }
  func.func @transform_1(%arg0: i32) -> (i32, i32) {
    %c0_i32 = arith.constant 0 : i32
    %c0_i32_0 = arith.constant 0 : i32
    %c0_i32_1 = arith.constant 0 : i32
    return %c0_i32, %c0_i32_0 : i32, i32
  }
  func.func @transform_2(%arg0: i32) -> (i32, i32) {
    %c0_i32 = arith.constant 0 : i32
    %c0_i32_0 = arith.constant 0 : i32
    %c0_i32_1 = arith.constant 0 : i32
    return %c0_i32, %c0_i32_0 : i32, i32
  }
  func.func @transform_3(%arg0: i32) -> (i32, i32) {
    %c0_i32 = arith.constant 0 : i32
    %c0_i32_0 = arith.constant 0 : i32
    %c0_i32_1 = arith.constant 0 : i32
    return %c0_i32, %c0_i32_0 : i32, i32
  }
  func.func @transform_4(%arg0: i32) -> (i32, i32) {
    %c0_i32 = arith.constant 0 : i32
    %c0_i32_0 = arith.constant 0 : i32
    %c0_i32_1 = arith.constant 0 : i32
    return %c0_i32, %c0_i32_0 : i32, i32
  }
  func.func @transform_5(%arg0: i32) -> (i32, i32) {
    %c0_i32 = arith.constant 0 : i32
    %c0_i32_0 = arith.constant 0 : i32
    %c0_i32_1 = arith.constant 0 : i32
    return %c0_i32, %c0_i32_0 : i32, i32
  }
  func.func @transform_6(%arg0: i32) -> (i32, i32) {
    %c0_i32 = arith.constant 0 : i32
    %c0_i32_0 = arith.constant 0 : i32
    %c0_i32_1 = arith.constant 0 : i32
    return %c0_i32, %c0_i32_0 : i32, i32
  }
  func.func @transform_7(%arg0: i32) -> (i32, i32) {
    %c0_i32 = arith.constant 0 : i32
    %c0_i32_0 = arith.constant 0 : i32
    return %arg0, %c0_i32 : i32, i32
  }
}

</mosaic_0001>

<llo_original>
// kernel: base_model_forward.1
$region0: #{base_model_forward.1}
  #allocation0 [shape = 'u32[]', space=smem, size = 0x4, offset = 0x4, fixed_abs, tag = 'smem constant byte address 0x4 - core index']
  #allocation1 [shape = 'u32[144,128]{1,0:T(1,128)}', space=vmem, size = 0x12000, scoped, tag = 'internal scratch']
  %s0 = inlined_call_operand.hbm [shape: f32[256,768], index: 0, kind: input, shape index: {}]
  %s1 = inlined_call_operand.hbm [shape: f32[768,768], index: 1, kind: input, shape index: {}]
  %s2 = inlined_call_operand.hbm [shape: f32[1,768], index: 2, kind: input, shape index: {}]
  %s3 = inlined_call_operand.hbm [shape: f32[768,256], index: 3, kind: input, shape index: {}]
  %s4 = inlined_call_operand.hbm [shape: f32[1,256], index: 4, kind: input, shape index: {}]
  %s5 = inlined_call_operand.hbm [shape: f32[256,256], index: 5, kind: input, shape index: {}]
  %s6 = inlined_call_operand.hbm [shape: f32[1,256], index: 6, kind: input, shape index: {}]
  %s7 = inlined_call_operand.vmem [shape: f32[256,256], index: 7, kind: output, shape index: {}]
  %s8 = sld [smem:[#allocation0]]
  $region89: #{base_model_forward.1} parent=0
    _
  %s10 = ssub.s32 1, %s8
  %s11 = scalar_select 0, %s10, %s8
  $region1: #{base_model_forward.1} parent=0
    #allocation2 [shape = 'u8[786432]{0}', space=vmem, size = 0xc0000, scoped, tag = 'input window, operand 0']
    #allocation3 [shape = 's32[2]{0}', space=sflag, size = 0x8, scoped, tag = 'scoped memory for base_model_forward.1']
    #allocation4 [shape = 'u8[2359296]{0}', space=vmem, size = 0x240000, scoped, tag = 'input window, operand 1, single buffered']
    #allocation5 [shape = 's32[1]{0}', space=sflag, size = 0x4, scoped, tag = 'scoped memory for base_model_forward.1']
    #allocation6 [shape = 'u8[3072]{0}', space=vmem, size = 0xc00, scoped, tag = 'input window, operand 2, single buffered']
    #allocation7 [shape = 'u8[786432]{0}', space=vmem, size = 0xc0000, scoped, tag = 'input window, operand 3, single buffered']
    #allocation8 [shape = 's32[1]{0}', space=sflag, size = 0x4, scoped, tag = 'scoped memory for base_model_forward.1']
    #allocation9 [shape = 'u8[1024]{0}', space=vmem, size = 0x400, scoped, tag = 'input window, operand 4, single buffered']
    #allocation10 [shape = 'u8[262144]{0}', space=vmem, size = 0x40000, scoped, tag = 'input window, operand 5, single buffered']
    #allocation11 [shape = 's32[1]{0}', space=sflag, size = 0x4, scoped, tag = 'scoped memory for base_model_forward.1']
    #allocation12 [shape = 'u8[1024]{0}', space=vmem, size = 0x400, scoped, tag = 'input window, operand 6, single buffered']
    %12 = vsyncpa [#allocation3], 0
    %s13 = scalar_lea.sflag [#allocation3], 1
    %14 = vsyncpa %s13, 0
    %15 = vsyncpa [#allocation5], 0
    %16 = vsyncpa [#allocation8], 0
    %17 = vsyncpa [#allocation11], 0
    loop: start=0, step=1, limit=4
    $region2: #{base_model_forward.1} parent=1 // loop_pre_header
      _
    $region3: #{base_model_forward.1} parent=1 // loop_header
      %s19 = sphi 0, %s23
      %p20 = scmp.ge.s32.totalorder %s19, 4
      %s29 = sphi 0, %s31
      %s32 = sphi 0, %s29
      %s33 = sphi 0, %s32
      %s49 = sphi 0, %s33
      %s53 = sphi 0, %s53
      %s55 = sphi 0, %s53
      %s56 = sphi 0, %s55
      %s70 = sphi 0, %s56
      %s74 = sphi 0, %s74
      %s76 = sphi 0, %s74
      %s77 = sphi 0, %s76
      %s91 = sphi 0, %s77
      %s95 = sphi 0, %s95
      %s97 = sphi 0, %s95
      %s98 = sphi 0, %s97
      %s112 = sphi 0, %s98
      %s116 = sphi 0, %s116
      %s118 = sphi 0, %s116
      %s119 = sphi 0, %s118
      %s133 = sphi 0, %s119
      %s137 = sphi 0, %s137
      %s139 = sphi 0, %s137
      %s140 = sphi 0, %s139
      %s154 = sphi 0, %s140
      %s158 = sphi 0, %s158
      %s160 = sphi 0, %s158
      %s161 = sphi 0, %s160
      %s175 = sphi 0, %s161
      %s181 = sphi 0, %s183
      %s184 = sphi 0, %s181
      %s185 = sphi 0, %s184
      %s201 = sphi 0, %s185
    $region4: #{base_model_forward.1} parent=1 // loop_header_branch
      %22 = sbr.rel (%p20) target = $region8
    $region5: #{base_model_forward.1} parent=1 // loop_body
      %s24 = ssub.s32 %s19, 1
      %s25 = ssub.s32 %s19, 2
      %s26 = sadd.s32 %s19, 1
      %s27 = ssub.s32 %s19, %s26
      %p28 = scmp.eq.s32.totalorder %s27, 0
      %s30 = sadd.s32 %s29, 1
      %s31 = scalar_select %p28, %s29, %s30
      %p34 = pneg %p28
      %p35 = scmp.eq.s32.totalorder %s19, 1
      %p36 = por %p34, %p35
      %p37 = scmp.ne.s32.totalorder %s29, %s32
      %p38 = scmp.eq.s32.totalorder %s19, 0
      %p39 = por %p37, %p38
      %p40 = scmp.ne.s32.totalorder %s29, %s32
      %p41 = scmp.eq.s32.totalorder %s24, 1
      %p42 = por %p40, %p41
      %p43 = scmp.ne.s32.totalorder %s32, %s33
      %p44 = scmp.eq.s32.totalorder %s24, 0
      %p45 = por %p43, %p44
      %p46 = scmp.ne.s32.totalorder %s32, %s33
      %p47 = scmp.eq.s32.totalorder %s25, 1
      %p48 = por %p46, %p47
      %p50 = scmp.ne.s32.totalorder %s33, %s49
      %p51 = scmp.eq.s32.totalorder %s25, 0
      %p52 = por %p50, %p51
      %s54 = sadd.s32 %s53, 1
      %p57 = scmp.eq.s32.totalorder %s19, 1
      %p58 = scmp.ne.s32.totalorder %s53, %s55
      %p59 = scmp.eq.s32.totalorder %s19, 0
      %p60 = por %p58, %p59
      %p61 = scmp.ne.s32.totalorder %s53, %s55
      %p62 = scmp.eq.s32.totalorder %s24, 1
      %p63 = por %p61, %p62
      %p64 = scmp.ne.s32.totalorder %s55, %s56
      %p65 = scmp.eq.s32.totalorder %s24, 0
      %p66 = por %p64, %p65
      %p67 = scmp.ne.s32.totalorder %s55, %s56
      %p68 = scmp.eq.s32.totalorder %s25, 1
      %p69 = por %p67, %p68
      %p71 = scmp.ne.s32.totalorder %s56, %s70
      %p72 = scmp.eq.s32.totalorder %s25, 0
      %p73 = por %p71, %p72
      %s75 = sadd.s32 %s74, 1
      %p78 = scmp.eq.s32.totalorder %s19, 1
      %p79 = scmp.ne.s32.totalorder %s74, %s76
      %p80 = scmp.eq.s32.totalorder %s19, 0
      %p81 = por %p79, %p80
      %p82 = scmp.ne.s32.totalorder %s74, %s76
      %p83 = scmp.eq.s32.totalorder %s24, 1
      %p84 = por %p82, %p83
      %p85 = scmp.ne.s32.totalorder %s76, %s77
      %p86 = scmp.eq.s32.totalorder %s24, 0
      %p87 = por %p85, %p86
      %p88 = scmp.ne.s32.totalorder %s76, %s77
      %p89 = scmp.eq.s32.totalorder %s25, 1
      %p90 = por %p88, %p89
      %p92 = scmp.ne.s32.totalorder %s77, %s91
      %p93 = scmp.eq.s32.totalorder %s25, 0
      %p94 = por %p92, %p93
      %s96 = sadd.s32 %s95, 1
      %p99 = scmp.eq.s32.totalorder %s19, 1
      %p100 = scmp.ne.s32.totalorder %s95, %s97
      %p101 = scmp.eq.s32.totalorder %s19, 0
      %p102 = por %p100, %p101
      %p103 = scmp.ne.s32.totalorder %s95, %s97
      %p104 = scmp.eq.s32.totalorder %s24, 1
      %p105 = por %p103, %p104
      %p106 = scmp.ne.s32.totalorder %s97, %s98
      %p107 = scmp.eq.s32.totalorder %s24, 0
      %p108 = por %p106, %p107
      %p109 = scmp.ne.s32.totalorder %s97, %s98
      %p110 = scmp.eq.s32.totalorder %s25, 1
      %p111 = por %p109, %p110
      %p113 = scmp.ne.s32.totalorder %s98, %s112
      %p114 = scmp.eq.s32.totalorder %s25, 0
      %p115 = por %p113, %p114
      %s117 = sadd.s32 %s116, 1
      %p120 = scmp.eq.s32.totalorder %s19, 1
      %p121 = scmp.ne.s32.totalorder %s116, %s118
      %p122 = scmp.eq.s32.totalorder %s19, 0
      %p123 = por %p121, %p122
      %p124 = scmp.ne.s32.totalorder %s116, %s118
      %p125 = scmp.eq.s32.totalorder %s24, 1
      %p126 = por %p124, %p125
      %p127 = scmp.ne.s32.totalorder %s118, %s119
      %p128 = scmp.eq.s32.totalorder %s24, 0
      %p129 = por %p127, %p128
      %p130 = scmp.ne.s32.totalorder %s118, %s119
      %p131 = scmp.eq.s32.totalorder %s25, 1
      %p132 = por %p130, %p131
      %p134 = scmp.ne.s32.totalorder %s119, %s133
      %p135 = scmp.eq.s32.totalorder %s25, 0
      %p136 = por %p134, %p135
      %s138 = sadd.s32 %s137, 1
      %p141 = scmp.eq.s32.totalorder %s19, 1
      %p142 = scmp.ne.s32.totalorder %s137, %s139
      %p143 = scmp.eq.s32.totalorder %s19, 0
      %p144 = por %p142, %p143
      %p145 = scmp.ne.s32.totalorder %s137, %s139
      %p146 = scmp.eq.s32.totalorder %s24, 1
      %p147 = por %p145, %p146
      %p148 = scmp.ne.s32.totalorder %s139, %s140
      %p149 = scmp.eq.s32.totalorder %s24, 0
      %p150 = por %p148, %p149
      %p151 = scmp.ne.s32.totalorder %s139, %s140
      %p152 = scmp.eq.s32.totalorder %s25, 1
      %p153 = por %p151, %p152
      %p155 = scmp.ne.s32.totalorder %s140, %s154
      %p156 = scmp.eq.s32.totalorder %s25, 0
      %p157 = por %p155, %p156
      %s159 = sadd.s32 %s158, 1
      %p162 = scmp.eq.s32.totalorder %s19, 1
      %p163 = scmp.ne.s32.totalorder %s158, %s160
      %p164 = scmp.eq.s32.totalorder %s19, 0
      %p165 = por %p163, %p164
      %p166 = scmp.ne.s32.totalorder %s158, %s160
      %p167 = scmp.eq.s32.totalorder %s24, 1
      %p168 = por %p166, %p167
      %p169 = scmp.ne.s32.totalorder %s160, %s161
      %p170 = scmp.eq.s32.totalorder %s24, 0
      %p171 = por %p169, %p170
      %p172 = scmp.ne.s32.totalorder %s160, %s161
      %p173 = scmp.eq.s32.totalorder %s25, 1
      %p174 = por %p172, %p173
      %p176 = scmp.ne.s32.totalorder %s161, %s175
      %p177 = scmp.eq.s32.totalorder %s25, 0
      %p178 = por %p176, %p177
      %s179 = ssub.s32 %s19, %s26
      %p180 = scmp.eq.s32.totalorder %s179, 0
      %s182 = sadd.s32 %s181, 1
      %s183 = scalar_select %p180, %s181, %s182
      %p186 = pneg %p180
      %p187 = scmp.eq.s32.totalorder %s19, 1
      %p188 = por %p186, %p187
      %p189 = scmp.ne.s32.totalorder %s181, %s184
      %p190 = scmp.eq.s32.totalorder %s19, 0
      %p191 = por %p189, %p190
      %p192 = scmp.ne.s32.totalorder %s181, %s184
      %p193 = scmp.eq.s32.totalorder %s24, 1
      %p194 = por %p192, %p193
      %p195 = scmp.ne.s32.totalorder %s184, %s185
      %p196 = scmp.eq.s32.totalorder %s24, 0
      %p197 = por %p195, %p196
      %p198 = scmp.ne.s32.totalorder %s184, %s185
      %p199 = scmp.eq.s32.totalorder %s25, 1
      %p200 = por %p198, %p199
      %p202 = scmp.ne.s32.totalorder %s185, %s201
      %p203 = scmp.eq.s32.totalorder %s25, 0
      %p204 = por %p202, %p203
      %p205 = scmp.le.s32.totalorder 1, %s19
      %p206 = scmp.lt.s32.totalorder %s19, 3
      %p207 = pnand %p205, %p206
      %p208 = pneg %p207
      // Predicated region
      $region9: #{base_model_forward.1} parent=5 // pred_check
        _
      $region10: #{base_model_forward.1} parent=5 // pred_check_branch
        %210 = sbr.rel (%p207) target = $region12
      $region11: #{base_model_forward.1} parent=5 // pred_region
        %s211 = ssub.s32 %s19, 1
        // Predicated region
        $region13: #{base_model_forward.1} parent=11 // pred_check
          %p212 = pneg %p66
        $region14: #{base_model_forward.1} parent=11 // pred_check_branch
          %214 = sbr.rel (%p212) target = $region16
        $region15: #{base_model_forward.1} parent=11 // pred_region
          %s216 = ssub.s32 73728, 73728
          %217 = vsyncadd [#allocation5], %s216
          %s218 = sshll.u32 [#allocation4], 4
          %s219 = int_to_ptr.vmem [resolvable:$true] %s218
          %224 = dma.hbm_to_vmem [thread:$0]  %s1, 73728, %s219, [#allocation5], 768, 768, 48
        $region16: #{base_model_forward.1} parent=11 // pred_fallthru
          _
        // Predicated region
        $region17: #{base_model_forward.1} parent=11 // pred_check
          %p225 = pneg %p87
        $region18: #{base_model_forward.1} parent=11 // pred_check_branch
          %227 = sbr.rel (%p225) target = $region20
        $region19: #{base_model_forward.1} parent=11 // pred_region
          %s229 = ssub.s32 96, 96
          %230 = vsyncadd [#allocation5], %s229
          %s232 = sshll.u32 [#allocation6], 4
          %s233 = int_to_ptr.vmem [resolvable:$true] %s232
          %235 = dma.hbm_to_vmem [thread:$0]  %s2, 96, %s233, [#allocation5]
        $region20: #{base_model_forward.1} parent=11 // pred_fallthru
          _
        // Predicated region
        $region21: #{base_model_forward.1} parent=11 // pred_check
          %p236 = pneg %p108
        $region22: #{base_model_forward.1} parent=11 // pred_check_branch
          %238 = sbr.rel (%p236) target = $region24
        $region23: #{base_model_forward.1} parent=11 // pred_region
          %s240 = ssub.s32 24576, 24576
          %241 = vsyncadd [#allocation8], %s240
          %s242 = sshll.u32 [#allocation7], 4
          %s243 = int_to_ptr.vmem [resolvable:$true] %s242
          %248 = dma.hbm_to_vmem [thread:$0]  %s3, 24576, %s243, [#allocation8], 256, 256, 16
        $region24: #{base_model_forward.1} parent=11 // pred_fallthru
          _
        // Predicated region
        $region25: #{base_model_forward.1} parent=11 // pred_check
          %p249 = pneg %p129
        $region26: #{base_model_forward.1} parent=11 // pred_check_branch
          %251 = sbr.rel (%p249) target = $region28
        $region27: #{base_model_forward.1} parent=11 // pred_region
          %s253 = ssub.s32 32, 32
          %254 = vsyncadd [#allocation8], %s253
          %s256 = sshll.u32 [#allocation9], 4
          %s257 = int_to_ptr.vmem [resolvable:$true] %s256
          %259 = dma.hbm_to_vmem [thread:$0]  %s4, 32, %s257, [#allocation8]
        $region28: #{base_model_forward.1} parent=11 // pred_fallthru
          _
        // Predicated region
        $region29: #{base_model_forward.1} parent=11 // pred_check
          %p260 = pneg %p150
        $region30: #{base_model_forward.1} parent=11 // pred_check_branch
          %262 = sbr.rel (%p260) target = $region32
        $region31: #{base_model_forward.1} parent=11 // pred_region
          %s264 = ssub.s32 8192, 8192
          %265 = vsyncadd [#allocation11], %s264
          %s266 = sshll.u32 [#allocation10], 4
          %s267 = int_to_ptr.vmem [resolvable:$true] %s266
          %272 = dma.hbm_to_vmem [thread:$0]  %s5, 8192, %s267, [#allocation11], 256, 256, 16
        $region32: #{base_model_forward.1} parent=11 // pred_fallthru
          _
        // Predicated region
        $region33: #{base_model_forward.1} parent=11 // pred_check
          %p273 = pneg %p171
        $region34: #{base_model_forward.1} parent=11 // pred_check_branch
          %275 = sbr.rel (%p273) target = $region36
        $region35: #{base_model_forward.1} parent=11 // pred_region
          %s277 = ssub.s32 32, 32
          %278 = vsyncadd [#allocation11], %s277
          %s280 = sshll.u32 [#allocation12], 4
          %s281 = int_to_ptr.vmem [resolvable:$true] %s280
          %283 = dma.hbm_to_vmem [thread:$0]  %s6, 32, %s281, [#allocation11]
        $region36: #{base_model_forward.1} parent=11 // pred_fallthru
          _
      $region12: #{base_model_forward.1} parent=5 // pred_fallthru
        _
      %p284 = scmp.lt.s32.totalorder %s19, 2
      // Predicated region
      $region37: #{base_model_forward.1} parent=5 // pred_check
        %p285 = pneg %p284
      $region38: #{base_model_forward.1} parent=5 // pred_check_branch
        %287 = sbr.rel (%p285) target = $region40
      $region39: #{base_model_forward.1} parent=5 // pred_region
        // Predicated region
        $region41: #{base_model_forward.1} parent=39 // pred_check
          %p288 = pneg %p39
        $region42: #{base_model_forward.1} parent=39 // pred_check_branch
          %290 = sbr.rel (%p288) target = $region44
        $region43: #{base_model_forward.1} parent=39 // pred_region
          %s291 = sand.u32 %s29, 1
          %s292 = scalar_lea.sflag [#allocation3], %s291
          %s293 = sand.u32 %s29, 1
          %s294 = smul.addr %s293, 768
          %s295 = scalar_lea.vmem [#allocation2], %s294
          %s296 = smul.u32 16, %s19
          %s298 = ssub.s32 12288, 12288
          %299 = vsyncadd %s292, %s298
          %s300 = smul.addr %s296, 6
          %s301 = smul.addr %s300, 128
          %s302 = scalar_lea.hbm %s0, %s301
          %s303 = sshll.u32 %s295, 4
          %s304 = int_to_ptr.vmem [resolvable:$true] %s303
          %309 = dma.hbm_to_vmem [thread:$0]  %s302, 12288, %s304, %s292, 768, 768, 48
        $region44: #{base_model_forward.1} parent=39 // pred_fallthru
          _
      $region40: #{base_model_forward.1} parent=5 // pred_fallthru
        _
      %p310 = scmp.le.s32.totalorder 1, %s19
      %p311 = scmp.lt.s32.totalorder %s19, 3
      %p312 = pnand %p310, %p311
      %p313 = pneg %p312
      // Predicated region
      $region45: #{base_model_forward.1} parent=5 // pred_check
        _
      $region46: #{base_model_forward.1} parent=5 // pred_check_branch
        %315 = sbr.rel (%p312) target = $region48
      $region47: #{base_model_forward.1} parent=5 // pred_region
        %s316 = ssub.s32 %s19, 1
        %s317 = sand.u32 %s32, 1
        %s318 = scalar_lea.sflag [#allocation3], %s317
        %s319 = sand.u32 %s32, 1
        %s320 = smul.addr %s319, 768
        %s321 = scalar_lea.vmem [#allocation2], %s320
        // Predicated region
        $region49: #{base_model_forward.1} parent=47 // pred_check
          %p322 = pneg %p45
        $region50: #{base_model_forward.1} parent=47 // pred_check_branch
          %324 = sbr.rel (%p322) target = $region52
        $region51: #{base_model_forward.1} parent=47 // pred_region
          %325 = dma.done %s318, 12288
        $region52: #{base_model_forward.1} parent=47 // pred_fallthru
          _
        // Predicated region
        $region53: #{base_model_forward.1} parent=47 // pred_check
          %p326 = pneg %p66
        $region54: #{base_model_forward.1} parent=47 // pred_check_branch
          %328 = sbr.rel (%p326) target = $region56
        $region55: #{base_model_forward.1} parent=47 // pred_region
          %329 = dma.done [#allocation5], 73728
        $region56: #{base_model_forward.1} parent=47 // pred_fallthru
          _
        // Predicated region
        $region57: #{base_model_forward.1} parent=47 // pred_check
          %p330 = pneg %p87
        $region58: #{base_model_forward.1} parent=47 // pred_check_branch
          %332 = sbr.rel (%p330) target = $region60
        $region59: #{base_model_forward.1} parent=47 // pred_region
          %333 = dma.done [#allocation5], 96
        $region60: #{base_model_forward.1} parent=47 // pred_fallthru
          _
        // Predicated region
        $region61: #{base_model_forward.1} parent=47 // pred_check
          %p334 = pneg %p108
        $region62: #{base_model_forward.1} parent=47 // pred_check_branch
          %336 = sbr.rel (%p334) target = $region64
        $region63: #{base_model_forward.1} parent=47 // pred_region
          %337 = dma.done [#allocation8], 24576
        $region64: #{base_model_forward.1} parent=47 // pred_fallthru
          _
        // Predicated region
        $region65: #{base_model_forward.1} parent=47 // pred_check
          %p338 = pneg %p129
        $region66: #{base_model_forward.1} parent=47 // pred_check_branch
          %340 = sbr.rel (%p338) target = $region68
        $region67: #{base_model_forward.1} parent=47 // pred_region
          %341 = dma.done [#allocation8], 32
        $region68: #{base_model_forward.1} parent=47 // pred_fallthru
          _
        // Predicated region
        $region69: #{base_model_forward.1} parent=47 // pred_check
          %p342 = pneg %p150
        $region70: #{base_model_forward.1} parent=47 // pred_check_branch
          %344 = sbr.rel (%p342) target = $region72
        $region71: #{base_model_forward.1} parent=47 // pred_region
          %345 = dma.done [#allocation11], 8192
        $region72: #{base_model_forward.1} parent=47 // pred_fallthru
          _
        // Predicated region
        $region73: #{base_model_forward.1} parent=47 // pred_check
          %p346 = pneg %p171
        $region74: #{base_model_forward.1} parent=47 // pred_check_branch
          %348 = sbr.rel (%p346) target = $region76
        $region75: #{base_model_forward.1} parent=47 // pred_region
          %349 = dma.done [#allocation11], 32
        $region76: #{base_model_forward.1} parent=47 // pred_fallthru
          _
        %s350 = sand.u32 %s32, 1
        %s351 = scalar_lea.sflag [#allocation3], %s350
        %s352 = sand.u32 %s32, 1
        %s353 = smul.addr %s352, 768
        %s354 = scalar_lea.vmem [#allocation2], %s353
        %p355 = pneg %p45
        %p356 = pneg %p42
        %p357 = pneg %p66
        %p358 = pneg %p63
        %p359 = pneg %p87
        %p360 = pneg %p84
        %p361 = pneg %p108
        %p362 = pneg %p105
        %p363 = pneg %p129
        %p364 = pneg %p126
        %p365 = pneg %p150
        %p366 = pneg %p147
        %p367 = pneg %p171
        %p368 = pneg %p168
        %p369 = pneg %p197
        %p370 = pneg %p194
        %s371 = smul.u32 16, %s24
        %p372 = scmp.lt.s32.totalorder %s371, 31
        %s373 = scalar_select %p372, %s371, 31
        %s374 = smul.addr %s373, 2
        %s375 = smul.addr %s374, 8
        %s376 = scalar_lea.vmem %s7, %s375
        %s377 = smul.u32 16, %s24
        %s378 = smul.u32 16, %s24
        %p379 = scmp.lt.s32.totalorder %s378, 31
        %s380 = scalar_select %p379, %s378, 31
        %s381 = smul.addr %s380, 2
        %s382 = smul.addr %s381, 8
        %s383 = scalar_lea.vmem %s7, %s382
        %s384 = smul.u32 16, %s24
        %v385 = vld [vmem:[%s321] sm:$0xff]
        %v386 = vld [vmem:[%s321 + $0x8] sm:$0xff]
        %v387 = vld [vmem:[%s321 + $0x10] sm:$0xff]
        %v388 = vld [vmem:[%s321 + $0x18] sm:$0xff]
        %v389 = vld [vmem:[%s321 + $0x20] sm:$0xff]
        %v390 = vld [vmem:[%s321 + $0x28] sm:$0xff]
        %v391 = vld [vmem:[%s321 + $0x30] sm:$0xff]
        %v392 = vld [vmem:[%s321 + $0x38] sm:$0xff]
        %v393 = vld [vmem:[%s321 + $0x40] sm:$0xff]
        %v394 = vld [vmem:[%s321 + $0x48] sm:$0xff]
        %v395 = vld [vmem:[%s321 + $0x50] sm:$0xff]
        %v396 = vld [vmem:[%s321 + $0x58] sm:$0xff]
        %v397 = vld [vmem:[%s321 + $0x60] sm:$0xff]
        %v398 = vld [vmem:[%s321 + $0x68] sm:$0xff]
        %v399 = vld [vmem:[%s321 + $0x70] sm:$0xff]
        %v400 = vld [vmem:[%s321 + $0x78] sm:$0xff]
        %v401 = vld [vmem:[%s321 + $0x80] sm:$0xff]
        %v402 = vld [vmem:[%s321 + $0x88] sm:$0xff]
        %v403 = vld [vmem:[%s321 + $0x90] sm:$0xff]
        %v404 = vld [vmem:[%s321 + $0x98] sm:$0xff]
        %v405 = vld [vmem:[%s321 + $0xa0] sm:$0xff]
        %v406 = vld [vmem:[%s321 + $0xa8] sm:$0xff]
        %v407 = vld [vmem:[%s321 + $0xb0] sm:$0xff]
        %v408 = vld [vmem:[%s321 + $0xb8] sm:$0xff]
        %v409 = vld [vmem:[%s321 + $0xc0] sm:$0xff]
        %v410 = vld [vmem:[%s321 + $0xc8] sm:$0xff]
        %v411 = vld [vmem:[%s321 + $0xd0] sm:$0xff]
        %v412 = vld [vmem:[%s321 + $0xd8] sm:$0xff]
        %v413 = vld [vmem:[%s321 + $0xe0] sm:$0xff]
        %v414 = vld [vmem:[%s321 + $0xe8] sm:$0xff]
        %v415 = vld [vmem:[%s321 + $0xf0] sm:$0xff]
        %v416 = vld [vmem:[%s321 + $0xf8] sm:$0xff]
        %v417 = vld [vmem:[%s321 + $0x100] sm:$0xff]
        %v418 = vld [vmem:[%s321 + $0x108] sm:$0xff]
        %v419 = vld [vmem:[%s321 + $0x110] sm:$0xff]
        %v420 = vld [vmem:[%s321 + $0x118] sm:$0xff]
        %v421 = vld [vmem:[%s321 + $0x120] sm:$0xff]
        %v422 = vld [vmem:[%s321 + $0x128] sm:$0xff]
        %v423 = vld [vmem:[%s321 + $0x130] sm:$0xff]
        %v424 = vld [vmem:[%s321 + $0x138] sm:$0xff]
        %v425 = vld [vmem:[%s321 + $0x140] sm:$0xff]
        %v426 = vld [vmem:[%s321 + $0x148] sm:$0xff]
        %v427 = vld [vmem:[%s321 + $0x150] sm:$0xff]
        %v428 = vld [vmem:[%s321 + $0x158] sm:$0xff]
        %v429 = vld [vmem:[%s321 + $0x160] sm:$0xff]
        %v430 = vld [vmem:[%s321 + $0x168] sm:$0xff]
        %v431 = vld [vmem:[%s321 + $0x170] sm:$0xff]
        %v432 = vld [vmem:[%s321 + $0x178] sm:$0xff]
        %v433 = vld [vmem:[%s321 + $0x180] sm:$0xff]
        %v434 = vld [vmem:[%s321 + $0x188] sm:$0xff]
        %v435 = vld [vmem:[%s321 + $0x190] sm:$0xff]
        %v436 = vld [vmem:[%s321 + $0x198] sm:$0xff]
        %v437 = vld [vmem:[%s321 + $0x1a0] sm:$0xff]
        %v438 = vld [vmem:[%s321 + $0x1a8] sm:$0xff]
        %v439 = vld [vmem:[%s321 + $0x1b0] sm:$0xff]
        %v440 = vld [vmem:[%s321 + $0x1b8] sm:$0xff]
        %v441 = vld [vmem:[%s321 + $0x1c0] sm:$0xff]
        %v442 = vld [vmem:[%s321 + $0x1c8] sm:$0xff]
        %v443 = vld [vmem:[%s321 + $0x1d0] sm:$0xff]
        %v444 = vld [vmem:[%s321 + $0x1d8] sm:$0xff]
        %v445 = vld [vmem:[%s321 + $0x1e0] sm:$0xff]
        %v446 = vld [vmem:[%s321 + $0x1e8] sm:$0xff]
        %v447 = vld [vmem:[%s321 + $0x1f0] sm:$0xff]
        %v448 = vld [vmem:[%s321 + $0x1f8] sm:$0xff]
        %v449 = vld [vmem:[%s321 + $0x200] sm:$0xff]
        %v450 = vld [vmem:[%s321 + $0x208] sm:$0xff]
        %v451 = vld [vmem:[%s321 + $0x210] sm:$0xff]
        %v452 = vld [vmem:[%s321 + $0x218] sm:$0xff]
        %v453 = vld [vmem:[%s321 + $0x220] sm:$0xff]
        %v454 = vld [vmem:[%s321 + $0x228] sm:$0xff]
        %v455 = vld [vmem:[%s321 + $0x230] sm:$0xff]
        %v456 = vld [vmem:[%s321 + $0x238] sm:$0xff]
        %v457 = vld [vmem:[%s321 + $0x240] sm:$0xff]
        %v458 = vld [vmem:[%s321 + $0x248] sm:$0xff]
        %v459 = vld [vmem:[%s321 + $0x250] sm:$0xff]
        %v460 = vld [vmem:[%s321 + $0x258] sm:$0xff]
        %v461 = vld [vmem:[%s321 + $0x260] sm:$0xff]
        %v462 = vld [vmem:[%s321 + $0x268] sm:$0xff]
        %v463 = vld [vmem:[%s321 + $0x270] sm:$0xff]
        %v464 = vld [vmem:[%s321 + $0x278] sm:$0xff]
        %v465 = vld [vmem:[%s321 + $0x280] sm:$0xff]
        %v466 = vld [vmem:[%s321 + $0x288] sm:$0xff]
        %v467 = vld [vmem:[%s321 + $0x290] sm:$0xff]
        %v468 = vld [vmem:[%s321 + $0x298] sm:$0xff]
        %v469 = vld [vmem:[%s321 + $0x2a0] sm:$0xff]
        %v470 = vld [vmem:[%s321 + $0x2a8] sm:$0xff]
        %v471 = vld [vmem:[%s321 + $0x2b0] sm:$0xff]
        %v472 = vld [vmem:[%s321 + $0x2b8] sm:$0xff]
        %v473 = vld [vmem:[%s321 + $0x2c0] sm:$0xff]
        %v474 = vld [vmem:[%s321 + $0x2c8] sm:$0xff]
        %v475 = vld [vmem:[%s321 + $0x2d0] sm:$0xff]
        %v476 = vld [vmem:[%s321 + $0x2d8] sm:$0xff]
        %v477 = vld [vmem:[%s321 + $0x2e0] sm:$0xff]
        %v478 = vld [vmem:[%s321 + $0x2e8] sm:$0xff]
        %v479 = vld [vmem:[%s321 + $0x2f0] sm:$0xff]
        %v480 = vld [vmem:[%s321 + $0x2f8] sm:$0xff]
        %v481 = vld [vmem:[#allocation4] sm:$0xff]
        %v482 = vld [vmem:[#allocation4 + $0x8] sm:$0xff]
        %v483 = vld [vmem:[#allocation4 + $0x10] sm:$0xff]
        %v484 = vld [vmem:[#allocation4 + $0x18] sm:$0xff]
        %v485 = vld [vmem:[#allocation4 + $0x20] sm:$0xff]
        %v486 = vld [vmem:[#allocation4 + $0x28] sm:$0xff]
        %v487 = vld [vmem:[#allocation4 + $0x30] sm:$0xff]
        %v488 = vld [vmem:[#allocation4 + $0x38] sm:$0xff]
        %v489 = vld [vmem:[#allocation4 + $0x40] sm:$0xff]
        %v490 = vld [vmem:[#allocation4 + $0x48] sm:$0xff]
        %v491 = vld [vmem:[#allocation4 + $0x50] sm:$0xff]
        %v492 = vld [vmem:[#allocation4 + $0x58] sm:$0xff]
        %v493 = vld [vmem:[#allocation4 + $0x60] sm:$0xff]
        %v494 = vld [vmem:[#allocation4 + $0x68] sm:$0xff]
        %v495 = vld [vmem:[#allocation4 + $0x70] sm:$0xff]
        %v496 = vld [vmem:[#allocation4 + $0x78] sm:$0xff]
        %v497 = vld [vmem:[#allocation4 + $0x80] sm:$0xff]
        %v498 = vld [vmem:[#allocation4 + $0x88] sm:$0xff]
        %v499 = vld [vmem:[#allocation4 + $0x90] sm:$0xff]
        %v500 = vld [vmem:[#allocation4 + $0x98] sm:$0xff]
        %v501 = vld [vmem:[#allocation4 + $0xa0] sm:$0xff]
        %v502 = vld [vmem:[#allocation4 + $0xa8] sm:$0xff]
        %v503 = vld [vmem:[#allocation4 + $0xb0] sm:$0xff]
        %v504 = vld [vmem:[#allocation4 + $0xb8] sm:$0xff]
        %v505 = vld [vmem:[#allocation4 + $0xc0] sm:$0xff]
        %v506 = vld [vmem:[#allocation4 + $0xc8] sm:$0xff]
        %v507 = vld [vmem:[#allocation4 + $0xd0] sm:$0xff]
        %v508 = vld [vmem:[#allocation4 + $0xd8] sm:$0xff]
        %v509 = vld [vmem:[#allocation4 + $0xe0] sm:$0xff]
        %v510 = vld [vmem:[#allocation4 + $0xe8] sm:$0xff]
        %v511 = vld [vmem:[#allocation4 + $0xf0] sm:$0xff]
        %v512 = vld [vmem:[#allocation4 + $0xf8] sm:$0xff]
        %v513 = vld [vmem:[#allocation4 + $0x100] sm:$0xff]
        %v514 = vld [vmem:[#allocation4 + $0x108] sm:$0xff]
        %v515 = vld [vmem:[#allocation4 + $0x110] sm:$0xff]
        %v516 = vld [vmem:[#allocation4 + $0x118] sm:$0xff]
        %v517 = vld [vmem:[#allocation4 + $0x120] sm:$0xff]
        %v518 = vld [vmem:[#allocation4 + $0x128] sm:$0xff]
        %v519 = vld [vmem:[#allocation4 + $0x130] sm:$0xff]
        %v520 = vld [vmem:[#allocation4 + $0x138] sm:$0xff]
        %v521 = vld [vmem:[#allocation4 + $0x140] sm:$0xff]
        %v522 = vld [vmem:[#allocation4 + $0x148] sm:$0xff]
        %v523 = vld [vmem:[#allocation4 + $0x150] sm:$0xff]
        %v524 = vld [vmem:[#allocation4 + $0x158] sm:$0xff]
        %v525 = vld [vmem:[#allocation4 + $0x160] sm:$0xff]
        %v526 = vld [vmem:[#allocation4 + $0x168] sm:$0xff]
        %v527 = vld [vmem:[#allocation4 + $0x170] sm:$0xff]
        %v528 = vld [vmem:[#allocation4 + $0x178] sm:$0xff]
        %v529 = vld [vmem:[#allocation4 + $0x180] sm:$0xff]
        %v530 = vld [vmem:[#allocation4 + $0x188] sm:$0xff]
        %v531 = vld [vmem:[#allocation4 + $0x190] sm:$0xff]
        %v532 = vld [vmem:[#allocation4 + $0x198] sm:$0xff]
        %v533 = vld [vmem:[#allocation4 + $0x1a0] sm:$0xff]
        %v534 = vld [vmem:[#allocation4 + $0x1a8] sm:$0xff]
        %v535 = vld [vmem:[#allocation4 + $0x1b0] sm:$0xff]
        %v536 = vld [vmem:[#allocation4 + $0x1b8] sm:$0xff]
        %v537 = vld [vmem:[#allocation4 + $0x1c0] sm:$0xff]
        %v538 = vld [vmem:[#allocation4 + $0x1c8] sm:$0xff]
        %v539 = vld [vmem:[#allocation4 + $0x1d0] sm:$0xff]
        %v540 = vld [vmem:[#allocation4 + $0x1d8] sm:$0xff]
        %v541 = vld [vmem:[#allocation4 + $0x1e0] sm:$0xff]
        %v542 = vld [vmem:[#allocation4 + $0x1e8] sm:$0xff]
        %v543 = vld [vmem:[#allocation4 + $0x1f0] sm:$0xff]
        %v544 = vld [vmem:[#allocation4 + $0x1f8] sm:$0xff]
        %v545 = vld [vmem:[#allocation4 + $0x200] sm:$0xff]
        %v546 = vld [vmem:[#allocation4 + $0x208] sm:$0xff]
        %v547 = vld [vmem:[#allocation4 + $0x210] sm:$0xff]
        %v548 = vld [vmem:[#allocation4 + $0x218] sm:$0xff]
        %v549 = vld [vmem:[#allocation4 + $0x220] sm:$0xff]
        %v550 = vld [vmem:[#allocation4 + $0x228] sm:$0xff]
        %v551 = vld [vmem:[#allocation4 + $0x230] sm:$0xff]
        %v552 = vld [vmem:[#allocation4 + $0x238] sm:$0xff]
        %v553 = vld [vmem:[#allocation4 + $0x240] sm:$0xff]
        %v554 = vld [vmem:[#allocation4 + $0x248] sm:$0xff]
        %v555 = vld [vmem:[#allocation4 + $0x250] sm:$0xff]
        %v556 = vld [vmem:[#allocation4 + $0x258] sm:$0xff]
        %v557 = vld [vmem:[#allocation4 + $0x260] sm:$0xff]
        %v558 = vld [vmem:[#allocation4 + $0x268] sm:$0xff]
        %v559 = vld [vmem:[#allocation4 + $0x270] sm:$0xff]
        %v560 = vld [vmem:[#allocation4 + $0x278] sm:$0xff]
        %v561 = vld [vmem:[#allocation4 + $0x280] sm:$0xff]
        %v562 = vld [vmem:[#allocation4 + $0x288] sm:$0xff]
        %v563 = vld [vmem:[#allocation4 + $0x290] sm:$0xff]
        %v564 = vld [vmem:[#allocation4 + $0x298] sm:$0xff]
        %v565 = vld [vmem:[#allocation4 + $0x2a0] sm:$0xff]
        %v566 = vld [vmem:[#allocation4 + $0x2a8] sm:$0xff]
        %v567 = vld [vmem:[#allocation4 + $0x2b0] sm:$0xff]
        %v568 = vld [vmem:[#allocation4 + $0x2b8] sm:$0xff]
        %v569 = vld [vmem:[#allocation4 + $0x2c0] sm:$0xff]
        %v570 = vld [vmem:[#allocation4 + $0x2c8] sm:$0xff]
        %v571 = vld [vmem:[#allocation4 + $0x2d0] sm:$0xff]
        %v572 = vld [vmem:[#allocation4 + $0x2d8] sm:$0xff]
        %v573 = vld [vmem:[#allocation4 + $0x2e0] sm:$0xff]
        %v574 = vld [vmem:[#allocation4 + $0x2e8] sm:$0xff]
        %v575 = vld [vmem:[#allocation4 + $0x2f0] sm:$0xff]
        %v576 = vld [vmem:[#allocation4 + $0x2f8] sm:$0xff]
        %v577 = vld [vmem:[#allocation4 + $0x300] sm:$0xff]
        %v578 = vld [vmem:[#allocation4 + $0x308] sm:$0xff]
        %v579 = vld [vmem:[#allocation4 + $0x310] sm:$0xff]
        %v580 = vld [vmem:[#allocation4 + $0x318] sm:$0xff]
        %v581 = vld [vmem:[#allocation4 + $0x320] sm:$0xff]
        %v582 = vld [vmem:[#allocation4 + $0x328] sm:$0xff]
        %v583 = vld [vmem:[#allocation4 + $0x330] sm:$0xff]
        %v584 = vld [vmem:[#allocation4 + $0x338] sm:$0xff]
        %v585 = vld [vmem:[#allocation4 + $0x340] sm:$0xff]
        %v586 = vld [vmem:[#allocation4 + $0x348] sm:$0xff]
        %v587 = vld [vmem:[#allocation4 + $0x350] sm:$0xff]
        %v588 = vld [vmem:[#allocation4 + $0x358] sm:$0xff]
        %v589 = vld [vmem:[#allocation4 + $0x360] sm:$0xff]
        %v590 = vld [vmem:[#allocation4 + $0x368] sm:$0xff]
        %v591 = vld [vmem:[#allocation4 + $0x370] sm:$0xff]
        %v592 = vld [vmem:[#allocation4 + $0x378] sm:$0xff]
        %v593 = vld [vmem:[#allocation4 + $0x380] sm:$0xff]
        %v594 = vld [vmem:[#allocation4 + $0x388] sm:$0xff]
        %v595 = vld [vmem:[#allocation4 + $0x390] sm:$0xff]
        %v596 = vld [vmem:[#allocation4 + $0x398] sm:$0xff]
        %v597 = vld [vmem:[#allocation4 + $0x3a0] sm:$0xff]
        %v598 = vld [vmem:[#allocation4 + $0x3a8] sm:$0xff]
        %v599 = vld [vmem:[#allocation4 + $0x3b0] sm:$0xff]
        %v600 = vld [vmem:[#allocation4 + $0x3b8] sm:$0xff]
        %v601 = vld [vmem:[#allocation4 + $0x3c0] sm:$0xff]
        %v602 = vld [vmem:[#allocation4 + $0x3c8] sm:$0xff]
        %v603 = vld [vmem:[#allocation4 + $0x3d0] sm:$0xff]
        %v604 = vld [vmem:[#allocation4 + $0x3d8] sm:$0xff]
        %v605 = vld [vmem:[#allocation4 + $0x3e0] sm:$0xff]
        %v606 = vld [vmem:[#allocation4 + $0x3e8] sm:$0xff]
        %v607 = vld [vmem:[#allocation4 + $0x3f0] sm:$0xff]
        %v608 = vld [vmem:[#allocation4 + $0x3f8] sm:$0xff]
        %v609 = vld [vmem:[#allocation4 + $0x400] sm:$0xff]
        %v610 = vld [vmem:[#allocation4 + $0x408] sm:$0xff]
        %v611 = vld [vmem:[#allocation4 + $0x410] sm:$0xff]
        %v612 = vld [vmem:[#allocation4 + $0x418] sm:$0xff]
        %v613 = vld [vmem:[#allocation4 + $0x420] sm:$0xff]
        %v614 = vld [vmem:[#allocation4 + $0x428] sm:$0xff]
        %v615 = vld [vmem:[#allocation4 + $0x430] sm:$0xff]
        %v616 = vld [vmem:[#allocation4 + $0x438] sm:$0xff]
        %v617 = vld [vmem:[#allocation4 + $0x440] sm:$0xff]
        %v618 = vld [vmem:[#allocation4 + $0x448] sm:$0xff]
        %v619 = vld [vmem:[#allocation4 + $0x450] sm:$0xff]
        %v620 = vld [vmem:[#allocation4 + $0x458] sm:$0xff]
        %v621 = vld [vmem:[#allocation4 + $0x460] sm:$0xff]
        %v622 = vld [vmem:[#allocation4 + $0x468] sm:$0xff]
        %v623 = vld [vmem:[#allocation4 + $0x470] sm:$0xff]
        %v624 = vld [vmem:[#allocation4 + $0x478] sm:$0xff]
        %v625 = vld [vmem:[#allocation4 + $0x480] sm:$0xff]
        %v626 = vld [vmem:[#allocation4 + $0x488] sm:$0xff]
        %v627 = vld [vmem:[#allocation4 + $0x490] sm:$0xff]
        %v628 = vld [vmem:[#allocation4 + $0x498] sm:$0xff]
        %v629 = vld [vmem:[#allocation4 + $0x4a0] sm:$0xff]
        %v630 = vld [vmem:[#allocation4 + $0x4a8] sm:$0xff]
        %v631 = vld [vmem:[#allocation4 + $0x4b0] sm:$0xff]
        %v632 = vld [vmem:[#allocation4 + $0x4b8] sm:$0xff]
        %v633 = vld [vmem:[#allocation4 + $0x4c0] sm:$0xff]
        %v634 = vld [vmem:[#allocation4 + $0x4c8] sm:$0xff]
        %v635 = vld [vmem:[#allocation4 + $0x4d0] sm:$0xff]
        %v636 = vld [vmem:[#allocation4 + $0x4d8] sm:$0xff]
        %v637 = vld [vmem:[#allocation4 + $0x4e0] sm:$0xff]
        %v638 = vld [vmem:[#allocation4 + $0x4e8] sm:$0xff]
        %v639 = vld [vmem:[#allocation4 + $0x4f0] sm:$0xff]
        %v640 = vld [vmem:[#allocation4 + $0x4f8] sm:$0xff]
        %v641 = vld [vmem:[#allocation4 + $0x500] sm:$0xff]
        %v642 = vld [vmem:[#allocation4 + $0x508] sm:$0xff]
        %v643 = vld [vmem:[#allocation4 + $0x510] sm:$0xff]
        %v644 = vld [vmem:[#allocation4 + $0x518] sm:$0xff]
        %v645 = vld [vmem:[#allocation4 + $0x520] sm:$0xff]
        %v646 = vld [vmem:[#allocation4 + $0x528] sm:$0xff]
        %v647 = vld [vmem:[#allocation4 + $0x530] sm:$0xff]
        %v648 = vld [vmem:[#allocation4 + $0x538] sm:$0xff]
        %v649 = vld [vmem:[#allocation4 + $0x540] sm:$0xff]
        %v650 = vld [vmem:[#allocation4 + $0x548] sm:$0xff]
        %v651 = vld [vmem:[#allocation4 + $0x550] sm:$0xff]
        %v652 = vld [vmem:[#allocation4 + $0x558] sm:$0xff]
        %v653 = vld [vmem:[#allocation4 + $0x560] sm:$0xff]
        %v654 = vld [vmem:[#allocation4 + $0x568] sm:$0xff]
        %v655 = vld [vmem:[#allocation4 + $0x570] sm:$0xff]
        %v656 = vld [vmem:[#allocation4 + $0x578] sm:$0xff]
        %v657 = vld [vmem:[#allocation4 + $0x580] sm:$0xff]
        %v658 = vld [vmem:[#allocation4 + $0x588] sm:$0xff]
        %v659 = vld [vmem:[#allocation4 + $0x590] sm:$0xff]
        %v660 = vld [vmem:[#allocation4 + $0x598] sm:$0xff]
        %v661 = vld [vmem:[#allocation4 + $0x5a0] sm:$0xff]
        %v662 = vld [vmem:[#allocation4 + $0x5a8] sm:$0xff]
        %v663 = vld [vmem:[#allocation4 + $0x5b0] sm:$0xff]
        %v664 = vld [vmem:[#allocation4 + $0x5b8] sm:$0xff]
        %v665 = vld [vmem:[#allocation4 + $0x5c0] sm:$0xff]
        %v666 = vld [vmem:[#allocation4 + $0x5c8] sm:$0xff]
        %v667 = vld [vmem:[#allocation4 + $0x5d0] sm:$0xff]
        %v668 = vld [vmem:[#allocation4 + $0x5d8] sm:$0xff]
        %v669 = vld [vmem:[#allocation4 + $0x5e0] sm:$0xff]
        %v670 = vld [vmem:[#allocation4 + $0x5e8] sm:$0xff]
        %v671 = vld [vmem:[#allocation4 + $0x5f0] sm:$0xff]
        %v672 = vld [vmem:[#allocation4 + $0x5f8] sm:$0xff]
        %v673 = vld [vmem:[#allocation4 + $0x600] sm:$0xff]
        %v674 = vld [vmem:[#allocation4 + $0x608] sm:$0xff]
        %v675 = vld [vmem:[#allocation4 + $0x610] sm:$0xff]
        %v676 = vld [vmem:[#allocation4 + $0x618] sm:$0xff]
        %v677 = vld [vmem:[#allocation4 + $0x620] sm:$0xff]
        %v678 = vld [vmem:[#allocation4 + $0x628] sm:$0xff]
        %v679 = vld [vmem:[#allocation4 + $0x630] sm:$0xff]
        %v680 = vld [vmem:[#allocation4 + $0x638] sm:$0xff]
        %v681 = vld [vmem:[#allocation4 + $0x640] sm:$0xff]
        %v682 = vld [vmem:[#allocation4 + $0x648] sm:$0xff]
        %v683 = vld [vmem:[#allocation4 + $0x650] sm:$0xff]
        %v684 = vld [vmem:[#allocation4 + $0x658] sm:$0xff]
        %v685 = vld [vmem:[#allocation4 + $0x660] sm:$0xff]
        %v686 = vld [vmem:[#allocation4 + $0x668] sm:$0xff]
        %v687 = vld [vmem:[#allocation4 + $0x670] sm:$0xff]
        %v688 = vld [vmem:[#allocation4 + $0x678] sm:$0xff]
        %v689 = vld [vmem:[#allocation4 + $0x680] sm:$0xff]
        %v690 = vld [vmem:[#allocation4 + $0x688] sm:$0xff]
        %v691 = vld [vmem:[#allocation4 + $0x690] sm:$0xff]
        %v692 = vld [vmem:[#allocation4 + $0x698] sm:$0xff]
        %v693 = vld [vmem:[#allocation4 + $0x6a0] sm:$0xff]
        %v694 = vld [vmem:[#allocation4 + $0x6a8] sm:$0xff]
        %v695 = vld [vmem:[#allocation4 + $0x6b0] sm:$0xff]
        %v696 = vld [vmem:[#allocation4 + $0x6b8] sm:$0xff]
        %v697 = vld [vmem:[#allocation4 + $0x6c0] sm:$0xff]
        %v698 = vld [vmem:[#allocation4 + $0x6c8] sm:$0xff]
        %v699 = vld [vmem:[#allocation4 + $0x6d0] sm:$0xff]
        %v700 = vld [vmem:[#allocation4 + $0x6d8] sm:$0xff]
        %v701 = vld [vmem:[#allocation4 + $0x6e0] sm:$0xff]
        %v702 = vld [vmem:[#allocation4 + $0x6e8] sm:$0xff]
        %v703 = vld [vmem:[#allocation4 + $0x6f0] sm:$0xff]
        %v704 = vld [vmem:[#allocation4 + $0x6f8] sm:$0xff]
        %v705 = vld [vmem:[#allocation4 + $0x700] sm:$0xff]
        %v706 = vld [vmem:[#allocation4 + $0x708] sm:$0xff]
        %v707 = vld [vmem:[#allocation4 + $0x710] sm:$0xff]
        %v708 = vld [vmem:[#allocation4 + $0x718] sm:$0xff]
        %v709 = vld [vmem:[#allocation4 + $0x720] sm:$0xff]
        %v710 = vld [vmem:[#allocation4 + $0x728] sm:$0xff]
        %v711 = vld [vmem:[#allocation4 + $0x730] sm:$0xff]
        %v712 = vld [vmem:[#allocation4 + $0x738] sm:$0xff]
        %v713 = vld [vmem:[#allocation4 + $0x740] sm:$0xff]
        %v714 = vld [vmem:[#allocation4 + $0x748] sm:$0xff]
        %v715 = vld [vmem:[#allocation4 + $0x750] sm:$0xff]
        %v716 = vld [vmem:[#allocation4 + $0x758] sm:$0xff]
        %v717 = vld [vmem:[#allocation4 + $0x760] sm:$0xff]
        %v718 = vld [vmem:[#allocation4 + $0x768] sm:$0xff]
        %v719 = vld [vmem:[#allocation4 + $0x770] sm:$0xff]
        %v720 = vld [vmem:[#allocation4 + $0x778] sm:$0xff]
        %v721 = vld [vmem:[#allocation4 + $0x780] sm:$0xff]
        %v722 = vld [vmem:[#allocation4 + $0x788] sm:$0xff]
        %v723 = vld [vmem:[#allocation4 + $0x790] sm:$0xff]
        %v724 = vld [vmem:[#allocation4 + $0x798] sm:$0xff]
        %v725 = vld [vmem:[#allocation4 + $0x7a0] sm:$0xff]
        %v726 = vld [vmem:[#allocation4 + $0x7a8] sm:$0xff]
        %v727 = vld [vmem:[#allocation4 + $0x7b0] sm:$0xff]
        %v728 = vld [vmem:[#allocation4 + $0x7b8] sm:$0xff]
        %v729 = vld [vmem:[#allocation4 + $0x7c0] sm:$0xff]
        %v730 = vld [vmem:[#allocation4 + $0x7c8] sm:$0xff]
        %v731 = vld [vmem:[#allocation4 + $0x7d0] sm:$0xff]
        %v732 = vld [vmem:[#allocation4 + $0x7d8] sm:$0xff]
        %v733 = vld [vmem:[#allocation4 + $0x7e0] sm:$0xff]
        %v734 = vld [vmem:[#allocation4 + $0x7e8] sm:$0xff]
        %v735 = vld [vmem:[#allocation4 + $0x7f0] sm:$0xff]
        %v736 = vld [vmem:[#allocation4 + $0x7f8] sm:$0xff]
        %v737 = vld [vmem:[#allocation4 + $0x800] sm:$0xff]
        %v738 = vld [vmem:[#allocation4 + $0x808] sm:$0xff]
        %v739 = vld [vmem:[#allocation4 + $0x810] sm:$0xff]
        %v740 = vld [vmem:[#allocation4 + $0x818] sm:$0xff]
        %v741 = vld [vmem:[#allocation4 + $0x820] sm:$0xff]
        %v742 = vld [vmem:[#allocation4 + $0x828] sm:$0xff]
        %v743 = vld [vmem:[#allocation4 + $0x830] sm:$0xff]
        %v744 = vld [vmem:[#allocation4 + $0x838] sm:$0xff]
        %v745 = vld [vmem:[#allocation4 + $0x840] sm:$0xff]
        %v746 = vld [vmem:[#allocation4 + $0x848] sm:$0xff]
        %v747 = vld [vmem:[#allocation4 + $0x850] sm:$0xff]
        %v748 = vld [vmem:[#allocation4 + $0x858] sm:$0xff]
        %v749 = vld [vmem:[#allocation4 + $0x860] sm:$0xff]
        %v750 = vld [vmem:[#allocation4 + $0x868] sm:$0xff]
        %v751 = vld [vmem:[#allocation4 + $0x870] sm:$0xff]
        %v752 = vld [vmem:[#allocation4 + $0x878] sm:$0xff]
        %v753 = vld [vmem:[#allocation4 + $0x880] sm:$0xff]
        %v754 = vld [vmem:[#allocation4 + $0x888] sm:$0xff]
        %v755 = vld [vmem:[#allocation4 + $0x890] sm:$0xff]
        %v756 = vld [vmem:[#allocation4 + $0x898] sm:$0xff]
        %v757 = vld [vmem:[#allocation4 + $0x8a0] sm:$0xff]
        %v758 = vld [vmem:[#allocation4 + $0x8a8] sm:$0xff]
        %v759 = vld [vmem:[#allocation4 + $0x8b0] sm:$0xff]
        %v760 = vld [vmem:[#allocation4 + $0x8b8] sm:$0xff]
        %v761 = vld [vmem:[#allocation4 + $0x8c0] sm:$0xff]
        %v762 = vld [vmem:[#allocation4 + $0x8c8] sm:$0xff]
        %v763 = vld [vmem:[#allocation4 + $0x8d0] sm:$0xff]
        %v764 = vld [vmem:[#allocation4 + $0x8d8] sm:$0xff]
        %v765 = vld [vmem:[#allocation4 + $0x8e0] sm:$0xff]
        %v766 = vld [vmem:[#allocation4 + $0x8e8] sm:$0xff]
        %v767 = vld [vmem:[#allocation4 + $0x8f0] sm:$0xff]
        %v768 = vld [vmem:[#allocation4 + $0x8f8] sm:$0xff]
        %v769 = vld [vmem:[#allocation4 + $0x900] sm:$0xff]
        %v770 = vld [vmem:[#allocation4 + $0x908] sm:$0xff]
        %v771 = vld [vmem:[#allocation4 + $0x910] sm:$0xff]
        %v772 = vld [vmem:[#allocation4 + $0x918] sm:$0xff]
        %v773 = vld [vmem:[#allocation4 + $0x920] sm:$0xff]
        %v774 = vld [vmem:[#allocation4 + $0x928] sm:$0xff]
        %v775 = vld [vmem:[#allocation4 + $0x930] sm:$0xff]
        %v776 = vld [vmem:[#allocation4 + $0x938] sm:$0xff]
        %v777 = vld [vmem:[#allocation4 + $0x940] sm:$0xff]
        %v778 = vld [vmem:[#allocation4 + $0x948] sm:$0xff]
        %v779 = vld [vmem:[#allocation4 + $0x950] sm:$0xff]
        %v780 = vld [vmem:[#allocation4 + $0x958] sm:$0xff]
        %v781 = vld [vmem:[#allocation4 + $0x960] sm:$0xff]
        %v782 = vld [vmem:[#allocation4 + $0x968] sm:$0xff]
        %v783 = vld [vmem:[#allocation4 + $0x970] sm:$0xff]
        %v784 = vld [vmem:[#allocation4 + $0x978] sm:$0xff]
        %v785 = vld [vmem:[#allocation4 + $0x980] sm:$0xff]
        %v786 = vld [vmem:[#allocation4 + $0x988] sm:$0xff]
        %v787 = vld [vmem:[#allocation4 + $0x990] sm:$0xff]
        %v788 = vld [vmem:[#allocation4 + $0x998] sm:$0xff]
        %v789 = vld [vmem:[#allocation4 + $0x9a0] sm:$0xff]
        %v790 = vld [vmem:[#allocation4 + $0x9a8] sm:$0xff]
        %v791 = vld [vmem:[#allocation4 + $0x9b0] sm:$0xff]
        %v792 = vld [vmem:[#allocation4 + $0x9b8] sm:$0xff]
        %v793 = vld [vmem:[#allocation4 + $0x9c0] sm:$0xff]
        %v794 = vld [vmem:[#allocation4 + $0x9c8] sm:$0xff]
        %v795 = vld [vmem:[#allocation4 + $0x9d0] sm:$0xff]
        %v796 = vld [vmem:[#allocation4 + $0x9d8] sm:$0xff]
        %v797 = vld [vmem:[#allocation4 + $0x9e0] sm:$0xff]
        %v798 = vld [vmem:[#allocation4 + $0x9e8] sm:$0xff]
        %v799 = vld [vmem:[#allocation4 + $0x9f0] sm:$0xff]
        %v800 = vld [vmem:[#allocation4 + $0x9f8] sm:$0xff]
        %v801 = vld [vmem:[#allocation4 + $0xa00] sm:$0xff]
        %v802 = vld [vmem:[#allocation4 + $0xa08] sm:$0xff]
        %v803 = vld [vmem:[#allocation4 + $0xa10] sm:$0xff]
        %v804 = vld [vmem:[#allocation4 + $0xa18] sm:$0xff]
        %v805 = vld [vmem:[#allocation4 + $0xa20] sm:$0xff]
        %v806 = vld [vmem:[#allocation4 + $0xa28] sm:$0xff]
        %v807 = vld [vmem:[#allocation4 + $0xa30] sm:$0xff]
        %v808 = vld [vmem:[#allocation4 + $0xa38] sm:$0xff]
        %v809 = vld [vmem:[#allocation4 + $0xa40] sm:$0xff]
        %v810 = vld [vmem:[#allocation4 + $0xa48] sm:$0xff]
        %v811 = vld [vmem:[#allocation4 + $0xa50] sm:$0xff]
        %v812 = vld [vmem:[#allocation4 + $0xa58] sm:$0xff]
        %v813 = vld [vmem:[#allocation4 + $0xa60] sm:$0xff]
        %v814 = vld [vmem:[#allocation4 + $0xa68] sm:$0xff]
        %v815 = vld [vmem:[#allocation4 + $0xa70] sm:$0xff]
        %v816 = vld [vmem:[#allocation4 + $0xa78] sm:$0xff]
        %v817 = vld [vmem:[#allocation4 + $0xa80] sm:$0xff]
        %v818 = vld [vmem:[#allocation4 + $0xa88] sm:$0xff]
        %v819 = vld [vmem:[#allocation4 + $0xa90] sm:$0xff]
        %v820 = vld [vmem:[#allocation4 + $0xa98] sm:$0xff]
        %v821 = vld [vmem:[#allocation4 + $0xaa0] sm:$0xff]
        %v822 = vld [vmem:[#allocation4 + $0xaa8] sm:$0xff]
        %v823 = vld [vmem:[#allocation4 + $0xab0] sm:$0xff]
        %v824 = vld [vmem:[#allocation4 + $0xab8] sm:$0xff]
        %v825 = vld [vmem:[#allocation4 + $0xac0] sm:$0xff]
        %v826 = vld [vmem:[#allocation4 + $0xac8] sm:$0xff]
        %v827 = vld [vmem:[#allocation4 + $0xad0] sm:$0xff]
        %v828 = vld [vmem:[#allocation4 + $0xad8] sm:$0xff]
        %v829 = vld [vmem:[#allocation4 + $0xae0] sm:$0xff]
        %v830 = vld [vmem:[#allocation4 + $0xae8] sm:$0xff]
        %v831 = vld [vmem:[#allocation4 + $0xaf0] sm:$0xff]
        %v832 = vld [vmem:[#allocation4 + $0xaf8] sm:$0xff]
        %v833 = vld [vmem:[#allocation4 + $0xb00] sm:$0xff]
        %v834 = vld [vmem:[#allocation4 + $0xb08] sm:$0xff]
        %v835 = vld [vmem:[#allocation4 + $0xb10] sm:$0xff]
        %v836 = vld [vmem:[#allocation4 + $0xb18] sm:$0xff]
        %v837 = vld [vmem:[#allocation4 + $0xb20] sm:$0xff]
        %v838 = vld [vmem:[#allocation4 + $0xb28] sm:$0xff]
        %v839 = vld [vmem:[#allocation4 + $0xb30] sm:$0xff]
        %v840 = vld [vmem:[#allocation4 + $0xb38] sm:$0xff]
        %v841 = vld [vmem:[#allocation4 + $0xb40] sm:$0xff]
        %v842 = vld [vmem:[#allocation4 + $0xb48] sm:$0xff]
        %v843 = vld [vmem:[#allocation4 + $0xb50] sm:$0xff]
        %v844 = vld [vmem:[#allocation4 + $0xb58] sm:$0xff]
        %v845 = vld [vmem:[#allocation4 + $0xb60] sm:$0xff]
        %v846 = vld [vmem:[#allocation4 + $0xb68] sm:$0xff]
        %v847 = vld [vmem:[#allocation4 + $0xb70] sm:$0xff]
        %v848 = vld [vmem:[#allocation4 + $0xb78] sm:$0xff]
        %v849 = vld [vmem:[#allocation4 + $0xb80] sm:$0xff]
        %v850 = vld [vmem:[#allocation4 + $0xb88] sm:$0xff]
        %v851 = vld [vmem:[#allocation4 + $0xb90] sm:$0xff]
        %v852 = vld [vmem:[#allocation4 + $0xb98] sm:$0xff]
        %v853 = vld [vmem:[#allocation4 + $0xba0] sm:$0xff]
        %v854 = vld [vmem:[#allocation4 + $0xba8] sm:$0xff]
        %v855 = vld [vmem:[#allocation4 + $0xbb0] sm:$0xff]
        %v856 = vld [vmem:[#allocation4 + $0xbb8] sm:$0xff]
        %v857 = vld [vmem:[#allocation4 + $0xbc0] sm:$0xff]
        %v858 = vld [vmem:[#allocation4 + $0xbc8] sm:$0xff]
        %v859 = vld [vmem:[#allocation4 + $0xbd0] sm:$0xff]
        %v860 = vld [vmem:[#allocation4 + $0xbd8] sm:$0xff]
        %v861 = vld [vmem:[#allocation4 + $0xbe0] sm:$0xff]
        %v862 = vld [vmem:[#allocation4 + $0xbe8] sm:$0xff]
        %v863 = vld [vmem:[#allocation4 + $0xbf0] sm:$0xff]
        %v864 = vld [vmem:[#allocation4 + $0xbf8] sm:$0xff]
        %v865 = vld [vmem:[#allocation4 + $0xc00] sm:$0xff]
        %v866 = vld [vmem:[#allocation4 + $0xc08] sm:$0xff]
        %v867 = vld [vmem:[#allocation4 + $0xc10] sm:$0xff]
        %v868 = vld [vmem:[#allocation4 + $0xc18] sm:$0xff]
        %v869 = vld [vmem:[#allocation4 + $0xc20] sm:$0xff]
        %v870 = vld [vmem:[#allocation4 + $0xc28] sm:$0xff]
        %v871 = vld [vmem:[#allocation4 + $0xc30] sm:$0xff]
        %v872 = vld [vmem:[#allocation4 + $0xc38] sm:$0xff]
        %v873 = vld [vmem:[#allocation4 + $0xc40] sm:$0xff]
        %v874 = vld [vmem:[#allocation4 + $0xc48] sm:$0xff]
        %v875 = vld [vmem:[#allocation4 + $0xc50] sm:$0xff]
        %v876 = vld [vmem:[#allocation4 + $0xc58] sm:$0xff]
        %v877 = vld [vmem:[#allocation4 + $0xc60] sm:$0xff]
        %v878 = vld [vmem:[#allocation4 + $0xc68] sm:$0xff]
        %v879 = vld [vmem:[#allocation4 + $0xc70] sm:$0xff]
        %v880 = vld [vmem:[#allocation4 + $0xc78] sm:$0xff]
        %v881 = vld [vmem:[#allocation4 + $0xc80] sm:$0xff]
        %v882 = vld [vmem:[#allocation4 + $0xc88] sm:$0xff]
        %v883 = vld [vmem:[#allocation4 + $0xc90] sm:$0xff]
        %v884 = vld [vmem:[#allocation4 + $0xc98] sm:$0xff]
        %v885 = vld [vmem:[#allocation4 + $0xca0] sm:$0xff]
        %v886 = vld [vmem:[#allocation4 + $0xca8] sm:$0xff]
        %v887 = vld [vmem:[#allocation4 + $0xcb0] sm:$0xff]
        %v888 = vld [vmem:[#allocation4 + $0xcb8] sm:$0xff]
        %v889 = vld [vmem:[#allocation4 + $0xcc0] sm:$0xff]
        %v890 = vld [vmem:[#allocation4 + $0xcc8] sm:$0xff]
        %v891 = vld [vmem:[#allocation4 + $0xcd0] sm:$0xff]
        %v892 = vld [vmem:[#allocation4 + $0xcd8] sm:$0xff]
        %v893 = vld [vmem:[#allocation4 + $0xce0] sm:$0xff]
        %v894 = vld [vmem:[#allocation4 + $0xce8] sm:$0xff]
        %v895 = vld [vmem:[#allocation4 + $0xcf0] sm:$0xff]
        %v896 = vld [vmem:[#allocation4 + $0xcf8] sm:$0xff]
        %v897 = vld [vmem:[#allocation4 + $0xd00] sm:$0xff]
        %v898 = vld [vmem:[#allocation4 + $0xd08] sm:$0xff]
        %v899 = vld [vmem:[#allocation4 + $0xd10] sm:$0xff]
        %v900 = vld [vmem:[#allocation4 + $0xd18] sm:$0xff]
        %v901 = vld [vmem:[#allocation4 + $0xd20] sm:$0xff]
        %v902 = vld [vmem:[#allocation4 + $0xd28] sm:$0xff]
        %v903 = vld [vmem:[#allocation4 + $0xd30] sm:$0xff]
        %v904 = vld [vmem:[#allocation4 + $0xd38] sm:$0xff]
        %v905 = vld [vmem:[#allocation4 + $0xd40] sm:$0xff]
        %v906 = vld [vmem:[#allocation4 + $0xd48] sm:$0xff]
        %v907 = vld [vmem:[#allocation4 + $0xd50] sm:$0xff]
        %v908 = vld [vmem:[#allocation4 + $0xd58] sm:$0xff]
        %v909 = vld [vmem:[#allocation4 + $0xd60] sm:$0xff]
        %v910 = vld [vmem:[#allocation4 + $0xd68] sm:$0xff]
        %v911 = vld [vmem:[#allocation4 + $0xd70] sm:$0xff]
        %v912 = vld [vmem:[#allocation4 + $0xd78] sm:$0xff]
        %v913 = vld [vmem:[#allocation4 + $0xd80] sm:$0xff]
        %v914 = vld [vmem:[#allocation4 + $0xd88] sm:$0xff]
        %v915 = vld [vmem:[#allocation4 + $0xd90] sm:$0xff]
        %v916 = vld [vmem:[#allocation4 + $0xd98] sm:$0xff]
        %v917 = vld [vmem:[#allocation4 + $0xda0] sm:$0xff]
        %v918 = vld [vmem:[#allocation4 + $0xda8] sm:$0xff]
        %v919 = vld [vmem:[#allocation4 + $0xdb0] sm:$0xff]
        %v920 = vld [vmem:[#allocation4 + $0xdb8] sm:$0xff]
        %v921 = vld [vmem:[#allocation4 + $0xdc0] sm:$0xff]
        %v922 = vld [vmem:[#allocation4 + $0xdc8] sm:$0xff]
        %v923 = vld [vmem:[#allocation4 + $0xdd0] sm:$0xff]
        %v924 = vld [vmem:[#allocation4 + $0xdd8] sm:$0xff]
        %v925 = vld [vmem:[#allocation4 + $0xde0] sm:$0xff]
        %v926 = vld [vmem:[#allocation4 + $0xde8] sm:$0xff]
        %v927 = vld [vmem:[#allocation4 + $0xdf0] sm:$0xff]
        %v928 = vld [vmem:[#allocation4 + $0xdf8] sm:$0xff]
        %v929 = vld [vmem:[#allocation4 + $0xe00] sm:$0xff]
        %v930 = vld [vmem:[#allocation4 + $0xe08] sm:$0xff]
        %v931 = vld [vmem:[#allocation4 + $0xe10] sm:$0xff]
        %v932 = vld [vmem:[#allocation4 + $0xe18] sm:$0xff]
        %v933 = vld [vmem:[#allocation4 + $0xe20] sm:$0xff]
        %v934 = vld [vmem:[#allocation4 + $0xe28] sm:$0xff]
        %v935 = vld [vmem:[#allocation4 + $0xe30] sm:$0xff]
        %v936 = vld [vmem:[#allocation4 + $0xe38] sm:$0xff]
        %v937 = vld [vmem:[#allocation4 + $0xe40] sm:$0xff]
        %v938 = vld [vmem:[#allocation4 + $0xe48] sm:$0xff]
        %v939 = vld [vmem:[#allocation4 + $0xe50] sm:$0xff]
        %v940 = vld [vmem:[#allocation4 + $0xe58] sm:$0xff]
        %v941 = vld [vmem:[#allocation4 + $0xe60] sm:$0xff]
        %v942 = vld [vmem:[#allocation4 + $0xe68] sm:$0xff]
        %v943 = vld [vmem:[#allocation4 + $0xe70] sm:$0xff]
        %v944 = vld [vmem:[#allocation4 + $0xe78] sm:$0xff]
        %v945 = vld [vmem:[#allocation4 + $0xe80] sm:$0xff]
        %v946 = vld [vmem:[#allocation4 + $0xe88] sm:$0xff]
        %v947 = vld [vmem:[#allocation4 + $0xe90] sm:$0xff]
        %v948 = vld [vmem:[#allocation4 + $0xe98] sm:$0xff]
        %v949 = vld [vmem:[#allocation4 + $0xea0] sm:$0xff]
        %v950 = vld [vmem:[#allocation4 + $0xea8] sm:$0xff]
        %v951 = vld [vmem:[#allocation4 + $0xeb0] sm:$0xff]
        %v952 = vld [vmem:[#allocation4 + $0xeb8] sm:$0xff]
        %v953 = vld [vmem:[#allocation4 + $0xec0] sm:$0xff]
        %v954 = vld [vmem:[#allocation4 + $0xec8] sm:$0xff]
        %v955 = vld [vmem:[#allocation4 + $0xed0] sm:$0xff]
        %v956 = vld [vmem:[#allocation4 + $0xed8] sm:$0xff]
        %v957 = vld [vmem:[#allocation4 + $0xee0] sm:$0xff]
        %v958 = vld [vmem:[#allocation4 + $0xee8] sm:$0xff]
        %v959 = vld [vmem:[#allocation4 + $0xef0] sm:$0xff]
        %v960 = vld [vmem:[#allocation4 + $0xef8] sm:$0xff]
        %v961 = vld [vmem:[#allocation4 + $0xf00] sm:$0xff]
        %v962 = vld [vmem:[#allocation4 + $0xf08] sm:$0xff]
        %v963 = vld [vmem:[#allocation4 + $0xf10] sm:$0xff]
        %v964 = vld [vmem:[#allocation4 + $0xf18] sm:$0xff]
        %v965 = vld [vmem:[#allocation4 + $0xf20] sm:$0xff]
        %v966 = vld [vmem:[#allocation4 + $0xf28] sm:$0xff]
        %v967 = vld [vmem:[#allocation4 + $0xf30] sm:$0xff]
        %v968 = vld [vmem:[#allocation4 + $0xf38] sm:$0xff]
        %v969 = vld [vmem:[#allocation4 + $0xf40] sm:$0xff]
        %v970 = vld [vmem:[#allocation4 + $0xf48] sm:$0xff]
        %v971 = vld [vmem:[#allocation4 + $0xf50] sm:$0xff]
        %v972 = vld [vmem:[#allocation4 + $0xf58] sm:$0xff]
        %v973 = vld [vmem:[#allocation4 + $0xf60] sm:$0xff]
        %v974 = vld [vmem:[#allocation4 + $0xf68] sm:$0xff]
        %v975 = vld [vmem:[#allocation4 + $0xf70] sm:$0xff]
        %v976 = vld [vmem:[#allocation4 + $0xf78] sm:$0xff]
        %v977 = vld [vmem:[#allocation4 + $0xf80] sm:$0xff]
        %v978 = vld [vmem:[#allocation4 + $0xf88] sm:$0xff]
        %v979 = vld [vmem:[#allocation4 + $0xf90] sm:$0xff]
        %v980 = vld [vmem:[#allocation4 + $0xf98] sm:$0xff]
        %v981 = vld [vmem:[#allocation4 + $0xfa0] sm:$0xff]
        %v982 = vld [vmem:[#allocation4 + $0xfa8] sm:$0xff]
        %v983 = vld [vmem:[#allocation4 + $0xfb0] sm:$0xff]
        %v984 = vld [vmem:[#allocation4 + $0xfb8] sm:$0xff]
        %v985 = vld [vmem:[#allocation4 + $0xfc0] sm:$0xff]
        %v986 = vld [vmem:[#allocation4 + $0xfc8] sm:$0xff]
        %v987 = vld [vmem:[#allocation4 + $0xfd0] sm:$0xff]
        %v988 = vld [vmem:[#allocation4 + $0xfd8] sm:$0xff]
        %v989 = vld [vmem:[#allocation4 + $0xfe0] sm:$0xff]
        %v990 = vld [vmem:[#allocation4 + $0xfe8] sm:$0xff]
        %v991 = vld [vmem:[#allocation4 + $0xff0] sm:$0xff]
        %v992 = vld [vmem:[#allocation4 + $0xff8] sm:$0xff]
        %v993 = vld [vmem:[#allocation4 + $0x1000] sm:$0xff]
        %v994 = vld [vmem:[#allocation4 + $0x1008] sm:$0xff]
        %v995 = vld [vmem:[#allocation4 + $0x1010] sm:$0xff]
        %v996 = vld [vmem:[#allocation4 + $0x1018] sm:$0xff]
        %v997 = vld [vmem:[#allocation4 + $0x1020] sm:$0xff]
        %v998 = vld [vmem:[#allocation4 + $0x1028] sm:$0xff]
        %v999 = vld [vmem:[#allocation4 + $0x1030] sm:$0xff]
        %v1000 = vld [vmem:[#allocation4 + $0x1038] sm:$0xff]
        %v1001 = vld [vmem:[#allocation4 + $0x1040] sm:$0xff]
        %v1002 = vld [vmem:[#allocation4 + $0x1048] sm:$0xff]
        %v1003 = vld [vmem:[#allocation4 + $0x1050] sm:$0xff]
        %v1004 = vld [vmem:[#allocation4 + $0x1058] sm:$0xff]
        %v1005 = vld [vmem:[#allocation4 + $0x1060] sm:$0xff]
        %v1006 = vld [vmem:[#allocation4 + $0x1068] sm:$0xff]
        %v1007 = vld [vmem:[#allocation4 + $0x1070] sm:$0xff]
        %v1008 = vld [vmem:[#allocation4 + $0x1078] sm:$0xff]
        %v1009 = vld [vmem:[#allocation4 + $0x1080] sm:$0xff]
        %v1010 = vld [vmem:[#allocation4 + $0x1088] sm:$0xff]
        %v1011 = vld [vmem:[#allocation4 + $0x1090] sm:$0xff]
        %v1012 = vld [vmem:[#allocation4 + $0x1098] sm:$0xff]
        %v1013 = vld [vmem:[#allocation4 + $0x10a0] sm:$0xff]
        %v1014 = vld [vmem:[#allocation4 + $0x10a8] sm:$0xff]
        %v1015 = vld [vmem:[#allocation4 + $0x10b0] sm:$0xff]
        %v1016 = vld [vmem:[#allocation4 + $0x10b8] sm:$0xff]
        %v1017 = vld [vmem:[#allocation4 + $0x10c0] sm:$0xff]
        %v1018 = vld [vmem:[#allocation4 + $0x10c8] sm:$0xff]
        %v1019 = vld [vmem:[#allocation4 + $0x10d0] sm:$0xff]
        %v1020 = vld [vmem:[#allocation4 + $0x10d8] sm:$0xff]
        %v1021 = vld [vmem:[#allocation4 + $0x10e0] sm:$0xff]
        %v1022 = vld [vmem:[#allocation4 + $0x10e8] sm:$0xff]
        %v1023 = vld [vmem:[#allocation4 + $0x10f0] sm:$0xff]
        %v1024 = vld [vmem:[#allocation4 + $0x10f8] sm:$0xff]
        %v1025 = vld [vmem:[#allocation4 + $0x1100] sm:$0xff]
        %v1026 = vld [vmem:[#allocation4 + $0x1108] sm:$0xff]
        %v1027 = vld [vmem:[#allocation4 + $0x1110] sm:$0xff]
        %v1028 = vld [vmem:[#allocation4 + $0x1118] sm:$0xff]
        %v1029 = vld [vmem:[#allocation4 + $0x1120] sm:$0xff]
        %v1030 = vld [vmem:[#allocation4 + $0x1128] sm:$0xff]
        %v1031 = vld [vmem:[#allocation4 + $0x1130] sm:$0xff]
        %v1032 = vld [vmem:[#allocation4 + $0x1138] sm:$0xff]
        %v1033 = vld [vmem:[#allocation4 + $0x1140] sm:$0xff]
        %v1034 = vld [vmem:[#allocation4 + $0x1148] sm:$0xff]
        %v1035 = vld [vmem:[#allocation4 + $0x1150] sm:$0xff]
        %v1036 = vld [vmem:[#allocation4 + $0x1158] sm:$0xff]
        %v1037 = vld [vmem:[#allocation4 + $0x1160] sm:$0xff]
        %v1038 = vld [vmem:[#allocation4 + $0x1168] sm:$0xff]
        %v1039 = vld [vmem:[#allocation4 + $0x1170] sm:$0xff]
        %v1040 = vld [vmem:[#allocation4 + $0x1178] sm:$0xff]
        %v1041 = vld [vmem:[#allocation4 + $0x1180] sm:$0xff]
        %v1042 = vld [vmem:[#allocation4 + $0x1188] sm:$0xff]
        %v1043 = vld [vmem:[#allocation4 + $0x1190] sm:$0xff]
        %v1044 = vld [vmem:[#allocation4 + $0x1198] sm:$0xff]
        %v1045 = vld [vmem:[#allocation4 + $0x11a0] sm:$0xff]
        %v1046 = vld [vmem:[#allocation4 + $0x11a8] sm:$0xff]
        %v1047 = vld [vmem:[#allocation4 + $0x11b0] sm:$0xff]
        %v1048 = vld [vmem:[#allocation4 + $0x11b8] sm:$0xff]
        %v1049 = vld [vmem:[#allocation4 + $0x11c0] sm:$0xff]
        %v1050 = vld [vmem:[#allocation4 + $0x11c8] sm:$0xff]
        %v1051 = vld [vmem:[#allocation4 + $0x11d0] sm:$0xff]
        %v1052 = vld [vmem:[#allocation4 + $0x11d8] sm:$0xff]
        %v1053 = vld [vmem:[#allocation4 + $0x11e0] sm:$0xff]
        %v1054 = vld [vmem:[#allocation4 + $0x11e8] sm:$0xff]
        %v1055 = vld [vmem:[#allocation4 + $0x11f0] sm:$0xff]
        %v1056 = vld [vmem:[#allocation4 + $0x11f8] sm:$0xff]
        %v1057 = vld [vmem:[#allocation6] sm:$0x3f]
        %v1059 = vlaneseq
        %v1060 = vshrl.u32 %v1059, 7
        %v1061 = vsub.s32 0, %v1060
        %v1062 = vrot.slane %v1057, %v1061
        %v1063 = vlaneseq
        %v1064 = vshrl.u32 %v1063, 7
        %v1065 = vsub.s32 1, %v1064
        %v1066 = vrot.slane %v1057, %v1065
        %v1067 = vlaneseq
        %v1068 = vshrl.u32 %v1067, 7
        %v1069 = vsub.s32 2, %v1068
        %v1070 = vrot.slane %v1057, %v1069
        %v1071 = vlaneseq
        %v1072 = vshrl.u32 %v1071, 7
        %v1073 = vsub.s32 3, %v1072
        %v1074 = vrot.slane %v1057, %v1073
        %v1075 = vlaneseq
        %v1076 = vshrl.u32 %v1075, 7
        %v1077 = vsub.s32 4, %v1076
        %v1078 = vrot.slane %v1057, %v1077
        %v1079 = vlaneseq
        %v1080 = vshrl.u32 %v1079, 7
        %v1081 = vsub.s32 5, %v1080
        %v1082 = vrot.slane %v1057, %v1081
        %1089 = vmatprep.subr.mxu0 %v572
        %1090 = vmatpush1.msra.mxu0 %v571
        %1091 = vmatprep.subr.mxu0 %v566
        %1092 = vmatpush1.msra.mxu0 %v565
        %1093 = vmatprep.subr.mxu0 %v560
        %1094 = vmatpush1.msra.mxu0 %v559
        %1095 = vmatprep.subr.mxu0 %v554
        %1096 = vmatpush1.msra.mxu0 %v553
        %1097 = vmatprep.subr.mxu0 %v548
        %1098 = vmatpush1.msra.mxu0 %v547
        %1099 = vmatprep.subr.mxu0 %v542
        %1100 = vmatpush1.msra.mxu0 %v541
        %1101 = vmatprep.subr.mxu0 %v536
        %1102 = vmatpush1.msra.mxu0 %v535
        %1103 = vmatprep.subr.mxu0 %v530
        %1104 = vmatpush1.msra.mxu0 %v529
        %1105 = vmatprep.subr.mxu0 %v524
        %1106 = vmatpush1.msra.mxu0 %v523
        %1107 = vmatprep.subr.mxu0 %v518
        %1108 = vmatpush1.msra.mxu0 %v517
        %1109 = vmatprep.subr.mxu0 %v512
        %1110 = vmatpush1.msra.mxu0 %v511
        %1111 = vmatprep.subr.mxu0 %v506
        %1112 = vmatpush1.msra.mxu0 %v505
        %1113 = vmatprep.subr.mxu0 %v500
        %1114 = vmatpush1.msra.mxu0 %v499
        %1115 = vmatprep.subr.mxu0 %v494
        %1116 = vmatpush1.msra.mxu0 %v493
        %1117 = vmatprep.subr.mxu0 %v488
        %1118 = vmatpush1.msra.mxu0 %v487
        %1119 = vmatprep.subr.mxu0 %v482
        %1120 = vmatpush1.msra.mxu0 %v481
        %1121 = vmatprep.subr.mxu0 %v668
        %1122 = vmatpush2.msra.mxu0 %v667
        %1123 = vmatprep.subr.mxu0 %v662
        %1124 = vmatpush2.msra.mxu0 %v661
        %1125 = vmatprep.subr.mxu0 %v656
        %1126 = vmatpush2.msra.mxu0 %v655
        %1127 = vmatprep.subr.mxu0 %v650
        %1128 = vmatpush2.msra.mxu0 %v649
        %1129 = vmatprep.subr.mxu0 %v644
        %1130 = vmatpush2.msra.mxu0 %v643
        %1131 = vmatprep.subr.mxu0 %v638
        %1132 = vmatpush2.msra.mxu0 %v637
        %1133 = vmatprep.subr.mxu0 %v632
        %1134 = vmatpush2.msra.mxu0 %v631
        %1135 = vmatprep.subr.mxu0 %v626
        %1136 = vmatpush2.msra.mxu0 %v625
        %1137 = vmatprep.subr.mxu0 %v620
        %1138 = vmatpush2.msra.mxu0 %v619
        %1139 = vmatprep.subr.mxu0 %v614
        %1140 = vmatpush2.msra.mxu0 %v613
        %1141 = vmatprep.subr.mxu0 %v608
        %1142 = vmatpush2.msra.mxu0 %v607
        %1143 = vmatprep.subr.mxu0 %v602
        %1144 = vmatpush2.msra.mxu0 %v601
        %1145 = vmatprep.subr.mxu0 %v596
        %1146 = vmatpush2.msra.mxu0 %v595
        %1147 = vmatprep.subr.mxu0 %v590
        %1148 = vmatpush2.msra.mxu0 %v589
        %1149 = vmatprep.subr.mxu0 %v584
        %1150 = vmatpush2.msra.mxu0 %v583
        %1151 = vmatprep.subr.mxu0 %v578
        %1152 = vmatpush2.msra.mxu0 %v577
        %1153 = vmatprep.mubr.f32.mxu0 %v386
        %1154 = vmatmul.mubr.f32.gmra.mxu0 %v385
        %v1155 = vpop.f32.mrf.mxu0
        %v1156 = vadd.f32 %v1062, %v1155
        %v1157 = vpop.f32.mrf.mxu0
        %v1158 = vadd.f32 %v1066, %v1157
        %1159 = vmatprep.mubr.f32.mxu0 %v392
        %1160 = vmatmul.mubr.f32.gmra.mxu0 %v391
        %v1161 = vpop.f32.mrf.mxu0
        %v1162 = vadd.f32 %v1062, %v1161
        %v1163 = vpop.f32.mrf.mxu0
        %v1164 = vadd.f32 %v1066, %v1163
        %1165 = vmatprep.mubr.f32.mxu0 %v398
        %1166 = vmatmul.mubr.f32.gmra.mxu0 %v397
        %v1167 = vpop.f32.mrf.mxu0
        %v1168 = vadd.f32 %v1062, %v1167
        %v1169 = vpop.f32.mrf.mxu0
        %v1170 = vadd.f32 %v1066, %v1169
        %1171 = vmatprep.mubr.f32.mxu0 %v404
        %1172 = vmatmul.mubr.f32.gmra.mxu0 %v403
        %v1173 = vpop.f32.mrf.mxu0
        %v1174 = vadd.f32 %v1062, %v1173
        %v1175 = vpop.f32.mrf.mxu0
        %v1176 = vadd.f32 %v1066, %v1175
        %1177 = vmatprep.mubr.f32.mxu0 %v410
        %1178 = vmatmul.mubr.f32.gmra.mxu0 %v409
        %v1179 = vpop.f32.mrf.mxu0
        %v1180 = vadd.f32 %v1062, %v1179
        %v1181 = vpop.f32.mrf.mxu0
        %v1182 = vadd.f32 %v1066, %v1181
        %1183 = vmatprep.mubr.f32.mxu0 %v416
        %1184 = vmatmul.mubr.f32.gmra.mxu0 %v415
        %v1185 = vpop.f32.mrf.mxu0
        %v1186 = vadd.f32 %v1062, %v1185
        %v1187 = vpop.f32.mrf.mxu0
        %v1188 = vadd.f32 %v1066, %v1187
        %1189 = vmatprep.mubr.f32.mxu0 %v422
        %1190 = vmatmul.mubr.f32.gmra.mxu0 %v421
        %v1191 = vpop.f32.mrf.mxu0
        %v1192 = vadd.f32 %v1062, %v1191
        %v1193 = vpop.f32.mrf.mxu0
        %v1194 = vadd.f32 %v1066, %v1193
        %1195 = vmatprep.mubr.f32.mxu0 %v428
        %1196 = vmatmul.mubr.f32.gmra.mxu0 %v427
        %v1197 = vpop.f32.mrf.mxu0
        %v1198 = vadd.f32 %v1062, %v1197
        %v1199 = vpop.f32.mrf.mxu0
        %v1200 = vadd.f32 %v1066, %v1199
        %1201 = vmatprep.mubr.f32.mxu0 %v434
        %1202 = vmatmul.mubr.f32.gmra.mxu0 %v433
        %v1203 = vpop.f32.mrf.mxu0
        %v1204 = vadd.f32 %v1062, %v1203
        %v1205 = vpop.f32.mrf.mxu0
        %v1206 = vadd.f32 %v1066, %v1205
        %1207 = vmatprep.mubr.f32.mxu0 %v440
        %1208 = vmatmul.mubr.f32.gmra.mxu0 %v439
        %v1209 = vpop.f32.mrf.mxu0
        %v1210 = vadd.f32 %v1062, %v1209
        %v1211 = vpop.f32.mrf.mxu0
        %v1212 = vadd.f32 %v1066, %v1211
        %1213 = vmatprep.mubr.f32.mxu0 %v446
        %1214 = vmatmul.mubr.f32.gmra.mxu0 %v445
        %v1215 = vpop.f32.mrf.mxu0
        %v1216 = vadd.f32 %v1062, %v1215
        %v1217 = vpop.f32.mrf.mxu0
        %v1218 = vadd.f32 %v1066, %v1217
        %1219 = vmatprep.mubr.f32.mxu0 %v452
        %1220 = vmatmul.mubr.f32.gmra.mxu0 %v451
        %v1221 = vpop.f32.mrf.mxu0
        %v1222 = vadd.f32 %v1062, %v1221
        %v1223 = vpop.f32.mrf.mxu0
        %v1224 = vadd.f32 %v1066, %v1223
        %1225 = vmatprep.mubr.f32.mxu0 %v458
        %1226 = vmatmul.mubr.f32.gmra.mxu0 %v457
        %v1227 = vpop.f32.mrf.mxu0
        %v1228 = vadd.f32 %v1062, %v1227
        %v1229 = vpop.f32.mrf.mxu0
        %v1230 = vadd.f32 %v1066, %v1229
        %1231 = vmatprep.mubr.f32.mxu0 %v464
        %1232 = vmatmul.mubr.f32.gmra.mxu0 %v463
        %v1233 = vpop.f32.mrf.mxu0
        %v1234 = vadd.f32 %v1062, %v1233
        %v1235 = vpop.f32.mrf.mxu0
        %v1236 = vadd.f32 %v1066, %v1235
        %1237 = vmatprep.mubr.f32.mxu0 %v470
        %1238 = vmatmul.mubr.f32.gmra.mxu0 %v469
        %v1239 = vpop.f32.mrf.mxu0
        %v1240 = vadd.f32 %v1062, %v1239
        %v1241 = vpop.f32.mrf.mxu0
        %v1242 = vadd.f32 %v1066, %v1241
        %1243 = vmatprep.mubr.f32.mxu0 %v476
        %1244 = vmatmul.mubr.f32.gmra.mxu0 %v475
        %v1245 = vpop.f32.mrf.mxu0
        %v1246 = vadd.f32 %v1062, %v1245
        %v1247 = vpop.f32.mrf.mxu0
        %v1248 = vadd.f32 %v1066, %v1247
        %1249 = vdwg.mxu0
        %1250 = vmatprep.subr.mxu0 %v764
        %1251 = vmatpush1.msra.mxu0 %v763
        %1252 = vmatprep.subr.mxu0 %v758
        %1253 = vmatpush1.msra.mxu0 %v757
        %1254 = vmatprep.subr.mxu0 %v752
        %1255 = vmatpush1.msra.mxu0 %v751
        %1256 = vmatprep.subr.mxu0 %v746
        %1257 = vmatpush1.msra.mxu0 %v745
        %1258 = vmatprep.subr.mxu0 %v740
        %1259 = vmatpush1.msra.mxu0 %v739
        %1260 = vmatprep.subr.mxu0 %v734
        %1261 = vmatpush1.msra.mxu0 %v733
        %1262 = vmatprep.subr.mxu0 %v728
        %1263 = vmatpush1.msra.mxu0 %v727
        %1264 = vmatprep.subr.mxu0 %v722
        %1265 = vmatpush1.msra.mxu0 %v721
        %1266 = vmatprep.subr.mxu0 %v716
        %1267 = vmatpush1.msra.mxu0 %v715
        %1268 = vmatprep.subr.mxu0 %v710
        %1269 = vmatpush1.msra.mxu0 %v709
        %1270 = vmatprep.subr.mxu0 %v704
        %1271 = vmatpush1.msra.mxu0 %v703
        %1272 = vmatprep.subr.mxu0 %v698
        %1273 = vmatpush1.msra.mxu0 %v697
        %1274 = vmatprep.subr.mxu0 %v692
        %1275 = vmatpush1.msra.mxu0 %v691
        %1276 = vmatprep.subr.mxu0 %v686
        %1277 = vmatpush1.msra.mxu0 %v685
        %1278 = vmatprep.subr.mxu0 %v680
        %1279 = vmatpush1.msra.mxu0 %v679
        %1280 = vmatprep.subr.mxu0 %v674
        %1281 = vmatpush1.msra.mxu0 %v673
        %1282 = vmatprep.subr.mxu0 %v860
        %1283 = vmatpush2.msra.mxu0 %v859
        %1284 = vmatprep.subr.mxu0 %v854
        %1285 = vmatpush2.msra.mxu0 %v853
        %1286 = vmatprep.subr.mxu0 %v848
        %1287 = vmatpush2.msra.mxu0 %v847
        %1288 = vmatprep.subr.mxu0 %v842
        %1289 = vmatpush2.msra.mxu0 %v841
        %1290 = vmatprep.subr.mxu0 %v836
        %1291 = vmatpush2.msra.mxu0 %v835
        %1292 = vmatprep.subr.mxu0 %v830
        %1293 = vmatpush2.msra.mxu0 %v829
        %1294 = vmatprep.subr.mxu0 %v824
        %1295 = vmatpush2.msra.mxu0 %v823
        %1296 = vmatprep.subr.mxu0 %v818
        %1297 = vmatpush2.msra.mxu0 %v817
        %1298 = vmatprep.subr.mxu0 %v812
        %1299 = vmatpush2.msra.mxu0 %v811
        %1300 = vmatprep.subr.mxu0 %v806
        %1301 = vmatpush2.msra.mxu0 %v805
        %1302 = vmatprep.subr.mxu0 %v800
        %1303 = vmatpush2.msra.mxu0 %v799
        %1304 = vmatprep.subr.mxu0 %v794
        %1305 = vmatpush2.msra.mxu0 %v793
        %1306 = vmatprep.subr.mxu0 %v788
        %1307 = vmatpush2.msra.mxu0 %v787
        %1308 = vmatprep.subr.mxu0 %v782
        %1309 = vmatpush2.msra.mxu0 %v781
        %1310 = vmatprep.subr.mxu0 %v776
        %1311 = vmatpush2.msra.mxu0 %v775
        %1312 = vmatprep.subr.mxu0 %v770
        %1313 = vmatpush2.msra.mxu0 %v769
        %1314 = vmatprep.mubr.f32.mxu0 %v388
        %1315 = vmatmul.mubr.f32.gmra.mxu0 %v387
        %v1316 = vpop.f32.mrf.mxu0
        %v1317 = vadd.f32 %v1156, %v1316
        %v1318 = vpop.f32.mrf.mxu0
        %v1319 = vadd.f32 %v1158, %v1318
        %1320 = vmatprep.mubr.f32.mxu0 %v394
        %1321 = vmatmul.mubr.f32.gmra.mxu0 %v393
        %v1322 = vpop.f32.mrf.mxu0
        %v1323 = vadd.f32 %v1162, %v1322
        %v1324 = vpop.f32.mrf.mxu0
        %v1325 = vadd.f32 %v1164, %v1324
        %1326 = vmatprep.mubr.f32.mxu0 %v400
        %1327 = vmatmul.mubr.f32.gmra.mxu0 %v399
        %v1328 = vpop.f32.mrf.mxu0
        %v1329 = vadd.f32 %v1168, %v1328
        %v1330 = vpop.f32.mrf.mxu0
        %v1331 = vadd.f32 %v1170, %v1330
        %1332 = vmatprep.mubr.f32.mxu0 %v406
        %1333 = vmatmul.mubr.f32.gmra.mxu0 %v405
        %v1334 = vpop.f32.mrf.mxu0
        %v1335 = vadd.f32 %v1174, %v1334
        %v1336 = vpop.f32.mrf.mxu0
        %v1337 = vadd.f32 %v1176, %v1336
        %1338 = vmatprep.mubr.f32.mxu0 %v412
        %1339 = vmatmul.mubr.f32.gmra.mxu0 %v411
        %v1340 = vpop.f32.mrf.mxu0
        %v1341 = vadd.f32 %v1180, %v1340
        %v1342 = vpop.f32.mrf.mxu0
        %v1343 = vadd.f32 %v1182, %v1342
        %1344 = vmatprep.mubr.f32.mxu0 %v418
        %1345 = vmatmul.mubr.f32.gmra.mxu0 %v417
        %v1346 = vpop.f32.mrf.mxu0
        %v1347 = vadd.f32 %v1186, %v1346
        %v1348 = vpop.f32.mrf.mxu0
        %v1349 = vadd.f32 %v1188, %v1348
        %1350 = vmatprep.mubr.f32.mxu0 %v424
        %1351 = vmatmul.mubr.f32.gmra.mxu0 %v423
        %v1352 = vpop.f32.mrf.mxu0
        %v1353 = vadd.f32 %v1192, %v1352
        %v1354 = vpop.f32.mrf.mxu0
        %v1355 = vadd.f32 %v1194, %v1354
        %1356 = vmatprep.mubr.f32.mxu0 %v430
        %1357 = vmatmul.mubr.f32.gmra.mxu0 %v429
        %v1358 = vpop.f32.mrf.mxu0
        %v1359 = vadd.f32 %v1198, %v1358
        %v1360 = vpop.f32.mrf.mxu0
        %v1361 = vadd.f32 %v1200, %v1360
        %1362 = vmatprep.mubr.f32.mxu0 %v436
        %1363 = vmatmul.mubr.f32.gmra.mxu0 %v435
        %v1364 = vpop.f32.mrf.mxu0
        %v1365 = vadd.f32 %v1204, %v1364
        %v1366 = vpop.f32.mrf.mxu0
        %v1367 = vadd.f32 %v1206, %v1366
        %1368 = vmatprep.mubr.f32.mxu0 %v442
        %1369 = vmatmul.mubr.f32.gmra.mxu0 %v441
        %v1370 = vpop.f32.mrf.mxu0
        %v1371 = vadd.f32 %v1210, %v1370
        %v1372 = vpop.f32.mrf.mxu0
        %v1373 = vadd.f32 %v1212, %v1372
        %1374 = vmatprep.mubr.f32.mxu0 %v448
        %1375 = vmatmul.mubr.f32.gmra.mxu0 %v447
        %v1376 = vpop.f32.mrf.mxu0
        %v1377 = vadd.f32 %v1216, %v1376
        %v1378 = vpop.f32.mrf.mxu0
        %v1379 = vadd.f32 %v1218, %v1378
        %1380 = vmatprep.mubr.f32.mxu0 %v454
        %1381 = vmatmul.mubr.f32.gmra.mxu0 %v453
        %v1382 = vpop.f32.mrf.mxu0
        %v1383 = vadd.f32 %v1222, %v1382
        %v1384 = vpop.f32.mrf.mxu0
        %v1385 = vadd.f32 %v1224, %v1384
        %1386 = vmatprep.mubr.f32.mxu0 %v460
        %1387 = vmatmul.mubr.f32.gmra.mxu0 %v459
        %v1388 = vpop.f32.mrf.mxu0
        %v1389 = vadd.f32 %v1228, %v1388
        %v1390 = vpop.f32.mrf.mxu0
        %v1391 = vadd.f32 %v1230, %v1390
        %1392 = vmatprep.mubr.f32.mxu0 %v466
        %1393 = vmatmul.mubr.f32.gmra.mxu0 %v465
        %v1394 = vpop.f32.mrf.mxu0
        %v1395 = vadd.f32 %v1234, %v1394
        %v1396 = vpop.f32.mrf.mxu0
        %v1397 = vadd.f32 %v1236, %v1396
        %1398 = vmatprep.mubr.f32.mxu0 %v472
        %1399 = vmatmul.mubr.f32.gmra.mxu0 %v471
        %v1400 = vpop.f32.mrf.mxu0
        %v1401 = vadd.f32 %v1240, %v1400
        %v1402 = vpop.f32.mrf.mxu0
        %v1403 = vadd.f32 %v1242, %v1402
        %1404 = vmatprep.mubr.f32.mxu0 %v478
        %1405 = vmatmul.mubr.f32.gmra.mxu0 %v477
        %v1406 = vpop.f32.mrf.mxu0
        %v1407 = vadd.f32 %v1246, %v1406
        %v1408 = vpop.f32.mrf.mxu0
        %v1409 = vadd.f32 %v1248, %v1408
        %1410 = vdwg.mxu0
        %1411 = vmatprep.subr.mxu0 %v956
        %1412 = vmatpush1.msra.mxu0 %v955
        %1413 = vmatprep.subr.mxu0 %v950
        %1414 = vmatpush1.msra.mxu0 %v949
        %1415 = vmatprep.subr.mxu0 %v944
        %1416 = vmatpush1.msra.mxu0 %v943
        %1417 = vmatprep.subr.mxu0 %v938
        %1418 = vmatpush1.msra.mxu0 %v937
        %1419 = vmatprep.subr.mxu0 %v932
        %1420 = vmatpush1.msra.mxu0 %v931
        %1421 = vmatprep.subr.mxu0 %v926
        %1422 = vmatpush1.msra.mxu0 %v925
        %1423 = vmatprep.subr.mxu0 %v920
        %1424 = vmatpush1.msra.mxu0 %v919
        %1425 = vmatprep.subr.mxu0 %v914
        %1426 = vmatpush1.msra.mxu0 %v913
        %1427 = vmatprep.subr.mxu0 %v908
        %1428 = vmatpush1.msra.mxu0 %v907
        %1429 = vmatprep.subr.mxu0 %v902
        %1430 = vmatpush1.msra.mxu0 %v901
        %1431 = vmatprep.subr.mxu0 %v896
        %1432 = vmatpush1.msra.mxu0 %v895
        %1433 = vmatprep.subr.mxu0 %v890
        %1434 = vmatpush1.msra.mxu0 %v889
        %1435 = vmatprep.subr.mxu0 %v884
        %1436 = vmatpush1.msra.mxu0 %v883
        %1437 = vmatprep.subr.mxu0 %v878
        %1438 = vmatpush1.msra.mxu0 %v877
        %1439 = vmatprep.subr.mxu0 %v872
        %1440 = vmatpush1.msra.mxu0 %v871
        %1441 = vmatprep.subr.mxu0 %v866
        %1442 = vmatpush1.msra.mxu0 %v865
        %1443 = vmatprep.subr.mxu0 %v1052
        %1444 = vmatpush2.msra.mxu0 %v1051
        %1445 = vmatprep.subr.mxu0 %v1046
        %1446 = vmatpush2.msra.mxu0 %v1045
        %1447 = vmatprep.subr.mxu0 %v1040
        %1448 = vmatpush2.msra.mxu0 %v1039
        %1449 = vmatprep.subr.mxu0 %v1034
        %1450 = vmatpush2.msra.mxu0 %v1033
        %1451 = vmatprep.subr.mxu0 %v1028
        %1452 = vmatpush2.msra.mxu0 %v1027
        %1453 = vmatprep.subr.mxu0 %v1022
        %1454 = vmatpush2.msra.mxu0 %v1021
        %1455 = vmatprep.subr.mxu0 %v1016
        %1456 = vmatpush2.msra.mxu0 %v1015
        %1457 = vmatprep.subr.mxu0 %v1010
        %1458 = vmatpush2.msra.mxu0 %v1009
        %1459 = vmatprep.subr.mxu0 %v1004
        %1460 = vmatpush2.msra.mxu0 %v1003
        %1461 = vmatprep.subr.mxu0 %v998
        %1462 = vmatpush2.msra.mxu0 %v997
        %1463 = vmatprep.subr.mxu0 %v992
        %1464 = vmatpush2.msra.mxu0 %v991
        %1465 = vmatprep.subr.mxu0 %v986
        %1466 = vmatpush2.msra.mxu0 %v985
        %1467 = vmatprep.subr.mxu0 %v980
        %1468 = vmatpush2.msra.mxu0 %v979
        %1469 = vmatprep.subr.mxu0 %v974
        %1470 = vmatpush2.msra.mxu0 %v973
        %1471 = vmatprep.subr.mxu0 %v968
        %1472 = vmatpush2.msra.mxu0 %v967
        %1473 = vmatprep.subr.mxu0 %v962
        %1474 = vmatpush2.msra.mxu0 %v961
        %1475 = vmatprep.mubr.f32.mxu0 %v390
        %1476 = vmatmul.mubr.f32.gmra.mxu0 %v389
        %v1477 = vpop.f32.mrf.mxu0
        %v1478 = vadd.f32 %v1317, %v1477
        %v1479 = vpop.f32.mrf.mxu0
        %v1480 = vadd.f32 %v1319, %v1479
        %1481 = vmatprep.mubr.f32.mxu0 %v396
        %1482 = vmatmul.mubr.f32.gmra.mxu0 %v395
        %v1483 = vpop.f32.mrf.mxu0
        %v1484 = vadd.f32 %v1323, %v1483
        %v1485 = vpop.f32.mrf.mxu0
        %v1486 = vadd.f32 %v1325, %v1485
        %1487 = vmatprep.mubr.f32.mxu0 %v402
        %1488 = vmatmul.mubr.f32.gmra.mxu0 %v401
        %v1489 = vpop.f32.mrf.mxu0
        %v1490 = vadd.f32 %v1329, %v1489
        %v1491 = vpop.f32.mrf.mxu0
        %v1492 = vadd.f32 %v1331, %v1491
        %1493 = vmatprep.mubr.f32.mxu0 %v408
        %1494 = vmatmul.mubr.f32.gmra.mxu0 %v407
        %v1495 = vpop.f32.mrf.mxu0
        %v1496 = vadd.f32 %v1335, %v1495
        %v1497 = vpop.f32.mrf.mxu0
        %v1498 = vadd.f32 %v1337, %v1497
        %1499 = vmatprep.mubr.f32.mxu0 %v414
        %1500 = vmatmul.mubr.f32.gmra.mxu0 %v413
        %v1501 = vpop.f32.mrf.mxu0
        %v1502 = vadd.f32 %v1341, %v1501
        %v1503 = vpop.f32.mrf.mxu0
        %v1504 = vadd.f32 %v1343, %v1503
        %1505 = vmatprep.mubr.f32.mxu0 %v420
        %1506 = vmatmul.mubr.f32.gmra.mxu0 %v419
        %v1507 = vpop.f32.mrf.mxu0
        %v1508 = vadd.f32 %v1347, %v1507
        %v1509 = vpop.f32.mrf.mxu0
        %v1510 = vadd.f32 %v1349, %v1509
        %1511 = vmatprep.mubr.f32.mxu0 %v426
        %1512 = vmatmul.mubr.f32.gmra.mxu0 %v425
        %v1513 = vpop.f32.mrf.mxu0
        %v1514 = vadd.f32 %v1353, %v1513
        %v1515 = vpop.f32.mrf.mxu0
        %v1516 = vadd.f32 %v1355, %v1515
        %1517 = vmatprep.mubr.f32.mxu0 %v432
        %1518 = vmatmul.mubr.f32.gmra.mxu0 %v431
        %v1519 = vpop.f32.mrf.mxu0
        %v1520 = vadd.f32 %v1359, %v1519
        %v1521 = vpop.f32.mrf.mxu0
        %v1522 = vadd.f32 %v1361, %v1521
        %1523 = vmatprep.mubr.f32.mxu0 %v438
        %1524 = vmatmul.mubr.f32.gmra.mxu0 %v437
        %v1525 = vpop.f32.mrf.mxu0
        %v1526 = vadd.f32 %v1365, %v1525
        %v1527 = vpop.f32.mrf.mxu0
        %v1528 = vadd.f32 %v1367, %v1527
        %1529 = vmatprep.mubr.f32.mxu0 %v444
        %1530 = vmatmul.mubr.f32.gmra.mxu0 %v443
        %v1531 = vpop.f32.mrf.mxu0
        %v1532 = vadd.f32 %v1371, %v1531
        %v1533 = vpop.f32.mrf.mxu0
        %v1534 = vadd.f32 %v1373, %v1533
        %1535 = vmatprep.mubr.f32.mxu0 %v450
        %1536 = vmatmul.mubr.f32.gmra.mxu0 %v449
        %v1537 = vpop.f32.mrf.mxu0
        %v1538 = vadd.f32 %v1377, %v1537
        %v1539 = vpop.f32.mrf.mxu0
        %v1540 = vadd.f32 %v1379, %v1539
        %1541 = vmatprep.mubr.f32.mxu0 %v456
        %1542 = vmatmul.mubr.f32.gmra.mxu0 %v455
        %v1543 = vpop.f32.mrf.mxu0
        %v1544 = vadd.f32 %v1383, %v1543
        %v1545 = vpop.f32.mrf.mxu0
        %v1546 = vadd.f32 %v1385, %v1545
        %1547 = vmatprep.mubr.f32.mxu0 %v462
        %1548 = vmatmul.mubr.f32.gmra.mxu0 %v461
        %v1549 = vpop.f32.mrf.mxu0
        %v1550 = vadd.f32 %v1389, %v1549
        %v1551 = vpop.f32.mrf.mxu0
        %v1552 = vadd.f32 %v1391, %v1551
        %1553 = vmatprep.mubr.f32.mxu0 %v468
        %1554 = vmatmul.mubr.f32.gmra.mxu0 %v467
        %v1555 = vpop.f32.mrf.mxu0
        %v1556 = vadd.f32 %v1395, %v1555
        %v1557 = vpop.f32.mrf.mxu0
        %v1558 = vadd.f32 %v1397, %v1557
        %1559 = vmatprep.mubr.f32.mxu0 %v474
        %1560 = vmatmul.mubr.f32.gmra.mxu0 %v473
        %v1561 = vpop.f32.mrf.mxu0
        %v1562 = vadd.f32 %v1401, %v1561
        %v1563 = vpop.f32.mrf.mxu0
        %v1564 = vadd.f32 %v1403, %v1563
        %1565 = vmatprep.mubr.f32.mxu0 %v480
        %1566 = vmatmul.mubr.f32.gmra.mxu0 %v479
        %v1567 = vpop.f32.mrf.mxu0
        %v1568 = vadd.f32 %v1407, %v1567
        %v1569 = vpop.f32.mrf.mxu0
        %v1570 = vadd.f32 %v1409, %v1569
        %1571 = vdwg.mxu0
        %1572 = vmatprep.subr.mxu0 %v574
        %1573 = vmatpush1.msra.mxu0 %v573
        %1574 = vmatprep.subr.mxu0 %v568
        %1575 = vmatpush1.msra.mxu0 %v567
        %1576 = vmatprep.subr.mxu0 %v562
        %1577 = vmatpush1.msra.mxu0 %v561
        %1578 = vmatprep.subr.mxu0 %v556
        %1579 = vmatpush1.msra.mxu0 %v555
        %1580 = vmatprep.subr.mxu0 %v550
        %1581 = vmatpush1.msra.mxu0 %v549
        %1582 = vmatprep.subr.mxu0 %v544
        %1583 = vmatpush1.msra.mxu0 %v543
        %1584 = vmatprep.subr.mxu0 %v538
        %1585 = vmatpush1.msra.mxu0 %v537
        %1586 = vmatprep.subr.mxu0 %v532
        %1587 = vmatpush1.msra.mxu0 %v531
        %1588 = vmatprep.subr.mxu0 %v526
        %1589 = vmatpush1.msra.mxu0 %v525
        %1590 = vmatprep.subr.mxu0 %v520
        %1591 = vmatpush1.msra.mxu0 %v519
        %1592 = vmatprep.subr.mxu0 %v514
        %1593 = vmatpush1.msra.mxu0 %v513
        %1594 = vmatprep.subr.mxu0 %v508
        %1595 = vmatpush1.msra.mxu0 %v507
        %1596 = vmatprep.subr.mxu0 %v502
        %1597 = vmatpush1.msra.mxu0 %v501
        %1598 = vmatprep.subr.mxu0 %v496
        %1599 = vmatpush1.msra.mxu0 %v495
        %1600 = vmatprep.subr.mxu0 %v490
        %1601 = vmatpush1.msra.mxu0 %v489
        %1602 = vmatprep.subr.mxu0 %v484
        %1603 = vmatpush1.msra.mxu0 %v483
        %1604 = vmatprep.subr.mxu0 %v670
        %1605 = vmatpush2.msra.mxu0 %v669
        %1606 = vmatprep.subr.mxu0 %v664
        %1607 = vmatpush2.msra.mxu0 %v663
        %1608 = vmatprep.subr.mxu0 %v658
        %1609 = vmatpush2.msra.mxu0 %v657
        %1610 = vmatprep.subr.mxu0 %v652
        %1611 = vmatpush2.msra.mxu0 %v651
        %1612 = vmatprep.subr.mxu0 %v646
        %1613 = vmatpush2.msra.mxu0 %v645
        %1614 = vmatprep.subr.mxu0 %v640
        %1615 = vmatpush2.msra.mxu0 %v639
        %1616 = vmatprep.subr.mxu0 %v634
        %1617 = vmatpush2.msra.mxu0 %v633
        %1618 = vmatprep.subr.mxu0 %v628
        %1619 = vmatpush2.msra.mxu0 %v627
        %1620 = vmatprep.subr.mxu0 %v622
        %1621 = vmatpush2.msra.mxu0 %v621
        %1622 = vmatprep.subr.mxu0 %v616
        %1623 = vmatpush2.msra.mxu0 %v615
        %1624 = vmatprep.subr.mxu0 %v610
        %1625 = vmatpush2.msra.mxu0 %v609
        %1626 = vmatprep.subr.mxu0 %v604
        %1627 = vmatpush2.msra.mxu0 %v603
        %1628 = vmatprep.subr.mxu0 %v598
        %1629 = vmatpush2.msra.mxu0 %v597
        %1630 = vmatprep.subr.mxu0 %v592
        %1631 = vmatpush2.msra.mxu0 %v591
        %1632 = vmatprep.subr.mxu0 %v586
        %1633 = vmatpush2.msra.mxu0 %v585
        %1634 = vmatprep.subr.mxu0 %v580
        %1635 = vmatpush2.msra.mxu0 %v579
        %1636 = vmatprep.mubr.f32.mxu0 %v386
        %1637 = vmatmul.mubr.f32.gmra.mxu0 %v385
        %v1638 = vpop.f32.mrf.mxu0
        %v1639 = vadd.f32 %v1070, %v1638
        %v1640 = vpop.f32.mrf.mxu0
        %v1641 = vadd.f32 %v1074, %v1640
        %1642 = vmatprep.mubr.f32.mxu0 %v392
        %1643 = vmatmul.mubr.f32.gmra.mxu0 %v391
        %v1644 = vpop.f32.mrf.mxu0
        %v1645 = vadd.f32 %v1070, %v1644
        %v1646 = vpop.f32.mrf.mxu0
        %v1647 = vadd.f32 %v1074, %v1646
        %1648 = vmatprep.mubr.f32.mxu0 %v398
        %1649 = vmatmul.mubr.f32.gmra.mxu0 %v397
        %v1650 = vpop.f32.mrf.mxu0
        %v1651 = vadd.f32 %v1070, %v1650
        %v1652 = vpop.f32.mrf.mxu0
        %v1653 = vadd.f32 %v1074, %v1652
        %1654 = vmatprep.mubr.f32.mxu0 %v404
        %1655 = vmatmul.mubr.f32.gmra.mxu0 %v403
        %v1656 = vpop.f32.mrf.mxu0
        %v1657 = vadd.f32 %v1070, %v1656
        %v1658 = vpop.f32.mrf.mxu0
        %v1659 = vadd.f32 %v1074, %v1658
        %1660 = vmatprep.mubr.f32.mxu0 %v410
        %1661 = vmatmul.mubr.f32.gmra.mxu0 %v409
        %v1662 = vpop.f32.mrf.mxu0
        %v1663 = vadd.f32 %v1070, %v1662
        %v1664 = vpop.f32.mrf.mxu0
        %v1665 = vadd.f32 %v1074, %v1664
        %1666 = vmatprep.mubr.f32.mxu0 %v416
        %1667 = vmatmul.mubr.f32.gmra.mxu0 %v415
        %v1668 = vpop.f32.mrf.mxu0
        %v1669 = vadd.f32 %v1070, %v1668
        %v1670 = vpop.f32.mrf.mxu0
        %v1671 = vadd.f32 %v1074, %v1670
        %1672 = vmatprep.mubr.f32.mxu0 %v422
        %1673 = vmatmul.mubr.f32.gmra.mxu0 %v421
        %v1674 = vpop.f32.mrf.mxu0
        %v1675 = vadd.f32 %v1070, %v1674
        %v1676 = vpop.f32.mrf.mxu0
        %v1677 = vadd.f32 %v1074, %v1676
        %1678 = vmatprep.mubr.f32.mxu0 %v428
        %1679 = vmatmul.mubr.f32.gmra.mxu0 %v427
        %v1680 = vpop.f32.mrf.mxu0
        %v1681 = vadd.f32 %v1070, %v1680
        %v1682 = vpop.f32.mrf.mxu0
        %v1683 = vadd.f32 %v1074, %v1682
        %1684 = vmatprep.mubr.f32.mxu0 %v434
        %1685 = vmatmul.mubr.f32.gmra.mxu0 %v433
        %v1686 = vpop.f32.mrf.mxu0
        %v1687 = vadd.f32 %v1070, %v1686
        %v1688 = vpop.f32.mrf.mxu0
        %v1689 = vadd.f32 %v1074, %v1688
        %1690 = vmatprep.mubr.f32.mxu0 %v440
        %1691 = vmatmul.mubr.f32.gmra.mxu0 %v439
        %v1692 = vpop.f32.mrf.mxu0
        %v1693 = vadd.f32 %v1070, %v1692
        %v1694 = vpop.f32.mrf.mxu0
        %v1695 = vadd.f32 %v1074, %v1694
        %1696 = vmatprep.mubr.f32.mxu0 %v446
        %1697 = vmatmul.mubr.f32.gmra.mxu0 %v445
        %v1698 = vpop.f32.mrf.mxu0
        %v1699 = vadd.f32 %v1070, %v1698
        %v1700 = vpop.f32.mrf.mxu0
        %v1701 = vadd.f32 %v1074, %v1700
        %1702 = vmatprep.mubr.f32.mxu0 %v452
        %1703 = vmatmul.mubr.f32.gmra.mxu0 %v451
        %v1704 = vpop.f32.mrf.mxu0
        %v1705 = vadd.f32 %v1070, %v1704
        %v1706 = vpop.f32.mrf.mxu0
        %v1707 = vadd.f32 %v1074, %v1706
        %1708 = vmatprep.mubr.f32.mxu0 %v458
        %1709 = vmatmul.mubr.f32.gmra.mxu0 %v457
        %v1710 = vpop.f32.mrf.mxu0
        %v1711 = vadd.f32 %v1070, %v1710
        %v1712 = vpop.f32.mrf.mxu0
        %v1713 = vadd.f32 %v1074, %v1712
        %1714 = vmatprep.mubr.f32.mxu0 %v464
        %1715 = vmatmul.mubr.f32.gmra.mxu0 %v463
        %v1716 = vpop.f32.mrf.mxu0
        %v1717 = vadd.f32 %v1070, %v1716
        %v1718 = vpop.f32.mrf.mxu0
        %v1719 = vadd.f32 %v1074, %v1718
        %1720 = vmatprep.mubr.f32.mxu0 %v470
        %1721 = vmatmul.mubr.f32.gmra.mxu0 %v469
        %v1722 = vpop.f32.mrf.mxu0
        %v1723 = vadd.f32 %v1070, %v1722
        %v1724 = vpop.f32.mrf.mxu0
        %v1725 = vadd.f32 %v1074, %v1724
        %1726 = vmatprep.mubr.f32.mxu0 %v476
        %1727 = vmatmul.mubr.f32.gmra.mxu0 %v475
        %v1728 = vpop.f32.mrf.mxu0
        %v1729 = vadd.f32 %v1070, %v1728
        %v1730 = vpop.f32.mrf.mxu0
        %v1731 = vadd.f32 %v1074, %v1730
        %1732 = vdwg.mxu0
        %1733 = vmatprep.subr.mxu0 %v766
        %1734 = vmatpush1.msra.mxu0 %v765
        %1735 = vmatprep.subr.mxu0 %v760
        %1736 = vmatpush1.msra.mxu0 %v759
        %1737 = vmatprep.subr.mxu0 %v754
        %1738 = vmatpush1.msra.mxu0 %v753
        %1739 = vmatprep.subr.mxu0 %v748
        %1740 = vmatpush1.msra.mxu0 %v747
        %1741 = vmatprep.subr.mxu0 %v742
        %1742 = vmatpush1.msra.mxu0 %v741
        %1743 = vmatprep.subr.mxu0 %v736
        %1744 = vmatpush1.msra.mxu0 %v735
        %1745 = vmatprep.subr.mxu0 %v730
        %1746 = vmatpush1.msra.mxu0 %v729
        %1747 = vmatprep.subr.mxu0 %v724
        %1748 = vmatpush1.msra.mxu0 %v723
        %1749 = vmatprep.subr.mxu0 %v718
        %1750 = vmatpush1.msra.mxu0 %v717
        %1751 = vmatprep.subr.mxu0 %v712
        %1752 = vmatpush1.msra.mxu0 %v711
        %1753 = vmatprep.subr.mxu0 %v706
        %1754 = vmatpush1.msra.mxu0 %v705
        %1755 = vmatprep.subr.mxu0 %v700
        %1756 = vmatpush1.msra.mxu0 %v699
        %1757 = vmatprep.subr.mxu0 %v694
        %1758 = vmatpush1.msra.mxu0 %v693
        %1759 = vmatprep.subr.mxu0 %v688
        %1760 = vmatpush1.msra.mxu0 %v687
        %1761 = vmatprep.subr.mxu0 %v682
        %1762 = vmatpush1.msra.mxu0 %v681
        %1763 = vmatprep.subr.mxu0 %v676
        %1764 = vmatpush1.msra.mxu0 %v675
        %1765 = vmatprep.subr.mxu0 %v862
        %1766 = vmatpush2.msra.mxu0 %v861
        %1767 = vmatprep.subr.mxu0 %v856
        %1768 = vmatpush2.msra.mxu0 %v855
        %1769 = vmatprep.subr.mxu0 %v850
        %1770 = vmatpush2.msra.mxu0 %v849
        %1771 = vmatprep.subr.mxu0 %v844
        %1772 = vmatpush2.msra.mxu0 %v843
        %1773 = vmatprep.subr.mxu0 %v838
        %1774 = vmatpush2.msra.mxu0 %v837
        %1775 = vmatprep.subr.mxu0 %v832
        %1776 = vmatpush2.msra.mxu0 %v831
        %1777 = vmatprep.subr.mxu0 %v826
        %1778 = vmatpush2.msra.mxu0 %v825
        %1779 = vmatprep.subr.mxu0 %v820
        %1780 = vmatpush2.msra.mxu0 %v819
        %1781 = vmatprep.subr.mxu0 %v814
        %1782 = vmatpush2.msra.mxu0 %v813
        %1783 = vmatprep.subr.mxu0 %v808
        %1784 = vmatpush2.msra.mxu0 %v807
        %1785 = vmatprep.subr.mxu0 %v802
        %1786 = vmatpush2.msra.mxu0 %v801
        %1787 = vmatprep.subr.mxu0 %v796
        %1788 = vmatpush2.msra.mxu0 %v795
        %1789 = vmatprep.subr.mxu0 %v790
        %1790 = vmatpush2.msra.mxu0 %v789
        %1791 = vmatprep.subr.mxu0 %v784
        %1792 = vmatpush2.msra.mxu0 %v783
        %1793 = vmatprep.subr.mxu0 %v778
        %1794 = vmatpush2.msra.mxu0 %v777
        %1795 = vmatprep.subr.mxu0 %v772
        %1796 = vmatpush2.msra.mxu0 %v771
        %1797 = vmatprep.mubr.f32.mxu0 %v388
        %1798 = vmatmul.mubr.f32.gmra.mxu0 %v387
        %v1799 = vpop.f32.mrf.mxu0
        %v1800 = vadd.f32 %v1639, %v1799
        %v1801 = vpop.f32.mrf.mxu0
        %v1802 = vadd.f32 %v1641, %v1801
        %1803 = vmatprep.mubr.f32.mxu0 %v394
        %1804 = vmatmul.mubr.f32.gmra.mxu0 %v393
        %v1805 = vpop.f32.mrf.mxu0
        %v1806 = vadd.f32 %v1645, %v1805
        %v1807 = vpop.f32.mrf.mxu0
        %v1808 = vadd.f32 %v1647, %v1807
        %1809 = vmatprep.mubr.f32.mxu0 %v400
        %1810 = vmatmul.mubr.f32.gmra.mxu0 %v399
        %v1811 = vpop.f32.mrf.mxu0
        %v1812 = vadd.f32 %v1651, %v1811
        %v1813 = vpop.f32.mrf.mxu0
        %v1814 = vadd.f32 %v1653, %v1813
        %1815 = vmatprep.mubr.f32.mxu0 %v406
        %1816 = vmatmul.mubr.f32.gmra.mxu0 %v405
        %v1817 = vpop.f32.mrf.mxu0
        %v1818 = vadd.f32 %v1657, %v1817
        %v1819 = vpop.f32.mrf.mxu0
        %v1820 = vadd.f32 %v1659, %v1819
        %1821 = vmatprep.mubr.f32.mxu0 %v412
        %1822 = vmatmul.mubr.f32.gmra.mxu0 %v411
        %v1823 = vpop.f32.mrf.mxu0
        %v1824 = vadd.f32 %v1663, %v1823
        %v1825 = vpop.f32.mrf.mxu0
        %v1826 = vadd.f32 %v1665, %v1825
        %1827 = vmatprep.mubr.f32.mxu0 %v418
        %1828 = vmatmul.mubr.f32.gmra.mxu0 %v417
        %v1829 = vpop.f32.mrf.mxu0
        %v1830 = vadd.f32 %v1669, %v1829
        %v1831 = vpop.f32.mrf.mxu0
        %v1832 = vadd.f32 %v1671, %v1831
        %1833 = vmatprep.mubr.f32.mxu0 %v424
        %1834 = vmatmul.mubr.f32.gmra.mxu0 %v423
        %v1835 = vpop.f32.mrf.mxu0
        %v1836 = vadd.f32 %v1675, %v1835
        %v1837 = vpop.f32.mrf.mxu0
        %v1838 = vadd.f32 %v1677, %v1837
        %1839 = vmatprep.mubr.f32.mxu0 %v430
        %1840 = vmatmul.mubr.f32.gmra.mxu0 %v429
        %v1841 = vpop.f32.mrf.mxu0
        %v1842 = vadd.f32 %v1681, %v1841
        %v1843 = vpop.f32.mrf.mxu0
        %v1844 = vadd.f32 %v1683, %v1843
        %1845 = vmatprep.mubr.f32.mxu0 %v436
        %1846 = vmatmul.mubr.f32.gmra.mxu0 %v435
        %v1847 = vpop.f32.mrf.mxu0
        %v1848 = vadd.f32 %v1687, %v1847
        %v1849 = vpop.f32.mrf.mxu0
        %v1850 = vadd.f32 %v1689, %v1849
        %1851 = vmatprep.mubr.f32.mxu0 %v442
        %1852 = vmatmul.mubr.f32.gmra.mxu0 %v441
        %v1853 = vpop.f32.mrf.mxu0
        %v1854 = vadd.f32 %v1693, %v1853
        %v1855 = vpop.f32.mrf.mxu0
        %v1856 = vadd.f32 %v1695, %v1855
        %1857 = vmatprep.mubr.f32.mxu0 %v448
        %1858 = vmatmul.mubr.f32.gmra.mxu0 %v447
        %v1859 = vpop.f32.mrf.mxu0
        %v1860 = vadd.f32 %v1699, %v1859
        %v1861 = vpop.f32.mrf.mxu0
        %v1862 = vadd.f32 %v1701, %v1861
        %1863 = vmatprep.mubr.f32.mxu0 %v454
        %1864 = vmatmul.mubr.f32.gmra.mxu0 %v453
        %v1865 = vpop.f32.mrf.mxu0
        %v1866 = vadd.f32 %v1705, %v1865
        %v1867 = vpop.f32.mrf.mxu0
        %v1868 = vadd.f32 %v1707, %v1867
        %1869 = vmatprep.mubr.f32.mxu0 %v460
        %1870 = vmatmul.mubr.f32.gmra.mxu0 %v459
        %v1871 = vpop.f32.mrf.mxu0
        %v1872 = vadd.f32 %v1711, %v1871
        %v1873 = vpop.f32.mrf.mxu0
        %v1874 = vadd.f32 %v1713, %v1873
        %1875 = vmatprep.mubr.f32.mxu0 %v466
        %1876 = vmatmul.mubr.f32.gmra.mxu0 %v465
        %v1877 = vpop.f32.mrf.mxu0
        %v1878 = vadd.f32 %v1717, %v1877
        %v1879 = vpop.f32.mrf.mxu0
        %v1880 = vadd.f32 %v1719, %v1879
        %1881 = vmatprep.mubr.f32.mxu0 %v472
        %1882 = vmatmul.mubr.f32.gmra.mxu0 %v471
        %v1883 = vpop.f32.mrf.mxu0
        %v1884 = vadd.f32 %v1723, %v1883
        %v1885 = vpop.f32.mrf.mxu0
        %v1886 = vadd.f32 %v1725, %v1885
        %1887 = vmatprep.mubr.f32.mxu0 %v478
        %1888 = vmatmul.mubr.f32.gmra.mxu0 %v477
        %v1889 = vpop.f32.mrf.mxu0
        %v1890 = vadd.f32 %v1729, %v1889
        %v1891 = vpop.f32.mrf.mxu0
        %v1892 = vadd.f32 %v1731, %v1891
        %1893 = vdwg.mxu0
        %1894 = vmatprep.subr.mxu0 %v958
        %1895 = vmatpush1.msra.mxu0 %v957
        %1896 = vmatprep.subr.mxu0 %v952
        %1897 = vmatpush1.msra.mxu0 %v951
        %1898 = vmatprep.subr.mxu0 %v946
        %1899 = vmatpush1.msra.mxu0 %v945
        %1900 = vmatprep.subr.mxu0 %v940
        %1901 = vmatpush1.msra.mxu0 %v939
        %1902 = vmatprep.subr.mxu0 %v934
        %1903 = vmatpush1.msra.mxu0 %v933
        %1904 = vmatprep.subr.mxu0 %v928
        %1905 = vmatpush1.msra.mxu0 %v927
        %1906 = vmatprep.subr.mxu0 %v922
        %1907 = vmatpush1.msra.mxu0 %v921
        %1908 = vmatprep.subr.mxu0 %v916
        %1909 = vmatpush1.msra.mxu0 %v915
        %1910 = vmatprep.subr.mxu0 %v910
        %1911 = vmatpush1.msra.mxu0 %v909
        %1912 = vmatprep.subr.mxu0 %v904
        %1913 = vmatpush1.msra.mxu0 %v903
        %1914 = vmatprep.subr.mxu0 %v898
        %1915 = vmatpush1.msra.mxu0 %v897
        %1916 = vmatprep.subr.mxu0 %v892
        %1917 = vmatpush1.msra.mxu0 %v891
        %1918 = vmatprep.subr.mxu0 %v886
        %1919 = vmatpush1.msra.mxu0 %v885
        %1920 = vmatprep.subr.mxu0 %v880
        %1921 = vmatpush1.msra.mxu0 %v879
        %1922 = vmatprep.subr.mxu0 %v874
        %1923 = vmatpush1.msra.mxu0 %v873
        %1924 = vmatprep.subr.mxu0 %v868
        %1925 = vmatpush1.msra.mxu0 %v867
        %1926 = vmatprep.subr.mxu0 %v1054
        %1927 = vmatpush2.msra.mxu0 %v1053
        %1928 = vmatprep.subr.mxu0 %v1048
        %1929 = vmatpush2.msra.mxu0 %v1047
        %1930 = vmatprep.subr.mxu0 %v1042
        %1931 = vmatpush2.msra.mxu0 %v1041
        %1932 = vmatprep.subr.mxu0 %v1036
        %1933 = vmatpush2.msra.mxu0 %v1035
        %1934 = vmatprep.subr.mxu0 %v1030
        %1935 = vmatpush2.msra.mxu0 %v1029
        %1936 = vmatprep.subr.mxu0 %v1024
        %1937 = vmatpush2.msra.mxu0 %v1023
        %1938 = vmatprep.subr.mxu0 %v1018
        %1939 = vmatpush2.msra.mxu0 %v1017
        %1940 = vmatprep.subr.mxu0 %v1012
        %1941 = vmatpush2.msra.mxu0 %v1011
        %1942 = vmatprep.subr.mxu0 %v1006
        %1943 = vmatpush2.msra.mxu0 %v1005
        %1944 = vmatprep.subr.mxu0 %v1000
        %1945 = vmatpush2.msra.mxu0 %v999
        %1946 = vmatprep.subr.mxu0 %v994
        %1947 = vmatpush2.msra.mxu0 %v993
        %1948 = vmatprep.subr.mxu0 %v988
        %1949 = vmatpush2.msra.mxu0 %v987
        %1950 = vmatprep.subr.mxu0 %v982
        %1951 = vmatpush2.msra.mxu0 %v981
        %1952 = vmatprep.subr.mxu0 %v976
        %1953 = vmatpush2.msra.mxu0 %v975
        %1954 = vmatprep.subr.mxu0 %v970
        %1955 = vmatpush2.msra.mxu0 %v969
        %1956 = vmatprep.subr.mxu0 %v964
        %1957 = vmatpush2.msra.mxu0 %v963
        %1958 = vmatprep.mubr.f32.mxu0 %v390
        %1959 = vmatmul.mubr.f32.gmra.mxu0 %v389
        %v1960 = vpop.f32.mrf.mxu0
        %v1961 = vadd.f32 %v1800, %v1960
        %v1962 = vpop.f32.mrf.mxu0
        %v1963 = vadd.f32 %v1802, %v1962
        %1964 = vmatprep.mubr.f32.mxu0 %v396
        %1965 = vmatmul.mubr.f32.gmra.mxu0 %v395
        %v1966 = vpop.f32.mrf.mxu0
        %v1967 = vadd.f32 %v1806, %v1966
        %v1968 = vpop.f32.mrf.mxu0
        %v1969 = vadd.f32 %v1808, %v1968
        %1970 = vmatprep.mubr.f32.mxu0 %v402
        %1971 = vmatmul.mubr.f32.gmra.mxu0 %v401
        %v1972 = vpop.f32.mrf.mxu0
        %v1973 = vadd.f32 %v1812, %v1972
        %v1974 = vpop.f32.mrf.mxu0
        %v1975 = vadd.f32 %v1814, %v1974
        %1976 = vmatprep.mubr.f32.mxu0 %v408
        %1977 = vmatmul.mubr.f32.gmra.mxu0 %v407
        %v1978 = vpop.f32.mrf.mxu0
        %v1979 = vadd.f32 %v1818, %v1978
        %v1980 = vpop.f32.mrf.mxu0
        %v1981 = vadd.f32 %v1820, %v1980
        %1982 = vmatprep.mubr.f32.mxu0 %v414
        %1983 = vmatmul.mubr.f32.gmra.mxu0 %v413
        %v1984 = vpop.f32.mrf.mxu0
        %v1985 = vadd.f32 %v1824, %v1984
        %v1986 = vpop.f32.mrf.mxu0
        %v1987 = vadd.f32 %v1826, %v1986
        %1988 = vmatprep.mubr.f32.mxu0 %v420
        %1989 = vmatmul.mubr.f32.gmra.mxu0 %v419
        %v1990 = vpop.f32.mrf.mxu0
        %v1991 = vadd.f32 %v1830, %v1990
        %v1992 = vpop.f32.mrf.mxu0
        %v1993 = vadd.f32 %v1832, %v1992
        %1994 = vmatprep.mubr.f32.mxu0 %v426
        %1995 = vmatmul.mubr.f32.gmra.mxu0 %v425
        %v1996 = vpop.f32.mrf.mxu0
        %v1997 = vadd.f32 %v1836, %v1996
        %v1998 = vpop.f32.mrf.mxu0
        %v1999 = vadd.f32 %v1838, %v1998
        %2000 = vmatprep.mubr.f32.mxu0 %v432
        %2001 = vmatmul.mubr.f32.gmra.mxu0 %v431
        %v2002 = vpop.f32.mrf.mxu0
        %v2003 = vadd.f32 %v1842, %v2002
        %v2004 = vpop.f32.mrf.mxu0
        %v2005 = vadd.f32 %v1844, %v2004
        %2006 = vmatprep.mubr.f32.mxu0 %v438
        %2007 = vmatmul.mubr.f32.gmra.mxu0 %v437
        %v2008 = vpop.f32.mrf.mxu0
        %v2009 = vadd.f32 %v1848, %v2008
        %v2010 = vpop.f32.mrf.mxu0
        %v2011 = vadd.f32 %v1850, %v2010
        %2012 = vmatprep.mubr.f32.mxu0 %v444
        %2013 = vmatmul.mubr.f32.gmra.mxu0 %v443
        %v2014 = vpop.f32.mrf.mxu0
        %v2015 = vadd.f32 %v1854, %v2014
        %v2016 = vpop.f32.mrf.mxu0
        %v2017 = vadd.f32 %v1856, %v2016
        %2018 = vmatprep.mubr.f32.mxu0 %v450
        %2019 = vmatmul.mubr.f32.gmra.mxu0 %v449
        %v2020 = vpop.f32.mrf.mxu0
        %v2021 = vadd.f32 %v1860, %v2020
        %v2022 = vpop.f32.mrf.mxu0
        %v2023 = vadd.f32 %v1862, %v2022
        %2024 = vmatprep.mubr.f32.mxu0 %v456
        %2025 = vmatmul.mubr.f32.gmra.mxu0 %v455
        %v2026 = vpop.f32.mrf.mxu0
        %v2027 = vadd.f32 %v1866, %v2026
        %v2028 = vpop.f32.mrf.mxu0
        %v2029 = vadd.f32 %v1868, %v2028
        %2030 = vmatprep.mubr.f32.mxu0 %v462
        %2031 = vmatmul.mubr.f32.gmra.mxu0 %v461
        %v2032 = vpop.f32.mrf.mxu0
        %v2033 = vadd.f32 %v1872, %v2032
        %v2034 = vpop.f32.mrf.mxu0
        %v2035 = vadd.f32 %v1874, %v2034
        %2036 = vmatprep.mubr.f32.mxu0 %v468
        %2037 = vmatmul.mubr.f32.gmra.mxu0 %v467
        %v2038 = vpop.f32.mrf.mxu0
        %v2039 = vadd.f32 %v1878, %v2038
        %v2040 = vpop.f32.mrf.mxu0
        %v2041 = vadd.f32 %v1880, %v2040
        %2042 = vmatprep.mubr.f32.mxu0 %v474
        %2043 = vmatmul.mubr.f32.gmra.mxu0 %v473
        %v2044 = vpop.f32.mrf.mxu0
        %v2045 = vadd.f32 %v1884, %v2044
        %v2046 = vpop.f32.mrf.mxu0
        %v2047 = vadd.f32 %v1886, %v2046
        %2048 = vmatprep.mubr.f32.mxu0 %v480
        %2049 = vmatmul.mubr.f32.gmra.mxu0 %v479
        %v2050 = vpop.f32.mrf.mxu0
        %v2051 = vadd.f32 %v1890, %v2050
        %v2052 = vpop.f32.mrf.mxu0
        %v2053 = vadd.f32 %v1892, %v2052
        %2054 = vdwg.mxu0
        %2055 = vmatprep.subr.mxu0 %v576
        %2056 = vmatpush1.msra.mxu0 %v575
        %2057 = vmatprep.subr.mxu0 %v570
        %2058 = vmatpush1.msra.mxu0 %v569
        %2059 = vmatprep.subr.mxu0 %v564
        %2060 = vmatpush1.msra.mxu0 %v563
        %2061 = vmatprep.subr.mxu0 %v558
        %2062 = vmatpush1.msra.mxu0 %v557
        %2063 = vmatprep.subr.mxu0 %v552
        %2064 = vmatpush1.msra.mxu0 %v551
        %2065 = vmatprep.subr.mxu0 %v546
        %2066 = vmatpush1.msra.mxu0 %v545
        %2067 = vmatprep.subr.mxu0 %v540
        %2068 = vmatpush1.msra.mxu0 %v539
        %2069 = vmatprep.subr.mxu0 %v534
        %2070 = vmatpush1.msra.mxu0 %v533
        %2071 = vmatprep.subr.mxu0 %v528
        %2072 = vmatpush1.msra.mxu0 %v527
        %2073 = vmatprep.subr.mxu0 %v522
        %2074 = vmatpush1.msra.mxu0 %v521
        %2075 = vmatprep.subr.mxu0 %v516
        %2076 = vmatpush1.msra.mxu0 %v515
        %2077 = vmatprep.subr.mxu0 %v510
        %2078 = vmatpush1.msra.mxu0 %v509
        %2079 = vmatprep.subr.mxu0 %v504
        %2080 = vmatpush1.msra.mxu0 %v503
        %2081 = vmatprep.subr.mxu0 %v498
        %2082 = vmatpush1.msra.mxu0 %v497
        %2083 = vmatprep.subr.mxu0 %v492
        %2084 = vmatpush1.msra.mxu0 %v491
        %2085 = vmatprep.subr.mxu0 %v486
        %2086 = vmatpush1.msra.mxu0 %v485
        %2087 = vmatprep.subr.mxu0 %v672
        %2088 = vmatpush2.msra.mxu0 %v671
        %2089 = vmatprep.subr.mxu0 %v666
        %2090 = vmatpush2.msra.mxu0 %v665
        %2091 = vmatprep.subr.mxu0 %v660
        %2092 = vmatpush2.msra.mxu0 %v659
        %2093 = vmatprep.subr.mxu0 %v654
        %2094 = vmatpush2.msra.mxu0 %v653
        %2095 = vmatprep.subr.mxu0 %v648
        %2096 = vmatpush2.msra.mxu0 %v647
        %2097 = vmatprep.subr.mxu0 %v642
        %2098 = vmatpush2.msra.mxu0 %v641
        %2099 = vmatprep.subr.mxu0 %v636
        %2100 = vmatpush2.msra.mxu0 %v635
        %2101 = vmatprep.subr.mxu0 %v630
        %2102 = vmatpush2.msra.mxu0 %v629
        %2103 = vmatprep.subr.mxu0 %v624
        %2104 = vmatpush2.msra.mxu0 %v623
        %2105 = vmatprep.subr.mxu0 %v618
        %2106 = vmatpush2.msra.mxu0 %v617
        %2107 = vmatprep.subr.mxu0 %v612
        %2108 = vmatpush2.msra.mxu0 %v611
        %2109 = vmatprep.subr.mxu0 %v606
        %2110 = vmatpush2.msra.mxu0 %v605
        %2111 = vmatprep.subr.mxu0 %v600
        %2112 = vmatpush2.msra.mxu0 %v599
        %2113 = vmatprep.subr.mxu0 %v594
        %2114 = vmatpush2.msra.mxu0 %v593
        %2115 = vmatprep.subr.mxu0 %v588
        %2116 = vmatpush2.msra.mxu0 %v587
        %2117 = vmatprep.subr.mxu0 %v582
        %2118 = vmatpush2.msra.mxu0 %v581
        %2119 = vmatprep.mubr.f32.mxu0 %v386
        %2120 = vmatmul.mubr.f32.gmra.mxu0 %v385
        %v2121 = vpop.f32.mrf.mxu0
        %v2122 = vadd.f32 %v1078, %v2121
        %v2123 = vpop.f32.mrf.mxu0
        %v2124 = vadd.f32 %v1082, %v2123
        %2125 = vmatprep.mubr.f32.mxu0 %v392
        %2126 = vmatmul.mubr.f32.gmra.mxu0 %v391
        %v2127 = vpop.f32.mrf.mxu0
        %v2128 = vadd.f32 %v1078, %v2127
        %v2129 = vpop.f32.mrf.mxu0
        %v2130 = vadd.f32 %v1082, %v2129
        %2131 = vmatprep.mubr.f32.mxu0 %v398
        %2132 = vmatmul.mubr.f32.gmra.mxu0 %v397
        %v2133 = vpop.f32.mrf.mxu0
        %v2134 = vadd.f32 %v1078, %v2133
        %v2135 = vpop.f32.mrf.mxu0
        %v2136 = vadd.f32 %v1082, %v2135
        %2137 = vmatprep.mubr.f32.mxu0 %v404
        %2138 = vmatmul.mubr.f32.gmra.mxu0 %v403
        %v2139 = vpop.f32.mrf.mxu0
        %v2140 = vadd.f32 %v1078, %v2139
        %v2141 = vpop.f32.mrf.mxu0
        %v2142 = vadd.f32 %v1082, %v2141
        %2143 = vmatprep.mubr.f32.mxu0 %v410
        %2144 = vmatmul.mubr.f32.gmra.mxu0 %v409
        %v2145 = vpop.f32.mrf.mxu0
        %v2146 = vadd.f32 %v1078, %v2145
        %v2147 = vpop.f32.mrf.mxu0
        %v2148 = vadd.f32 %v1082, %v2147
        %2149 = vmatprep.mubr.f32.mxu0 %v416
        %2150 = vmatmul.mubr.f32.gmra.mxu0 %v415
        %v2151 = vpop.f32.mrf.mxu0
        %v2152 = vadd.f32 %v1078, %v2151
        %v2153 = vpop.f32.mrf.mxu0
        %v2154 = vadd.f32 %v1082, %v2153
        %2155 = vmatprep.mubr.f32.mxu0 %v422
        %2156 = vmatmul.mubr.f32.gmra.mxu0 %v421
        %v2157 = vpop.f32.mrf.mxu0
        %v2158 = vadd.f32 %v1078, %v2157
        %v2159 = vpop.f32.mrf.mxu0
        %v2160 = vadd.f32 %v1082, %v2159
        %2161 = vmatprep.mubr.f32.mxu0 %v428
        %2162 = vmatmul.mubr.f32.gmra.mxu0 %v427
        %v2163 = vpop.f32.mrf.mxu0
        %v2164 = vadd.f32 %v1078, %v2163
        %v2165 = vpop.f32.mrf.mxu0
        %v2166 = vadd.f32 %v1082, %v2165
        %2167 = vmatprep.mubr.f32.mxu0 %v434
        %2168 = vmatmul.mubr.f32.gmra.mxu0 %v433
        %v2169 = vpop.f32.mrf.mxu0
        %v2170 = vadd.f32 %v1078, %v2169
        %v2171 = vpop.f32.mrf.mxu0
        %v2172 = vadd.f32 %v1082, %v2171
        %2173 = vmatprep.mubr.f32.mxu0 %v440
        %2174 = vmatmul.mubr.f32.gmra.mxu0 %v439
        %v2175 = vpop.f32.mrf.mxu0
        %v2176 = vadd.f32 %v1078, %v2175
        %v2177 = vpop.f32.mrf.mxu0
        %v2178 = vadd.f32 %v1082, %v2177
        %2179 = vmatprep.mubr.f32.mxu0 %v446
        %2180 = vmatmul.mubr.f32.gmra.mxu0 %v445
        %v2181 = vpop.f32.mrf.mxu0
        %v2182 = vadd.f32 %v1078, %v2181
        %v2183 = vpop.f32.mrf.mxu0
        %v2184 = vadd.f32 %v1082, %v2183
        %2185 = vmatprep.mubr.f32.mxu0 %v452
        %2186 = vmatmul.mubr.f32.gmra.mxu0 %v451
        %v2187 = vpop.f32.mrf.mxu0
        %v2188 = vadd.f32 %v1078, %v2187
        %v2189 = vpop.f32.mrf.mxu0
        %v2190 = vadd.f32 %v1082, %v2189
        %2191 = vmatprep.mubr.f32.mxu0 %v458
        %2192 = vmatmul.mubr.f32.gmra.mxu0 %v457
        %v2193 = vpop.f32.mrf.mxu0
        %v2194 = vadd.f32 %v1078, %v2193
        %v2195 = vpop.f32.mrf.mxu0
        %v2196 = vadd.f32 %v1082, %v2195
        %2197 = vmatprep.mubr.f32.mxu0 %v464
        %2198 = vmatmul.mubr.f32.gmra.mxu0 %v463
        %v2199 = vpop.f32.mrf.mxu0
        %v2200 = vadd.f32 %v1078, %v2199
        %v2201 = vpop.f32.mrf.mxu0
        %v2202 = vadd.f32 %v1082, %v2201
        %2203 = vmatprep.mubr.f32.mxu0 %v470
        %2204 = vmatmul.mubr.f32.gmra.mxu0 %v469
        %v2205 = vpop.f32.mrf.mxu0
        %v2206 = vadd.f32 %v1078, %v2205
        %v2207 = vpop.f32.mrf.mxu0
        %v2208 = vadd.f32 %v1082, %v2207
        %2209 = vmatprep.mubr.f32.mxu0 %v476
        %2210 = vmatmul.mubr.f32.gmra.mxu0 %v475
        %v2211 = vpop.f32.mrf.mxu0
        %v2212 = vadd.f32 %v1078, %v2211
        %v2213 = vpop.f32.mrf.mxu0
        %v2214 = vadd.f32 %v1082, %v2213
        %2215 = vdwg.mxu0
        %2216 = vmatprep.subr.mxu0 %v768
        %2217 = vmatpush1.msra.mxu0 %v767
        %2218 = vmatprep.subr.mxu0 %v762
        %2219 = vmatpush1.msra.mxu0 %v761
        %2220 = vmatprep.subr.mxu0 %v756
        %2221 = vmatpush1.msra.mxu0 %v755
        %2222 = vmatprep.subr.mxu0 %v750
        %2223 = vmatpush1.msra.mxu0 %v749
        %2224 = vmatprep.subr.mxu0 %v744
        %2225 = vmatpush1.msra.mxu0 %v743
        %2226 = vmatprep.subr.mxu0 %v738
        %2227 = vmatpush1.msra.mxu0 %v737
        %2228 = vmatprep.subr.mxu0 %v732
        %2229 = vmatpush1.msra.mxu0 %v731
        %2230 = vmatprep.subr.mxu0 %v726
        %2231 = vmatpush1.msra.mxu0 %v725
        %2232 = vmatprep.subr.mxu0 %v720
        %2233 = vmatpush1.msra.mxu0 %v719
        %2234 = vmatprep.subr.mxu0 %v714
        %2235 = vmatpush1.msra.mxu0 %v713
        %2236 = vmatprep.subr.mxu0 %v708
        %2237 = vmatpush1.msra.mxu0 %v707
        %2238 = vmatprep.subr.mxu0 %v702
        %2239 = vmatpush1.msra.mxu0 %v701
        %2240 = vmatprep.subr.mxu0 %v696
        %2241 = vmatpush1.msra.mxu0 %v695
        %2242 = vmatprep.subr.mxu0 %v690
        %2243 = vmatpush1.msra.mxu0 %v689
        %2244 = vmatprep.subr.mxu0 %v684
        %2245 = vmatpush1.msra.mxu0 %v683
        %2246 = vmatprep.subr.mxu0 %v678
        %2247 = vmatpush1.msra.mxu0 %v677
        %2248 = vmatprep.subr.mxu0 %v864
        %2249 = vmatpush2.msra.mxu0 %v863
        %2250 = vmatprep.subr.mxu0 %v858
        %2251 = vmatpush2.msra.mxu0 %v857
        %2252 = vmatprep.subr.mxu0 %v852
        %2253 = vmatpush2.msra.mxu0 %v851
        %2254 = vmatprep.subr.mxu0 %v846
        %2255 = vmatpush2.msra.mxu0 %v845
        %2256 = vmatprep.subr.mxu0 %v840
        %2257 = vmatpush2.msra.mxu0 %v839
        %2258 = vmatprep.subr.mxu0 %v834
        %2259 = vmatpush2.msra.mxu0 %v833
        %2260 = vmatprep.subr.mxu0 %v828
        %2261 = vmatpush2.msra.mxu0 %v827
        %2262 = vmatprep.subr.mxu0 %v822
        %2263 = vmatpush2.msra.mxu0 %v821
        %2264 = vmatprep.subr.mxu0 %v816
        %2265 = vmatpush2.msra.mxu0 %v815
        %2266 = vmatprep.subr.mxu0 %v810
        %2267 = vmatpush2.msra.mxu0 %v809
        %2268 = vmatprep.subr.mxu0 %v804
        %2269 = vmatpush2.msra.mxu0 %v803
        %2270 = vmatprep.subr.mxu0 %v798
        %2271 = vmatpush2.msra.mxu0 %v797
        %2272 = vmatprep.subr.mxu0 %v792
        %2273 = vmatpush2.msra.mxu0 %v791
        %2274 = vmatprep.subr.mxu0 %v786
        %2275 = vmatpush2.msra.mxu0 %v785
        %2276 = vmatprep.subr.mxu0 %v780
        %2277 = vmatpush2.msra.mxu0 %v779
        %2278 = vmatprep.subr.mxu0 %v774
        %2279 = vmatpush2.msra.mxu0 %v773
        %2280 = vmatprep.mubr.f32.mxu0 %v388
        %2281 = vmatmul.mubr.f32.gmra.mxu0 %v387
        %v2282 = vpop.f32.mrf.mxu0
        %v2283 = vadd.f32 %v2122, %v2282
        %v2284 = vpop.f32.mrf.mxu0
        %v2285 = vadd.f32 %v2124, %v2284
        %2286 = vmatprep.mubr.f32.mxu0 %v394
        %2287 = vmatmul.mubr.f32.gmra.mxu0 %v393
        %v2288 = vpop.f32.mrf.mxu0
        %v2289 = vadd.f32 %v2128, %v2288
        %v2290 = vpop.f32.mrf.mxu0
        %v2291 = vadd.f32 %v2130, %v2290
        %2292 = vmatprep.mubr.f32.mxu0 %v400
        %2293 = vmatmul.mubr.f32.gmra.mxu0 %v399
        %v2294 = vpop.f32.mrf.mxu0
        %v2295 = vadd.f32 %v2134, %v2294
        %v2296 = vpop.f32.mrf.mxu0
        %v2297 = vadd.f32 %v2136, %v2296
        %2298 = vmatprep.mubr.f32.mxu0 %v406
        %2299 = vmatmul.mubr.f32.gmra.mxu0 %v405
        %v2300 = vpop.f32.mrf.mxu0
        %v2301 = vadd.f32 %v2140, %v2300
        %v2302 = vpop.f32.mrf.mxu0
        %v2303 = vadd.f32 %v2142, %v2302
        %2304 = vmatprep.mubr.f32.mxu0 %v412
        %2305 = vmatmul.mubr.f32.gmra.mxu0 %v411
        %v2306 = vpop.f32.mrf.mxu0
        %v2307 = vadd.f32 %v2146, %v2306
        %v2308 = vpop.f32.mrf.mxu0
        %v2309 = vadd.f32 %v2148, %v2308
        %2310 = vmatprep.mubr.f32.mxu0 %v418
        %2311 = vmatmul.mubr.f32.gmra.mxu0 %v417
        %v2312 = vpop.f32.mrf.mxu0
        %v2313 = vadd.f32 %v2152, %v2312
        %v2314 = vpop.f32.mrf.mxu0
        %v2315 = vadd.f32 %v2154, %v2314
        %2316 = vmatprep.mubr.f32.mxu0 %v424
        %2317 = vmatmul.mubr.f32.gmra.mxu0 %v423
        %v2318 = vpop.f32.mrf.mxu0
        %v2319 = vadd.f32 %v2158, %v2318
        %v2320 = vpop.f32.mrf.mxu0
        %v2321 = vadd.f32 %v2160, %v2320
        %2322 = vmatprep.mubr.f32.mxu0 %v430
        %2323 = vmatmul.mubr.f32.gmra.mxu0 %v429
        %v2324 = vpop.f32.mrf.mxu0
        %v2325 = vadd.f32 %v2164, %v2324
        %v2326 = vpop.f32.mrf.mxu0
        %v2327 = vadd.f32 %v2166, %v2326
        %2328 = vmatprep.mubr.f32.mxu0 %v436
        %2329 = vmatmul.mubr.f32.gmra.mxu0 %v435
        %v2330 = vpop.f32.mrf.mxu0
        %v2331 = vadd.f32 %v2170, %v2330
        %v2332 = vpop.f32.mrf.mxu0
        %v2333 = vadd.f32 %v2172, %v2332
        %2334 = vmatprep.mubr.f32.mxu0 %v442
        %2335 = vmatmul.mubr.f32.gmra.mxu0 %v441
        %v2336 = vpop.f32.mrf.mxu0
        %v2337 = vadd.f32 %v2176, %v2336
        %v2338 = vpop.f32.mrf.mxu0
        %v2339 = vadd.f32 %v2178, %v2338
        %2340 = vmatprep.mubr.f32.mxu0 %v448
        %2341 = vmatmul.mubr.f32.gmra.mxu0 %v447
        %v2342 = vpop.f32.mrf.mxu0
        %v2343 = vadd.f32 %v2182, %v2342
        %v2344 = vpop.f32.mrf.mxu0
        %v2345 = vadd.f32 %v2184, %v2344
        %2346 = vmatprep.mubr.f32.mxu0 %v454
        %2347 = vmatmul.mubr.f32.gmra.mxu0 %v453
        %v2348 = vpop.f32.mrf.mxu0
        %v2349 = vadd.f32 %v2188, %v2348
        %v2350 = vpop.f32.mrf.mxu0
        %v2351 = vadd.f32 %v2190, %v2350
        %2352 = vmatprep.mubr.f32.mxu0 %v460
        %2353 = vmatmul.mubr.f32.gmra.mxu0 %v459
        %v2354 = vpop.f32.mrf.mxu0
        %v2355 = vadd.f32 %v2194, %v2354
        %v2356 = vpop.f32.mrf.mxu0
        %v2357 = vadd.f32 %v2196, %v2356
        %2358 = vmatprep.mubr.f32.mxu0 %v466
        %2359 = vmatmul.mubr.f32.gmra.mxu0 %v465
        %v2360 = vpop.f32.mrf.mxu0
        %v2361 = vadd.f32 %v2200, %v2360
        %v2362 = vpop.f32.mrf.mxu0
        %v2363 = vadd.f32 %v2202, %v2362
        %2364 = vmatprep.mubr.f32.mxu0 %v472
        %2365 = vmatmul.mubr.f32.gmra.mxu0 %v471
        %v2366 = vpop.f32.mrf.mxu0
        %v2367 = vadd.f32 %v2206, %v2366
        %v2368 = vpop.f32.mrf.mxu0
        %v2369 = vadd.f32 %v2208, %v2368
        %2370 = vmatprep.mubr.f32.mxu0 %v478
        %2371 = vmatmul.mubr.f32.gmra.mxu0 %v477
        %v2372 = vpop.f32.mrf.mxu0
        %v2373 = vadd.f32 %v2212, %v2372
        %v2374 = vpop.f32.mrf.mxu0
        %v2375 = vadd.f32 %v2214, %v2374
        %2376 = vdwg.mxu0
        %2377 = vmatprep.subr.mxu0 %v960
        %2378 = vmatpush1.msra.mxu0 %v959
        %2379 = vmatprep.subr.mxu0 %v954
        %2380 = vmatpush1.msra.mxu0 %v953
        %2381 = vmatprep.subr.mxu0 %v948
        %2382 = vmatpush1.msra.mxu0 %v947
        %2383 = vmatprep.subr.mxu0 %v942
        %2384 = vmatpush1.msra.mxu0 %v941
        %2385 = vmatprep.subr.mxu0 %v936
        %2386 = vmatpush1.msra.mxu0 %v935
        %2387 = vmatprep.subr.mxu0 %v930
        %2388 = vmatpush1.msra.mxu0 %v929
        %2389 = vmatprep.subr.mxu0 %v924
        %2390 = vmatpush1.msra.mxu0 %v923
        %2391 = vmatprep.subr.mxu0 %v918
        %2392 = vmatpush1.msra.mxu0 %v917
        %2393 = vmatprep.subr.mxu0 %v912
        %2394 = vmatpush1.msra.mxu0 %v911
        %2395 = vmatprep.subr.mxu0 %v906
        %2396 = vmatpush1.msra.mxu0 %v905
        %2397 = vmatprep.subr.mxu0 %v900
        %2398 = vmatpush1.msra.mxu0 %v899
        %2399 = vmatprep.subr.mxu0 %v894
        %2400 = vmatpush1.msra.mxu0 %v893
        %2401 = vmatprep.subr.mxu0 %v888
        %2402 = vmatpush1.msra.mxu0 %v887
        %2403 = vmatprep.subr.mxu0 %v882
        %2404 = vmatpush1.msra.mxu0 %v881
        %2405 = vmatprep.subr.mxu0 %v876
        %2406 = vmatpush1.msra.mxu0 %v875
        %2407 = vmatprep.subr.mxu0 %v870
        %2408 = vmatpush1.msra.mxu0 %v869
        %2409 = vmatprep.subr.mxu0 %v1056
        %2410 = vmatpush2.msra.mxu0 %v1055
        %2411 = vmatprep.subr.mxu0 %v1050
        %2412 = vmatpush2.msra.mxu0 %v1049
        %2413 = vmatprep.subr.mxu0 %v1044
        %2414 = vmatpush2.msra.mxu0 %v1043
        %2415 = vmatprep.subr.mxu0 %v1038
        %2416 = vmatpush2.msra.mxu0 %v1037
        %2417 = vmatprep.subr.mxu0 %v1032
        %2418 = vmatpush2.msra.mxu0 %v1031
        %2419 = vmatprep.subr.mxu0 %v1026
        %2420 = vmatpush2.msra.mxu0 %v1025
        %2421 = vmatprep.subr.mxu0 %v1020
        %2422 = vmatpush2.msra.mxu0 %v1019
        %2423 = vmatprep.subr.mxu0 %v1014
        %2424 = vmatpush2.msra.mxu0 %v1013
        %2425 = vmatprep.subr.mxu0 %v1008
        %2426 = vmatpush2.msra.mxu0 %v1007
        %2427 = vmatprep.subr.mxu0 %v1002
        %2428 = vmatpush2.msra.mxu0 %v1001
        %2429 = vmatprep.subr.mxu0 %v996
        %2430 = vmatpush2.msra.mxu0 %v995
        %2431 = vmatprep.subr.mxu0 %v990
        %2432 = vmatpush2.msra.mxu0 %v989
        %2433 = vmatprep.subr.mxu0 %v984
        %2434 = vmatpush2.msra.mxu0 %v983
        %2435 = vmatprep.subr.mxu0 %v978
        %2436 = vmatpush2.msra.mxu0 %v977
        %2437 = vmatprep.subr.mxu0 %v972
        %2438 = vmatpush2.msra.mxu0 %v971
        %2439 = vmatprep.subr.mxu0 %v966
        %2440 = vmatpush2.msra.mxu0 %v965
        %2441 = vmatprep.mubr.f32.mxu0 %v390
        %2442 = vmatmul.mubr.f32.gmra.mxu0 %v389
        %v2443 = vpop.f32.mrf.mxu0
        %v2444 = vadd.f32 %v2283, %v2443
        %v2445 = vpop.f32.mrf.mxu0
        %v2446 = vadd.f32 %v2285, %v2445
        %2447 = vmatprep.mubr.f32.mxu0 %v396
        %2448 = vmatmul.mubr.f32.gmra.mxu0 %v395
        %v2449 = vpop.f32.mrf.mxu0
        %v2450 = vadd.f32 %v2289, %v2449
        %v2451 = vpop.f32.mrf.mxu0
        %v2452 = vadd.f32 %v2291, %v2451
        %2453 = vmatprep.mubr.f32.mxu0 %v402
        %2454 = vmatmul.mubr.f32.gmra.mxu0 %v401
        %v2455 = vpop.f32.mrf.mxu0
        %v2456 = vadd.f32 %v2295, %v2455
        %v2457 = vpop.f32.mrf.mxu0
        %v2458 = vadd.f32 %v2297, %v2457
        %2459 = vmatprep.mubr.f32.mxu0 %v408
        %2460 = vmatmul.mubr.f32.gmra.mxu0 %v407
        %v2461 = vpop.f32.mrf.mxu0
        %v2462 = vadd.f32 %v2301, %v2461
        %v2463 = vpop.f32.mrf.mxu0
        %v2464 = vadd.f32 %v2303, %v2463
        %2465 = vmatprep.mubr.f32.mxu0 %v414
        %2466 = vmatmul.mubr.f32.gmra.mxu0 %v413
        %v2467 = vpop.f32.mrf.mxu0
        %v2468 = vadd.f32 %v2307, %v2467
        %v2469 = vpop.f32.mrf.mxu0
        %v2470 = vadd.f32 %v2309, %v2469
        %2471 = vmatprep.mubr.f32.mxu0 %v420
        %2472 = vmatmul.mubr.f32.gmra.mxu0 %v419
        %v2473 = vpop.f32.mrf.mxu0
        %v2474 = vadd.f32 %v2313, %v2473
        %v2475 = vpop.f32.mrf.mxu0
        %v2476 = vadd.f32 %v2315, %v2475
        %2477 = vmatprep.mubr.f32.mxu0 %v426
        %2478 = vmatmul.mubr.f32.gmra.mxu0 %v425
        %v2479 = vpop.f32.mrf.mxu0
        %v2480 = vadd.f32 %v2319, %v2479
        %v2481 = vpop.f32.mrf.mxu0
        %v2482 = vadd.f32 %v2321, %v2481
        %2483 = vmatprep.mubr.f32.mxu0 %v432
        %2484 = vmatmul.mubr.f32.gmra.mxu0 %v431
        %v2485 = vpop.f32.mrf.mxu0
        %v2486 = vadd.f32 %v2325, %v2485
        %v2487 = vpop.f32.mrf.mxu0
        %v2488 = vadd.f32 %v2327, %v2487
        %2489 = vmatprep.mubr.f32.mxu0 %v438
        %2490 = vmatmul.mubr.f32.gmra.mxu0 %v437
        %v2491 = vpop.f32.mrf.mxu0
        %v2492 = vadd.f32 %v2331, %v2491
        %v2493 = vpop.f32.mrf.mxu0
        %v2494 = vadd.f32 %v2333, %v2493
        %2495 = vmatprep.mubr.f32.mxu0 %v444
        %2496 = vmatmul.mubr.f32.gmra.mxu0 %v443
        %v2497 = vpop.f32.mrf.mxu0
        %v2498 = vadd.f32 %v2337, %v2497
        %v2499 = vpop.f32.mrf.mxu0
        %v2500 = vadd.f32 %v2339, %v2499
        %2501 = vmatprep.mubr.f32.mxu0 %v450
        %2502 = vmatmul.mubr.f32.gmra.mxu0 %v449
        %v2503 = vpop.f32.mrf.mxu0
        %v2504 = vadd.f32 %v2343, %v2503
        %v2505 = vpop.f32.mrf.mxu0
        %v2506 = vadd.f32 %v2345, %v2505
        %2507 = vmatprep.mubr.f32.mxu0 %v456
        %2508 = vmatmul.mubr.f32.gmra.mxu0 %v455
        %v2509 = vpop.f32.mrf.mxu0
        %v2510 = vadd.f32 %v2349, %v2509
        %v2511 = vpop.f32.mrf.mxu0
        %v2512 = vadd.f32 %v2351, %v2511
        %2513 = vmatprep.mubr.f32.mxu0 %v462
        %2514 = vmatmul.mubr.f32.gmra.mxu0 %v461
        %v2515 = vpop.f32.mrf.mxu0
        %v2516 = vadd.f32 %v2355, %v2515
        %v2517 = vpop.f32.mrf.mxu0
        %v2518 = vadd.f32 %v2357, %v2517
        %2519 = vmatprep.mubr.f32.mxu0 %v468
        %2520 = vmatmul.mubr.f32.gmra.mxu0 %v467
        %v2521 = vpop.f32.mrf.mxu0
        %v2522 = vadd.f32 %v2361, %v2521
        %v2523 = vpop.f32.mrf.mxu0
        %v2524 = vadd.f32 %v2363, %v2523
        %2525 = vmatprep.mubr.f32.mxu0 %v474
        %2526 = vmatmul.mubr.f32.gmra.mxu0 %v473
        %v2527 = vpop.f32.mrf.mxu0
        %v2528 = vadd.f32 %v2367, %v2527
        %v2529 = vpop.f32.mrf.mxu0
        %v2530 = vadd.f32 %v2369, %v2529
        %2531 = vmatprep.mubr.f32.mxu0 %v480
        %2532 = vmatmul.mubr.f32.gmra.mxu0 %v479
        %v2533 = vpop.f32.mrf.mxu0
        %v2534 = vadd.f32 %v2373, %v2533
        %v2535 = vpop.f32.mrf.mxu0
        %v2536 = vadd.f32 %v2375, %v2535
        %2537 = vdwg.mxu0
        %v2538 = vsub.f32 0.0, %v1478
        %v2539 = vsub.f32 0.0, %v1480
        %v2540 = vsub.f32 0.0, %v1961
        %v2541 = vsub.f32 0.0, %v1963
        %v2542 = vsub.f32 0.0, %v2444
        %v2543 = vsub.f32 0.0, %v2446
        %v2544 = vsub.f32 0.0, %v1484
        %v2545 = vsub.f32 0.0, %v1486
        %v2546 = vsub.f32 0.0, %v1967
        %v2547 = vsub.f32 0.0, %v1969
        %v2548 = vsub.f32 0.0, %v2450
        %v2549 = vsub.f32 0.0, %v2452
        %v2550 = vsub.f32 0.0, %v1490
        %v2551 = vsub.f32 0.0, %v1492
        %v2552 = vsub.f32 0.0, %v1973
        %v2553 = vsub.f32 0.0, %v1975
        %v2554 = vsub.f32 0.0, %v2456
        %v2555 = vsub.f32 0.0, %v2458
        %v2556 = vsub.f32 0.0, %v1496
        %v2557 = vsub.f32 0.0, %v1498
        %v2558 = vsub.f32 0.0, %v1979
        %v2559 = vsub.f32 0.0, %v1981
        %v2560 = vsub.f32 0.0, %v2462
        %v2561 = vsub.f32 0.0, %v2464
        %v2562 = vsub.f32 0.0, %v1502
        %v2563 = vsub.f32 0.0, %v1504
        %v2564 = vsub.f32 0.0, %v1985
        %v2565 = vsub.f32 0.0, %v1987
        %v2566 = vsub.f32 0.0, %v2468
        %v2567 = vsub.f32 0.0, %v2470
        %v2568 = vsub.f32 0.0, %v1508
        %v2569 = vsub.f32 0.0, %v1510
        %v2570 = vsub.f32 0.0, %v1991
        %v2571 = vsub.f32 0.0, %v1993
        %v2572 = vsub.f32 0.0, %v2474
        %v2573 = vsub.f32 0.0, %v2476
        %v2574 = vsub.f32 0.0, %v1514
        %v2575 = vsub.f32 0.0, %v1516
        %v2576 = vsub.f32 0.0, %v1997
        %v2577 = vsub.f32 0.0, %v1999
        %v2578 = vsub.f32 0.0, %v2480
        %v2579 = vsub.f32 0.0, %v2482
        %v2580 = vsub.f32 0.0, %v1520
        %v2581 = vsub.f32 0.0, %v1522
        %v2582 = vsub.f32 0.0, %v2003
        %v2583 = vsub.f32 0.0, %v2005
        %v2584 = vsub.f32 0.0, %v2486
        %v2585 = vsub.f32 0.0, %v2488
        %v2586 = vsub.f32 0.0, %v1526
        %v2587 = vsub.f32 0.0, %v1528
        %v2588 = vsub.f32 0.0, %v2009
        %v2589 = vsub.f32 0.0, %v2011
        %v2590 = vsub.f32 0.0, %v2492
        %v2591 = vsub.f32 0.0, %v2494
        %v2592 = vsub.f32 0.0, %v1532
        %v2593 = vsub.f32 0.0, %v1534
        %v2594 = vsub.f32 0.0, %v2015
        %v2595 = vsub.f32 0.0, %v2017
        %v2596 = vsub.f32 0.0, %v2498
        %v2597 = vsub.f32 0.0, %v2500
        %v2598 = vsub.f32 0.0, %v1538
        %v2599 = vsub.f32 0.0, %v1540
        %v2600 = vsub.f32 0.0, %v2021
        %v2601 = vsub.f32 0.0, %v2023
        %v2602 = vsub.f32 0.0, %v2504
        %v2603 = vsub.f32 0.0, %v2506
        %v2604 = vsub.f32 0.0, %v1544
        %v2605 = vsub.f32 0.0, %v1546
        %v2606 = vsub.f32 0.0, %v2027
        %v2607 = vsub.f32 0.0, %v2029
        %v2608 = vsub.f32 0.0, %v2510
        %v2609 = vsub.f32 0.0, %v2512
        %v2610 = vsub.f32 0.0, %v1550
        %v2611 = vsub.f32 0.0, %v1552
        %v2612 = vsub.f32 0.0, %v2033
        %v2613 = vsub.f32 0.0, %v2035
        %v2614 = vsub.f32 0.0, %v2516
        %v2615 = vsub.f32 0.0, %v2518
        %v2616 = vsub.f32 0.0, %v1556
        %v2617 = vsub.f32 0.0, %v1558
        %v2618 = vsub.f32 0.0, %v2039
        %v2619 = vsub.f32 0.0, %v2041
        %v2620 = vsub.f32 0.0, %v2522
        %v2621 = vsub.f32 0.0, %v2524
        %v2622 = vsub.f32 0.0, %v1562
        %v2623 = vsub.f32 0.0, %v1564
        %v2624 = vsub.f32 0.0, %v2045
        %v2625 = vsub.f32 0.0, %v2047
        %v2626 = vsub.f32 0.0, %v2528
        %v2627 = vsub.f32 0.0, %v2530
        %v2628 = vsub.f32 0.0, %v1568
        %v2629 = vsub.f32 0.0, %v1570
        %v2630 = vsub.f32 0.0, %v2051
        %v2631 = vsub.f32 0.0, %v2053
        %v2632 = vsub.f32 0.0, %v2534
        %v2633 = vsub.f32 0.0, %v2536
        %v2634 = vmul.f32 %v2538, 1.442695
        %v2635 = vpow.pop %v2634
        %v2636 = vmul.f32 %v2539, 1.442695
        %v2637 = vpow.pop %v2636
        %v2638 = vmul.f32 %v2540, 1.442695
        %v2639 = vpow.pop %v2638
        %v2640 = vmul.f32 %v2541, 1.442695
        %v2641 = vpow.pop %v2640
        %v2642 = vmul.f32 %v2542, 1.442695
        %v2643 = vpow.pop %v2642
        %v2644 = vmul.f32 %v2543, 1.442695
        %v2645 = vpow.pop %v2644
        %v2646 = vmul.f32 %v2544, 1.442695
        %v2647 = vpow.pop %v2646
        %v2648 = vmul.f32 %v2545, 1.442695
        %v2649 = vpow.pop %v2648
        %v2650 = vmul.f32 %v2546, 1.442695
        %v2651 = vpow.pop %v2650
        %v2652 = vmul.f32 %v2547, 1.442695
        %v2653 = vpow.pop %v2652
        %v2654 = vmul.f32 %v2548, 1.442695
        %v2655 = vpow.pop %v2654
        %v2656 = vmul.f32 %v2549, 1.442695
        %v2657 = vpow.pop %v2656
        %v2658 = vmul.f32 %v2550, 1.442695
        %v2659 = vpow.pop %v2658
        %v2660 = vmul.f32 %v2551, 1.442695
        %v2661 = vpow.pop %v2660
        %v2662 = vmul.f32 %v2552, 1.442695
        %v2663 = vpow.pop %v2662
        %v2664 = vmul.f32 %v2553, 1.442695
        %v2665 = vpow.pop %v2664
        %v2666 = vmul.f32 %v2554, 1.442695
        %v2667 = vpow.pop %v2666
        %v2668 = vmul.f32 %v2555, 1.442695
        %v2669 = vpow.pop %v2668
        %v2670 = vmul.f32 %v2556, 1.442695
        %v2671 = vpow.pop %v2670
        %v2672 = vmul.f32 %v2557, 1.442695
        %v2673 = vpow.pop %v2672
        %v2674 = vmul.f32 %v2558, 1.442695
        %v2675 = vpow.pop %v2674
        %v2676 = vmul.f32 %v2559, 1.442695
        %v2677 = vpow.pop %v2676
        %v2678 = vmul.f32 %v2560, 1.442695
        %v2679 = vpow.pop %v2678
        %v2680 = vmul.f32 %v2561, 1.442695
        %v2681 = vpow.pop %v2680
        %v2682 = vmul.f32 %v2562, 1.442695
        %v2683 = vpow.pop %v2682
        %v2684 = vmul.f32 %v2563, 1.442695
        %v2685 = vpow.pop %v2684
        %v2686 = vmul.f32 %v2564, 1.442695
        %v2687 = vpow.pop %v2686
        %v2688 = vmul.f32 %v2565, 1.442695
        %v2689 = vpow.pop %v2688
        %v2690 = vmul.f32 %v2566, 1.442695
        %v2691 = vpow.pop %v2690
        %v2692 = vmul.f32 %v2567, 1.442695
        %v2693 = vpow.pop %v2692
        %v2694 = vmul.f32 %v2568, 1.442695
        %v2695 = vpow.pop %v2694
        %v2696 = vmul.f32 %v2569, 1.442695
        %v2697 = vpow.pop %v2696
        %v2698 = vmul.f32 %v2570, 1.442695
        %v2699 = vpow.pop %v2698
        %v2700 = vmul.f32 %v2571, 1.442695
        %v2701 = vpow.pop %v2700
        %v2702 = vmul.f32 %v2572, 1.442695
        %v2703 = vpow.pop %v2702
        %v2704 = vmul.f32 %v2573, 1.442695
        %v2705 = vpow.pop %v2704
        %v2706 = vmul.f32 %v2574, 1.442695
        %v2707 = vpow.pop %v2706
        %v2708 = vmul.f32 %v2575, 1.442695
        %v2709 = vpow.pop %v2708
        %v2710 = vmul.f32 %v2576, 1.442695
        %v2711 = vpow.pop %v2710
        %v2712 = vmul.f32 %v2577, 1.442695
        %v2713 = vpow.pop %v2712
        %v2714 = vmul.f32 %v2578, 1.442695
        %v2715 = vpow.pop %v2714
        %v2716 = vmul.f32 %v2579, 1.442695
        %v2717 = vpow.pop %v2716
        %v2718 = vmul.f32 %v2580, 1.442695
        %v2719 = vpow.pop %v2718
        %v2720 = vmul.f32 %v2581, 1.442695
        %v2721 = vpow.pop %v2720
        %v2722 = vmul.f32 %v2582, 1.442695
        %v2723 = vpow.pop %v2722
        %v2724 = vmul.f32 %v2583, 1.442695
        %v2725 = vpow.pop %v2724
        %v2726 = vmul.f32 %v2584, 1.442695
        %v2727 = vpow.pop %v2726
        %v2728 = vmul.f32 %v2585, 1.442695
        %v2729 = vpow.pop %v2728
        %v2730 = vmul.f32 %v2586, 1.442695
        %v2731 = vpow.pop %v2730
        %v2732 = vmul.f32 %v2587, 1.442695
        %v2733 = vpow.pop %v2732
        %v2734 = vmul.f32 %v2588, 1.442695
        %v2735 = vpow.pop %v2734
        %v2736 = vmul.f32 %v2589, 1.442695
        %v2737 = vpow.pop %v2736
        %v2738 = vmul.f32 %v2590, 1.442695
        %v2739 = vpow.pop %v2738
        %v2740 = vmul.f32 %v2591, 1.442695
        %v2741 = vpow.pop %v2740
        %v2742 = vmul.f32 %v2592, 1.442695
        %v2743 = vpow.pop %v2742
        %v2744 = vmul.f32 %v2593, 1.442695
        %v2745 = vpow.pop %v2744
        %v2746 = vmul.f32 %v2594, 1.442695
        %v2747 = vpow.pop %v2746
        %v2748 = vmul.f32 %v2595, 1.442695
        %v2749 = vpow.pop %v2748
        %v2750 = vmul.f32 %v2596, 1.442695
        %v2751 = vpow.pop %v2750
        %v2752 = vmul.f32 %v2597, 1.442695
        %v2753 = vpow.pop %v2752
        %v2754 = vmul.f32 %v2598, 1.442695
        %v2755 = vpow.pop %v2754
        %v2756 = vmul.f32 %v2599, 1.442695
        %v2757 = vpow.pop %v2756
        %v2758 = vmul.f32 %v2600, 1.442695
        %v2759 = vpow.pop %v2758
        %v2760 = vmul.f32 %v2601, 1.442695
        %v2761 = vpow.pop %v2760
        %v2762 = vmul.f32 %v2602, 1.442695
        %v2763 = vpow.pop %v2762
        %v2764 = vmul.f32 %v2603, 1.442695
        %v2765 = vpow.pop %v2764
        %v2766 = vmul.f32 %v2604, 1.442695
        %v2767 = vpow.pop %v2766
        %v2768 = vmul.f32 %v2605, 1.442695
        %v2769 = vpow.pop %v2768
        %v2770 = vmul.f32 %v2606, 1.442695
        %v2771 = vpow.pop %v2770
        %v2772 = vmul.f32 %v2607, 1.442695
        %v2773 = vpow.pop %v2772
        %v2774 = vmul.f32 %v2608, 1.442695
        %v2775 = vpow.pop %v2774
        %v2776 = vmul.f32 %v2609, 1.442695
        %v2777 = vpow.pop %v2776
        %v2778 = vmul.f32 %v2610, 1.442695
        %v2779 = vpow.pop %v2778
        %v2780 = vmul.f32 %v2611, 1.442695
        %v2781 = vpow.pop %v2780
        %v2782 = vmul.f32 %v2612, 1.442695
        %v2783 = vpow.pop %v2782
        %v2784 = vmul.f32 %v2613, 1.442695
        %v2785 = vpow.pop %v2784
        %v2786 = vmul.f32 %v2614, 1.442695
        %v2787 = vpow.pop %v2786
        %v2788 = vmul.f32 %v2615, 1.442695
        %v2789 = vpow.pop %v2788
        %v2790 = vmul.f32 %v2616, 1.442695
        %v2791 = vpow.pop %v2790
        %v2792 = vmul.f32 %v2617, 1.442695
        %v2793 = vpow.pop %v2792
        %v2794 = vmul.f32 %v2618, 1.442695
        %v2795 = vpow.pop %v2794
        %v2796 = vmul.f32 %v2619, 1.442695
        %v2797 = vpow.pop %v2796
        %v2798 = vmul.f32 %v2620, 1.442695
        %v2799 = vpow.pop %v2798
        %v2800 = vmul.f32 %v2621, 1.442695
        %v2801 = vpow.pop %v2800
        %v2802 = vmul.f32 %v2622, 1.442695
        %v2803 = vpow.pop %v2802
        %v2804 = vmul.f32 %v2623, 1.442695
        %v2805 = vpow.pop %v2804
        %v2806 = vmul.f32 %v2624, 1.442695
        %v2807 = vpow.pop %v2806
        %v2808 = vmul.f32 %v2625, 1.442695
        %v2809 = vpow.pop %v2808
        %v2810 = vmul.f32 %v2626, 1.442695
        %v2811 = vpow.pop %v2810
        %v2812 = vmul.f32 %v2627, 1.442695
        %v2813 = vpow.pop %v2812
        %v2814 = vmul.f32 %v2628, 1.442695
        %v2815 = vpow.pop %v2814
        %v2816 = vmul.f32 %v2629, 1.442695
        %v2817 = vpow.pop %v2816
        %v2818 = vmul.f32 %v2630, 1.442695
        %v2819 = vpow.pop %v2818
        %v2820 = vmul.f32 %v2631, 1.442695
        %v2821 = vpow.pop %v2820
        %v2822 = vmul.f32 %v2632, 1.442695
        %v2823 = vpow.pop %v2822
        %v2824 = vmul.f32 %v2633, 1.442695
        %v2825 = vpow.pop %v2824
        %v2826 = vadd.f32 %v2635, 1.0
        %v2827 = vadd.f32 %v2637, 1.0
        %v2828 = vadd.f32 %v2639, 1.0
        %v2829 = vadd.f32 %v2641, 1.0
        %v2830 = vadd.f32 %v2643, 1.0
        %v2831 = vadd.f32 %v2645, 1.0
        %v2832 = vadd.f32 %v2647, 1.0
        %v2833 = vadd.f32 %v2649, 1.0
        %v2834 = vadd.f32 %v2651, 1.0
        %v2835 = vadd.f32 %v2653, 1.0
        %v2836 = vadd.f32 %v2655, 1.0
        %v2837 = vadd.f32 %v2657, 1.0
        %v2838 = vadd.f32 %v2659, 1.0
        %v2839 = vadd.f32 %v2661, 1.0
        %v2840 = vadd.f32 %v2663, 1.0
        %v2841 = vadd.f32 %v2665, 1.0
        %v2842 = vadd.f32 %v2667, 1.0
        %v2843 = vadd.f32 %v2669, 1.0
        %v2844 = vadd.f32 %v2671, 1.0
        %v2845 = vadd.f32 %v2673, 1.0
        %v2846 = vadd.f32 %v2675, 1.0
        %v2847 = vadd.f32 %v2677, 1.0
        %v2848 = vadd.f32 %v2679, 1.0
        %v2849 = vadd.f32 %v2681, 1.0
        %v2850 = vadd.f32 %v2683, 1.0
        %v2851 = vadd.f32 %v2685, 1.0
        %v2852 = vadd.f32 %v2687, 1.0
        %v2853 = vadd.f32 %v2689, 1.0
        %v2854 = vadd.f32 %v2691, 1.0
        %v2855 = vadd.f32 %v2693, 1.0
        %v2856 = vadd.f32 %v2695, 1.0
        %v2857 = vadd.f32 %v2697, 1.0
        %v2858 = vadd.f32 %v2699, 1.0
        %v2859 = vadd.f32 %v2701, 1.0
        %v2860 = vadd.f32 %v2703, 1.0
        %v2861 = vadd.f32 %v2705, 1.0
        %v2862 = vadd.f32 %v2707, 1.0
        %v2863 = vadd.f32 %v2709, 1.0
        %v2864 = vadd.f32 %v2711, 1.0
        %v2865 = vadd.f32 %v2713, 1.0
        %v2866 = vadd.f32 %v2715, 1.0
        %v2867 = vadd.f32 %v2717, 1.0
        %v2868 = vadd.f32 %v2719, 1.0
        %v2869 = vadd.f32 %v2721, 1.0
        %v2870 = vadd.f32 %v2723, 1.0
        %v2871 = vadd.f32 %v2725, 1.0
        %v2872 = vadd.f32 %v2727, 1.0
        %v2873 = vadd.f32 %v2729, 1.0
        %v2874 = vadd.f32 %v2731, 1.0
        %v2875 = vadd.f32 %v2733, 1.0
        %v2876 = vadd.f32 %v2735, 1.0
        %v2877 = vadd.f32 %v2737, 1.0
        %v2878 = vadd.f32 %v2739, 1.0
        %v2879 = vadd.f32 %v2741, 1.0
        %v2880 = vadd.f32 %v2743, 1.0
        %v2881 = vadd.f32 %v2745, 1.0
        %v2882 = vadd.f32 %v2747, 1.0
        %v2883 = vadd.f32 %v2749, 1.0
        %v2884 = vadd.f32 %v2751, 1.0
        %v2885 = vadd.f32 %v2753, 1.0
        %v2886 = vadd.f32 %v2755, 1.0
        %v2887 = vadd.f32 %v2757, 1.0
        %v2888 = vadd.f32 %v2759, 1.0
        %v2889 = vadd.f32 %v2761, 1.0
        %v2890 = vadd.f32 %v2763, 1.0
        %v2891 = vadd.f32 %v2765, 1.0
        %v2892 = vadd.f32 %v2767, 1.0
        %v2893 = vadd.f32 %v2769, 1.0
        %v2894 = vadd.f32 %v2771, 1.0
        %v2895 = vadd.f32 %v2773, 1.0
        %v2896 = vadd.f32 %v2775, 1.0
        %v2897 = vadd.f32 %v2777, 1.0
        %v2898 = vadd.f32 %v2779, 1.0
        %v2899 = vadd.f32 %v2781, 1.0
        %v2900 = vadd.f32 %v2783, 1.0
        %v2901 = vadd.f32 %v2785, 1.0
        %v2902 = vadd.f32 %v2787, 1.0
        %v2903 = vadd.f32 %v2789, 1.0
        %v2904 = vadd.f32 %v2791, 1.0
        %v2905 = vadd.f32 %v2793, 1.0
        %v2906 = vadd.f32 %v2795, 1.0
        %v2907 = vadd.f32 %v2797, 1.0
        %v2908 = vadd.f32 %v2799, 1.0
        %v2909 = vadd.f32 %v2801, 1.0
        %v2910 = vadd.f32 %v2803, 1.0
        %v2911 = vadd.f32 %v2805, 1.0
        %v2912 = vadd.f32 %v2807, 1.0
        %v2913 = vadd.f32 %v2809, 1.0
        %v2914 = vadd.f32 %v2811, 1.0
        %v2915 = vadd.f32 %v2813, 1.0
        %v2916 = vadd.f32 %v2815, 1.0
        %v2917 = vadd.f32 %v2817, 1.0
        %v2918 = vadd.f32 %v2819, 1.0
        %v2919 = vadd.f32 %v2821, 1.0
        %v2920 = vadd.f32 %v2823, 1.0
        %v2921 = vadd.f32 %v2825, 1.0
        %v2922 = vrcp.pop %v2826
        %v2923 = vrcp.pop %v2827
        %v2924 = vrcp.pop %v2828
        %v2925 = vrcp.pop %v2829
        %v2926 = vrcp.pop %v2830
        %v2927 = vrcp.pop %v2831
        %v2928 = vrcp.pop %v2832
        %v2929 = vrcp.pop %v2833
        %v2930 = vrcp.pop %v2834
        %v2931 = vrcp.pop %v2835
        %v2932 = vrcp.pop %v2836
        %v2933 = vrcp.pop %v2837
        %v2934 = vrcp.pop %v2838
        %v2935 = vrcp.pop %v2839
        %v2936 = vrcp.pop %v2840
        %v2937 = vrcp.pop %v2841
        %v2938 = vrcp.pop %v2842
        %v2939 = vrcp.pop %v2843
        %v2940 = vrcp.pop %v2844
        %v2941 = vrcp.pop %v2845
        %v2942 = vrcp.pop %v2846
        %v2943 = vrcp.pop %v2847
        %v2944 = vrcp.pop %v2848
        %v2945 = vrcp.pop %v2849
        %v2946 = vrcp.pop %v2850
        %v2947 = vrcp.pop %v2851
        %v2948 = vrcp.pop %v2852
        %v2949 = vrcp.pop %v2853
        %v2950 = vrcp.pop %v2854
        %v2951 = vrcp.pop %v2855
        %v2952 = vrcp.pop %v2856
        %v2953 = vrcp.pop %v2857
        %v2954 = vrcp.pop %v2858
        %v2955 = vrcp.pop %v2859
        %v2956 = vrcp.pop %v2860
        %v2957 = vrcp.pop %v2861
        %v2958 = vrcp.pop %v2862
        %v2959 = vrcp.pop %v2863
        %v2960 = vrcp.pop %v2864
        %v2961 = vrcp.pop %v2865
        %v2962 = vrcp.pop %v2866
        %v2963 = vrcp.pop %v2867
        %v2964 = vrcp.pop %v2868
        %v2965 = vrcp.pop %v2869
        %v2966 = vrcp.pop %v2870
        %v2967 = vrcp.pop %v2871
        %v2968 = vrcp.pop %v2872
        %v2969 = vrcp.pop %v2873
        %v2970 = vrcp.pop %v2874
        %v2971 = vrcp.pop %v2875
        %v2972 = vrcp.pop %v2876
        %v2973 = vrcp.pop %v2877
        %v2974 = vrcp.pop %v2878
        %v2975 = vrcp.pop %v2879
        %v2976 = vrcp.pop %v2880
        %v2977 = vrcp.pop %v2881
        %v2978 = vrcp.pop %v2882
        %v2979 = vrcp.pop %v2883
        %v2980 = vrcp.pop %v2884
        %v2981 = vrcp.pop %v2885
        %v2982 = vrcp.pop %v2886
        %v2983 = vrcp.pop %v2887
        %v2984 = vrcp.pop %v2888
        %v2985 = vrcp.pop %v2889
        %v2986 = vrcp.pop %v2890
        %v2987 = vrcp.pop %v2891
        %v2988 = vrcp.pop %v2892
        %v2989 = vrcp.pop %v2893
        %v2990 = vrcp.pop %v2894
        %v2991 = vrcp.pop %v2895
        %v2992 = vrcp.pop %v2896
        %v2993 = vrcp.pop %v2897
        %v2994 = vrcp.pop %v2898
        %v2995 = vrcp.pop %v2899
        %v2996 = vrcp.pop %v2900
        %v2997 = vrcp.pop %v2901
        %v2998 = vrcp.pop %v2902
        %v2999 = vrcp.pop %v2903
        %v3000 = vrcp.pop %v2904
        %v3001 = vrcp.pop %v2905
        %v3002 = vrcp.pop %v2906
        %v3003 = vrcp.pop %v2907
        %v3004 = vrcp.pop %v2908
        %v3005 = vrcp.pop %v2909
        %v3006 = vrcp.pop %v2910
        %v3007 = vrcp.pop %v2911
        %v3008 = vrcp.pop %v2912
        %v3009 = vrcp.pop %v2913
        %v3010 = vrcp.pop %v2914
        %v3011 = vrcp.pop %v2915
        %v3012 = vrcp.pop %v2916
        %v3013 = vrcp.pop %v2917
        %v3014 = vrcp.pop %v2918
        %v3015 = vrcp.pop %v2919
        %v3016 = vrcp.pop %v2920
        %v3017 = vrcp.pop %v2921
        %v3018 = vld [vmem:[#allocation7] sm:$0xff]
        %v3019 = vld [vmem:[#allocation7 + $0x8] sm:$0xff]
        %v3020 = vld [vmem:[#allocation7 + $0x10] sm:$0xff]
        %v3021 = vld [vmem:[#allocation7 + $0x18] sm:$0xff]
        %v3022 = vld [vmem:[#allocation7 + $0x20] sm:$0xff]
        %v3023 = vld [vmem:[#allocation7 + $0x28] sm:$0xff]
        %v3024 = vld [vmem:[#allocation7 + $0x30] sm:$0xff]
        %v3025 = vld [vmem:[#allocation7 + $0x38] sm:$0xff]
        %v3026 = vld [vmem:[#allocation7 + $0x40] sm:$0xff]
        %v3027 = vld [vmem:[#allocation7 + $0x48] sm:$0xff]
        %v3028 = vld [vmem:[#allocation7 + $0x50] sm:$0xff]
        %v3029 = vld [vmem:[#allocation7 + $0x58] sm:$0xff]
        %v3030 = vld [vmem:[#allocation7 + $0x60] sm:$0xff]
        %v3031 = vld [vmem:[#allocation7 + $0x68] sm:$0xff]
        %v3032 = vld [vmem:[#allocation7 + $0x70] sm:$0xff]
        %v3033 = vld [vmem:[#allocation7 + $0x78] sm:$0xff]
        %v3034 = vld [vmem:[#allocation7 + $0x80] sm:$0xff]
        %v3035 = vld [vmem:[#allocation7 + $0x88] sm:$0xff]
        %v3036 = vld [vmem:[#allocation7 + $0x90] sm:$0xff]
        %v3037 = vld [vmem:[#allocation7 + $0x98] sm:$0xff]
        %v3038 = vld [vmem:[#allocation7 + $0xa0] sm:$0xff]
        %v3039 = vld [vmem:[#allocation7 + $0xa8] sm:$0xff]
        %v3040 = vld [vmem:[#allocation7 + $0xb0] sm:$0xff]
        %v3041 = vld [vmem:[#allocation7 + $0xb8] sm:$0xff]
        %v3042 = vld [vmem:[#allocation7 + $0xc0] sm:$0xff]
        %v3043 = vld [vmem:[#allocation7 + $0xc8] sm:$0xff]
        %v3044 = vld [vmem:[#allocation7 + $0xd0] sm:$0xff]
        %v3045 = vld [vmem:[#allocation7 + $0xd8] sm:$0xff]
        %v3046 = vld [vmem:[#allocation7 + $0xe0] sm:$0xff]
        %v3047 = vld [vmem:[#allocation7 + $0xe8] sm:$0xff]
        %v3048 = vld [vmem:[#allocation7 + $0xf0] sm:$0xff]
        %v3049 = vld [vmem:[#allocation7 + $0xf8] sm:$0xff]
        %v3050 = vld [vmem:[#allocation7 + $0x100] sm:$0xff]
        %v3051 = vld [vmem:[#allocation7 + $0x108] sm:$0xff]
        %v3052 = vld [vmem:[#allocation7 + $0x110] sm:$0xff]
        %v3053 = vld [vmem:[#allocation7 + $0x118] sm:$0xff]
        %v3054 = vld [vmem:[#allocation7 + $0x120] sm:$0xff]
        %v3055 = vld [vmem:[#allocation7 + $0x128] sm:$0xff]
        %v3056 = vld [vmem:[#allocation7 + $0x130] sm:$0xff]
        %v3057 = vld [vmem:[#allocation7 + $0x138] sm:$0xff]
        %v3058 = vld [vmem:[#allocation7 + $0x140] sm:$0xff]
        %v3059 = vld [vmem:[#allocation7 + $0x148] sm:$0xff]
        %v3060 = vld [vmem:[#allocation7 + $0x150] sm:$0xff]
        %v3061 = vld [vmem:[#allocation7 + $0x158] sm:$0xff]
        %v3062 = vld [vmem:[#allocation7 + $0x160] sm:$0xff]
        %v3063 = vld [vmem:[#allocation7 + $0x168] sm:$0xff]
        %v3064 = vld [vmem:[#allocation7 + $0x170] sm:$0xff]
        %v3065 = vld [vmem:[#allocation7 + $0x178] sm:$0xff]
        %v3066 = vld [vmem:[#allocation7 + $0x180] sm:$0xff]
        %v3067 = vld [vmem:[#allocation7 + $0x188] sm:$0xff]
        %v3068 = vld [vmem:[#allocation7 + $0x190] sm:$0xff]
        %v3069 = vld [vmem:[#allocation7 + $0x198] sm:$0xff]
        %v3070 = vld [vmem:[#allocation7 + $0x1a0] sm:$0xff]
        %v3071 = vld [vmem:[#allocation7 + $0x1a8] sm:$0xff]
        %v3072 = vld [vmem:[#allocation7 + $0x1b0] sm:$0xff]
        %v3073 = vld [vmem:[#allocation7 + $0x1b8] sm:$0xff]
        %v3074 = vld [vmem:[#allocation7 + $0x1c0] sm:$0xff]
        %v3075 = vld [vmem:[#allocation7 + $0x1c8] sm:$0xff]
        %v3076 = vld [vmem:[#allocation7 + $0x1d0] sm:$0xff]
        %v3077 = vld [vmem:[#allocation7 + $0x1d8] sm:$0xff]
        %v3078 = vld [vmem:[#allocation7 + $0x1e0] sm:$0xff]
        %v3079 = vld [vmem:[#allocation7 + $0x1e8] sm:$0xff]
        %v3080 = vld [vmem:[#allocation7 + $0x1f0] sm:$0xff]
        %v3081 = vld [vmem:[#allocation7 + $0x1f8] sm:$0xff]
        %v3082 = vld [vmem:[#allocation7 + $0x200] sm:$0xff]
        %v3083 = vld [vmem:[#allocation7 + $0x208] sm:$0xff]
        %v3084 = vld [vmem:[#allocation7 + $0x210] sm:$0xff]
        %v3085 = vld [vmem:[#allocation7 + $0x218] sm:$0xff]
        %v3086 = vld [vmem:[#allocation7 + $0x220] sm:$0xff]
        %v3087 = vld [vmem:[#allocation7 + $0x228] sm:$0xff]
        %v3088 = vld [vmem:[#allocation7 + $0x230] sm:$0xff]
        %v3089 = vld [vmem:[#allocation7 + $0x238] sm:$0xff]
        %v3090 = vld [vmem:[#allocation7 + $0x240] sm:$0xff]
        %v3091 = vld [vmem:[#allocation7 + $0x248] sm:$0xff]
        %v3092 = vld [vmem:[#allocation7 + $0x250] sm:$0xff]
        %v3093 = vld [vmem:[#allocation7 + $0x258] sm:$0xff]
        %v3094 = vld [vmem:[#allocation7 + $0x260] sm:$0xff]
        %v3095 = vld [vmem:[#allocation7 + $0x268] sm:$0xff]
        %v3096 = vld [vmem:[#allocation7 + $0x270] sm:$0xff]
        %v3097 = vld [vmem:[#allocation7 + $0x278] sm:$0xff]
        %v3098 = vld [vmem:[#allocation7 + $0x280] sm:$0xff]
        %v3099 = vld [vmem:[#allocation7 + $0x288] sm:$0xff]
        %v3100 = vld [vmem:[#allocation7 + $0x290] sm:$0xff]
        %v3101 = vld [vmem:[#allocation7 + $0x298] sm:$0xff]
        %v3102 = vld [vmem:[#allocation7 + $0x2a0] sm:$0xff]
        %v3103 = vld [vmem:[#allocation7 + $0x2a8] sm:$0xff]
        %v3104 = vld [vmem:[#allocation7 + $0x2b0] sm:$0xff]
        %v3105 = vld [vmem:[#allocation7 + $0x2b8] sm:$0xff]
        %v3106 = vld [vmem:[#allocation7 + $0x2c0] sm:$0xff]
        %v3107 = vld [vmem:[#allocation7 + $0x2c8] sm:$0xff]
        %v3108 = vld [vmem:[#allocation7 + $0x2d0] sm:$0xff]
        %v3109 = vld [vmem:[#allocation7 + $0x2d8] sm:$0xff]
        %v3110 = vld [vmem:[#allocation7 + $0x2e0] sm:$0xff]
        %v3111 = vld [vmem:[#allocation7 + $0x2e8] sm:$0xff]
        %v3112 = vld [vmem:[#allocation7 + $0x2f0] sm:$0xff]
        %v3113 = vld [vmem:[#allocation7 + $0x2f8] sm:$0xff]
        %v3114 = vld [vmem:[#allocation7 + $0x300] sm:$0xff]
        %v3115 = vld [vmem:[#allocation7 + $0x308] sm:$0xff]
        %v3116 = vld [vmem:[#allocation7 + $0x310] sm:$0xff]
        %v3117 = vld [vmem:[#allocation7 + $0x318] sm:$0xff]
        %v3118 = vld [vmem:[#allocation7 + $0x320] sm:$0xff]
        %v3119 = vld [vmem:[#allocation7 + $0x328] sm:$0xff]
        %v3120 = vld [vmem:[#allocation7 + $0x330] sm:$0xff]
        %v3121 = vld [vmem:[#allocation7 + $0x338] sm:$0xff]
        %v3122 = vld [vmem:[#allocation7 + $0x340] sm:$0xff]
        %v3123 = vld [vmem:[#allocation7 + $0x348] sm:$0xff]
        %v3124 = vld [vmem:[#allocation7 + $0x350] sm:$0xff]
        %v3125 = vld [vmem:[#allocation7 + $0x358] sm:$0xff]
        %v3126 = vld [vmem:[#allocation7 + $0x360] sm:$0xff]
        %v3127 = vld [vmem:[#allocation7 + $0x368] sm:$0xff]
        %v3128 = vld [vmem:[#allocation7 + $0x370] sm:$0xff]
        %v3129 = vld [vmem:[#allocation7 + $0x378] sm:$0xff]
        %v3130 = vld [vmem:[#allocation7 + $0x380] sm:$0xff]
        %v3131 = vld [vmem:[#allocation7 + $0x388] sm:$0xff]
        %v3132 = vld [vmem:[#allocation7 + $0x390] sm:$0xff]
        %v3133 = vld [vmem:[#allocation7 + $0x398] sm:$0xff]
        %v3134 = vld [vmem:[#allocation7 + $0x3a0] sm:$0xff]
        %v3135 = vld [vmem:[#allocation7 + $0x3a8] sm:$0xff]
        %v3136 = vld [vmem:[#allocation7 + $0x3b0] sm:$0xff]
        %v3137 = vld [vmem:[#allocation7 + $0x3b8] sm:$0xff]
        %v3138 = vld [vmem:[#allocation7 + $0x3c0] sm:$0xff]
        %v3139 = vld [vmem:[#allocation7 + $0x3c8] sm:$0xff]
        %v3140 = vld [vmem:[#allocation7 + $0x3d0] sm:$0xff]
        %v3141 = vld [vmem:[#allocation7 + $0x3d8] sm:$0xff]
        %v3142 = vld [vmem:[#allocation7 + $0x3e0] sm:$0xff]
        %v3143 = vld [vmem:[#allocation7 + $0x3e8] sm:$0xff]
        %v3144 = vld [vmem:[#allocation7 + $0x3f0] sm:$0xff]
        %v3145 = vld [vmem:[#allocation7 + $0x3f8] sm:$0xff]
        %v3146 = vld [vmem:[#allocation7 + $0x400] sm:$0xff]
        %v3147 = vld [vmem:[#allocation7 + $0x408] sm:$0xff]
        %v3148 = vld [vmem:[#allocation7 + $0x410] sm:$0xff]
        %v3149 = vld [vmem:[#allocation7 + $0x418] sm:$0xff]
        %v3150 = vld [vmem:[#allocation7 + $0x420] sm:$0xff]
        %v3151 = vld [vmem:[#allocation7 + $0x428] sm:$0xff]
        %v3152 = vld [vmem:[#allocation7 + $0x430] sm:$0xff]
        %v3153 = vld [vmem:[#allocation7 + $0x438] sm:$0xff]
        %v3154 = vld [vmem:[#allocation7 + $0x440] sm:$0xff]
        %v3155 = vld [vmem:[#allocation7 + $0x448] sm:$0xff]
        %v3156 = vld [vmem:[#allocation7 + $0x450] sm:$0xff]
        %v3157 = vld [vmem:[#allocation7 + $0x458] sm:$0xff]
        %v3158 = vld [vmem:[#allocation7 + $0x460] sm:$0xff]
        %v3159 = vld [vmem:[#allocation7 + $0x468] sm:$0xff]
        %v3160 = vld [vmem:[#allocation7 + $0x470] sm:$0xff]
        %v3161 = vld [vmem:[#allocation7 + $0x478] sm:$0xff]
        %v3162 = vld [vmem:[#allocation7 + $0x480] sm:$0xff]
        %v3163 = vld [vmem:[#allocation7 + $0x488] sm:$0xff]
        %v3164 = vld [vmem:[#allocation7 + $0x490] sm:$0xff]
        %v3165 = vld [vmem:[#allocation7 + $0x498] sm:$0xff]
        %v3166 = vld [vmem:[#allocation7 + $0x4a0] sm:$0xff]
        %v3167 = vld [vmem:[#allocation7 + $0x4a8] sm:$0xff]
        %v3168 = vld [vmem:[#allocation7 + $0x4b0] sm:$0xff]
        %v3169 = vld [vmem:[#allocation7 + $0x4b8] sm:$0xff]
        %v3170 = vld [vmem:[#allocation7 + $0x4c0] sm:$0xff]
        %v3171 = vld [vmem:[#allocation7 + $0x4c8] sm:$0xff]
        %v3172 = vld [vmem:[#allocation7 + $0x4d0] sm:$0xff]
        %v3173 = vld [vmem:[#allocation7 + $0x4d8] sm:$0xff]
        %v3174 = vld [vmem:[#allocation7 + $0x4e0] sm:$0xff]
        %v3175 = vld [vmem:[#allocation7 + $0x4e8] sm:$0xff]
        %v3176 = vld [vmem:[#allocation7 + $0x4f0] sm:$0xff]
        %v3177 = vld [vmem:[#allocation7 + $0x4f8] sm:$0xff]
        %v3178 = vld [vmem:[#allocation7 + $0x500] sm:$0xff]
        %v3179 = vld [vmem:[#allocation7 + $0x508] sm:$0xff]
        %v3180 = vld [vmem:[#allocation7 + $0x510] sm:$0xff]
        %v3181 = vld [vmem:[#allocation7 + $0x518] sm:$0xff]
        %v3182 = vld [vmem:[#allocation7 + $0x520] sm:$0xff]
        %v3183 = vld [vmem:[#allocation7 + $0x528] sm:$0xff]
        %v3184 = vld [vmem:[#allocation7 + $0x530] sm:$0xff]
        %v3185 = vld [vmem:[#allocation7 + $0x538] sm:$0xff]
        %v3186 = vld [vmem:[#allocation7 + $0x540] sm:$0xff]
        %v3187 = vld [vmem:[#allocation7 + $0x548] sm:$0xff]
        %v3188 = vld [vmem:[#allocation7 + $0x550] sm:$0xff]
        %v3189 = vld [vmem:[#allocation7 + $0x558] sm:$0xff]
        %v3190 = vld [vmem:[#allocation7 + $0x560] sm:$0xff]
        %v3191 = vld [vmem:[#allocation7 + $0x568] sm:$0xff]
        %v3192 = vld [vmem:[#allocation7 + $0x570] sm:$0xff]
        %v3193 = vld [vmem:[#allocation7 + $0x578] sm:$0xff]
        %v3194 = vld [vmem:[#allocation7 + $0x580] sm:$0xff]
        %v3195 = vld [vmem:[#allocation7 + $0x588] sm:$0xff]
        %v3196 = vld [vmem:[#allocation7 + $0x590] sm:$0xff]
        %v3197 = vld [vmem:[#allocation7 + $0x598] sm:$0xff]
        %v3198 = vld [vmem:[#allocation7 + $0x5a0] sm:$0xff]
        %v3199 = vld [vmem:[#allocation7 + $0x5a8] sm:$0xff]
        %v3200 = vld [vmem:[#allocation7 + $0x5b0] sm:$0xff]
        %v3201 = vld [vmem:[#allocation7 + $0x5b8] sm:$0xff]
        %v3202 = vld [vmem:[#allocation7 + $0x5c0] sm:$0xff]
        %v3203 = vld [vmem:[#allocation7 + $0x5c8] sm:$0xff]
        %v3204 = vld [vmem:[#allocation7 + $0x5d0] sm:$0xff]
        %v3205 = vld [vmem:[#allocation7 + $0x5d8] sm:$0xff]
        %v3206 = vld [vmem:[#allocation7 + $0x5e0] sm:$0xff]
        %v3207 = vld [vmem:[#allocation7 + $0x5e8] sm:$0xff]
        %v3208 = vld [vmem:[#allocation7 + $0x5f0] sm:$0xff]
        %v3209 = vld [vmem:[#allocation7 + $0x5f8] sm:$0xff]
        %v3210 = vld [vmem:[#allocation9] sm:$0x3]
        %v3212 = vlaneseq
        %v3213 = vshrl.u32 %v3212, 7
        %v3214 = vsub.s32 0, %v3213
        %v3215 = vrot.slane %v3210, %v3214
        %v3216 = vlaneseq
        %v3217 = vshrl.u32 %v3216, 7
        %v3218 = vsub.s32 1, %v3217
        %v3219 = vrot.slane %v3210, %v3218
        %3222 = vmatprep.subr.mxu0 %v3049
        %3223 = vmatpush1.msra.mxu0 %v3048
        %3224 = vmatprep.subr.mxu0 %v3047
        %3225 = vmatpush1.msra.mxu0 %v3046
        %3226 = vmatprep.subr.mxu0 %v3045
        %3227 = vmatpush1.msra.mxu0 %v3044
        %3228 = vmatprep.subr.mxu0 %v3043
        %3229 = vmatpush1.msra.mxu0 %v3042
        %3230 = vmatprep.subr.mxu0 %v3041
        %3231 = vmatpush1.msra.mxu0 %v3040
        %3232 = vmatprep.subr.mxu0 %v3039
        %3233 = vmatpush1.msra.mxu0 %v3038
        %3234 = vmatprep.subr.mxu0 %v3037
        %3235 = vmatpush1.msra.mxu0 %v3036
        %3236 = vmatprep.subr.mxu0 %v3035
        %3237 = vmatpush1.msra.mxu0 %v3034
        %3238 = vmatprep.subr.mxu0 %v3033
        %3239 = vmatpush1.msra.mxu0 %v3032
        %3240 = vmatprep.subr.mxu0 %v3031
        %3241 = vmatpush1.msra.mxu0 %v3030
        %3242 = vmatprep.subr.mxu0 %v3029
        %3243 = vmatpush1.msra.mxu0 %v3028
        %3244 = vmatprep.subr.mxu0 %v3027
        %3245 = vmatpush1.msra.mxu0 %v3026
        %3246 = vmatprep.subr.mxu0 %v3025
        %3247 = vmatpush1.msra.mxu0 %v3024
        %3248 = vmatprep.subr.mxu0 %v3023
        %3249 = vmatpush1.msra.mxu0 %v3022
        %3250 = vmatprep.subr.mxu0 %v3021
        %3251 = vmatpush1.msra.mxu0 %v3020
        %3252 = vmatprep.subr.mxu0 %v3019
        %3253 = vmatpush1.msra.mxu0 %v3018
        %3254 = vmatprep.subr.mxu0 %v3081
        %3255 = vmatpush2.msra.mxu0 %v3080
        %3256 = vmatprep.subr.mxu0 %v3079
        %3257 = vmatpush2.msra.mxu0 %v3078
        %3258 = vmatprep.subr.mxu0 %v3077
        %3259 = vmatpush2.msra.mxu0 %v3076
        %3260 = vmatprep.subr.mxu0 %v3075
        %3261 = vmatpush2.msra.mxu0 %v3074
        %3262 = vmatprep.subr.mxu0 %v3073
        %3263 = vmatpush2.msra.mxu0 %v3072
        %3264 = vmatprep.subr.mxu0 %v3071
        %3265 = vmatpush2.msra.mxu0 %v3070
        %3266 = vmatprep.subr.mxu0 %v3069
        %3267 = vmatpush2.msra.mxu0 %v3068
        %3268 = vmatprep.subr.mxu0 %v3067
        %3269 = vmatpush2.msra.mxu0 %v3066
        %3270 = vmatprep.subr.mxu0 %v3065
        %3271 = vmatpush2.msra.mxu0 %v3064
        %3272 = vmatprep.subr.mxu0 %v3063
        %3273 = vmatpush2.msra.mxu0 %v3062
        %3274 = vmatprep.subr.mxu0 %v3061
        %3275 = vmatpush2.msra.mxu0 %v3060
        %3276 = vmatprep.subr.mxu0 %v3059
        %3277 = vmatpush2.msra.mxu0 %v3058
        %3278 = vmatprep.subr.mxu0 %v3057
        %3279 = vmatpush2.msra.mxu0 %v3056
        %3280 = vmatprep.subr.mxu0 %v3055
        %3281 = vmatpush2.msra.mxu0 %v3054
        %3282 = vmatprep.subr.mxu0 %v3053
        %3283 = vmatpush2.msra.mxu0 %v3052
        %3284 = vmatprep.subr.mxu0 %v3051
        %3285 = vmatpush2.msra.mxu0 %v3050
        %3286 = vmatprep.mubr.f32.mxu0 %v2923
        %3287 = vmatmul.mubr.f32.gmra.mxu0 %v2922
        %v3288 = vpop.f32.mrf.mxu0
        %v3289 = vadd.f32 %v3215, %v3288
        %v3290 = vpop.f32.mrf.mxu0
        %v3291 = vadd.f32 %v3219, %v3290
        %3292 = vmatprep.mubr.f32.mxu0 %v2929
        %3293 = vmatmul.mubr.f32.gmra.mxu0 %v2928
        %v3294 = vpop.f32.mrf.mxu0
        %v3295 = vadd.f32 %v3215, %v3294
        %v3296 = vpop.f32.mrf.mxu0
        %v3297 = vadd.f32 %v3219, %v3296
        %3298 = vmatprep.mubr.f32.mxu0 %v2935
        %3299 = vmatmul.mubr.f32.gmra.mxu0 %v2934
        %v3300 = vpop.f32.mrf.mxu0
        %v3301 = vadd.f32 %v3215, %v3300
        %v3302 = vpop.f32.mrf.mxu0
        %v3303 = vadd.f32 %v3219, %v3302
        %3304 = vmatprep.mubr.f32.mxu0 %v2941
        %3305 = vmatmul.mubr.f32.gmra.mxu0 %v2940
        %v3306 = vpop.f32.mrf.mxu0
        %v3307 = vadd.f32 %v3215, %v3306
        %v3308 = vpop.f32.mrf.mxu0
        %v3309 = vadd.f32 %v3219, %v3308
        %3310 = vmatprep.mubr.f32.mxu0 %v2947
        %3311 = vmatmul.mubr.f32.gmra.mxu0 %v2946
        %v3312 = vpop.f32.mrf.mxu0
        %v3313 = vadd.f32 %v3215, %v3312
        %v3314 = vpop.f32.mrf.mxu0
        %v3315 = vadd.f32 %v3219, %v3314
        %3316 = vmatprep.mubr.f32.mxu0 %v2953
        %3317 = vmatmul.mubr.f32.gmra.mxu0 %v2952
        %v3318 = vpop.f32.mrf.mxu0
        %v3319 = vadd.f32 %v3215, %v3318
        %v3320 = vpop.f32.mrf.mxu0
        %v3321 = vadd.f32 %v3219, %v3320
        %3322 = vmatprep.mubr.f32.mxu0 %v2959
        %3323 = vmatmul.mubr.f32.gmra.mxu0 %v2958
        %v3324 = vpop.f32.mrf.mxu0
        %v3325 = vadd.f32 %v3215, %v3324
        %v3326 = vpop.f32.mrf.mxu0
        %v3327 = vadd.f32 %v3219, %v3326
        %3328 = vmatprep.mubr.f32.mxu0 %v2965
        %3329 = vmatmul.mubr.f32.gmra.mxu0 %v2964
        %v3330 = vpop.f32.mrf.mxu0
        %v3331 = vadd.f32 %v3215, %v3330
        %v3332 = vpop.f32.mrf.mxu0
        %v3333 = vadd.f32 %v3219, %v3332
        %3334 = vmatprep.mubr.f32.mxu0 %v2971
        %3335 = vmatmul.mubr.f32.gmra.mxu0 %v2970
        %v3336 = vpop.f32.mrf.mxu0
        %v3337 = vadd.f32 %v3215, %v3336
        %v3338 = vpop.f32.mrf.mxu0
        %v3339 = vadd.f32 %v3219, %v3338
        %3340 = vmatprep.mubr.f32.mxu0 %v2977
        %3341 = vmatmul.mubr.f32.gmra.mxu0 %v2976
        %v3342 = vpop.f32.mrf.mxu0
        %v3343 = vadd.f32 %v3215, %v3342
        %v3344 = vpop.f32.mrf.mxu0
        %v3345 = vadd.f32 %v3219, %v3344
        %3346 = vmatprep.mubr.f32.mxu0 %v2983
        %3347 = vmatmul.mubr.f32.gmra.mxu0 %v2982
        %v3348 = vpop.f32.mrf.mxu0
        %v3349 = vadd.f32 %v3215, %v3348
        %v3350 = vpop.f32.mrf.mxu0
        %v3351 = vadd.f32 %v3219, %v3350
        %3352 = vmatprep.mubr.f32.mxu0 %v2989
        %3353 = vmatmul.mubr.f32.gmra.mxu0 %v2988
        %v3354 = vpop.f32.mrf.mxu0
        %v3355 = vadd.f32 %v3215, %v3354
        %v3356 = vpop.f32.mrf.mxu0
        %v3357 = vadd.f32 %v3219, %v3356
        %3358 = vmatprep.mubr.f32.mxu0 %v2995
        %3359 = vmatmul.mubr.f32.gmra.mxu0 %v2994
        %v3360 = vpop.f32.mrf.mxu0
        %v3361 = vadd.f32 %v3215, %v3360
        %v3362 = vpop.f32.mrf.mxu0
        %v3363 = vadd.f32 %v3219, %v3362
        %3364 = vmatprep.mubr.f32.mxu0 %v3001
        %3365 = vmatmul.mubr.f32.gmra.mxu0 %v3000
        %v3366 = vpop.f32.mrf.mxu0
        %v3367 = vadd.f32 %v3215, %v3366
        %v3368 = vpop.f32.mrf.mxu0
        %v3369 = vadd.f32 %v3219, %v3368
        %3370 = vmatprep.mubr.f32.mxu0 %v3007
        %3371 = vmatmul.mubr.f32.gmra.mxu0 %v3006
        %v3372 = vpop.f32.mrf.mxu0
        %v3373 = vadd.f32 %v3215, %v3372
        %v3374 = vpop.f32.mrf.mxu0
        %v3375 = vadd.f32 %v3219, %v3374
        %3376 = vmatprep.mubr.f32.mxu0 %v3013
        %3377 = vmatmul.mubr.f32.gmra.mxu0 %v3012
        %v3378 = vpop.f32.mrf.mxu0
        %v3379 = vadd.f32 %v3215, %v3378
        %v3380 = vpop.f32.mrf.mxu0
        %v3381 = vadd.f32 %v3219, %v3380
        %3382 = vdwg.mxu0
        %3383 = vmatprep.subr.mxu0 %v3113
        %3384 = vmatpush1.msra.mxu0 %v3112
        %3385 = vmatprep.subr.mxu0 %v3111
        %3386 = vmatpush1.msra.mxu0 %v3110
        %3387 = vmatprep.subr.mxu0 %v3109
        %3388 = vmatpush1.msra.mxu0 %v3108
        %3389 = vmatprep.subr.mxu0 %v3107
        %3390 = vmatpush1.msra.mxu0 %v3106
        %3391 = vmatprep.subr.mxu0 %v3105
        %3392 = vmatpush1.msra.mxu0 %v3104
        %3393 = vmatprep.subr.mxu0 %v3103
        %3394 = vmatpush1.msra.mxu0 %v3102
        %3395 = vmatprep.subr.mxu0 %v3101
        %3396 = vmatpush1.msra.mxu0 %v3100
        %3397 = vmatprep.subr.mxu0 %v3099
        %3398 = vmatpush1.msra.mxu0 %v3098
        %3399 = vmatprep.subr.mxu0 %v3097
        %3400 = vmatpush1.msra.mxu0 %v3096
        %3401 = vmatprep.subr.mxu0 %v3095
        %3402 = vmatpush1.msra.mxu0 %v3094
        %3403 = vmatprep.subr.mxu0 %v3093
        %3404 = vmatpush1.msra.mxu0 %v3092
        %3405 = vmatprep.subr.mxu0 %v3091
        %3406 = vmatpush1.msra.mxu0 %v3090
        %3407 = vmatprep.subr.mxu0 %v3089
        %3408 = vmatpush1.msra.mxu0 %v3088
        %3409 = vmatprep.subr.mxu0 %v3087
        %3410 = vmatpush1.msra.mxu0 %v3086
        %3411 = vmatprep.subr.mxu0 %v3085
        %3412 = vmatpush1.msra.mxu0 %v3084
        %3413 = vmatprep.subr.mxu0 %v3083
        %3414 = vmatpush1.msra.mxu0 %v3082
        %3415 = vmatprep.subr.mxu0 %v3145
        %3416 = vmatpush2.msra.mxu0 %v3144
        %3417 = vmatprep.subr.mxu0 %v3143
        %3418 = vmatpush2.msra.mxu0 %v3142
        %3419 = vmatprep.subr.mxu0 %v3141
        %3420 = vmatpush2.msra.mxu0 %v3140
        %3421 = vmatprep.subr.mxu0 %v3139
        %3422 = vmatpush2.msra.mxu0 %v3138
        %3423 = vmatprep.subr.mxu0 %v3137
        %3424 = vmatpush2.msra.mxu0 %v3136
        %3425 = vmatprep.subr.mxu0 %v3135
        %3426 = vmatpush2.msra.mxu0 %v3134
        %3427 = vmatprep.subr.mxu0 %v3133
        %3428 = vmatpush2.msra.mxu0 %v3132
        %3429 = vmatprep.subr.mxu0 %v3131
        %3430 = vmatpush2.msra.mxu0 %v3130
        %3431 = vmatprep.subr.mxu0 %v3129
        %3432 = vmatpush2.msra.mxu0 %v3128
        %3433 = vmatprep.subr.mxu0 %v3127
        %3434 = vmatpush2.msra.mxu0 %v3126
        %3435 = vmatprep.subr.mxu0 %v3125
        %3436 = vmatpush2.msra.mxu0 %v3124
        %3437 = vmatprep.subr.mxu0 %v3123
        %3438 = vmatpush2.msra.mxu0 %v3122
        %3439 = vmatprep.subr.mxu0 %v3121
        %3440 = vmatpush2.msra.mxu0 %v3120
        %3441 = vmatprep.subr.mxu0 %v3119
        %3442 = vmatpush2.msra.mxu0 %v3118
        %3443 = vmatprep.subr.mxu0 %v3117
        %3444 = vmatpush2.msra.mxu0 %v3116
        %3445 = vmatprep.subr.mxu0 %v3115
        %3446 = vmatpush2.msra.mxu0 %v3114
        %3447 = vmatprep.mubr.f32.mxu0 %v2925
        %3448 = vmatmul.mubr.f32.gmra.mxu0 %v2924
        %v3449 = vpop.f32.mrf.mxu0
        %v3450 = vadd.f32 %v3289, %v3449
        %v3451 = vpop.f32.mrf.mxu0
        %v3452 = vadd.f32 %v3291, %v3451
        %3453 = vmatprep.mubr.f32.mxu0 %v2931
        %3454 = vmatmul.mubr.f32.gmra.mxu0 %v2930
        %v3455 = vpop.f32.mrf.mxu0
        %v3456 = vadd.f32 %v3295, %v3455
        %v3457 = vpop.f32.mrf.mxu0
        %v3458 = vadd.f32 %v3297, %v3457
        %3459 = vmatprep.mubr.f32.mxu0 %v2937
        %3460 = vmatmul.mubr.f32.gmra.mxu0 %v2936
        %v3461 = vpop.f32.mrf.mxu0
        %v3462 = vadd.f32 %v3301, %v3461
        %v3463 = vpop.f32.mrf.mxu0
        %v3464 = vadd.f32 %v3303, %v3463
        %3465 = vmatprep.mubr.f32.mxu0 %v2943
        %3466 = vmatmul.mubr.f32.gmra.mxu0 %v2942
        %v3467 = vpop.f32.mrf.mxu0
        %v3468 = vadd.f32 %v3307, %v3467
        %v3469 = vpop.f32.mrf.mxu0
        %v3470 = vadd.f32 %v3309, %v3469
        %3471 = vmatprep.mubr.f32.mxu0 %v2949
        %3472 = vmatmul.mubr.f32.gmra.mxu0 %v2948
        %v3473 = vpop.f32.mrf.mxu0
        %v3474 = vadd.f32 %v3313, %v3473
        %v3475 = vpop.f32.mrf.mxu0
        %v3476 = vadd.f32 %v3315, %v3475
        %3477 = vmatprep.mubr.f32.mxu0 %v2955
        %3478 = vmatmul.mubr.f32.gmra.mxu0 %v2954
        %v3479 = vpop.f32.mrf.mxu0
        %v3480 = vadd.f32 %v3319, %v3479
        %v3481 = vpop.f32.mrf.mxu0
        %v3482 = vadd.f32 %v3321, %v3481
        %3483 = vmatprep.mubr.f32.mxu0 %v2961
        %3484 = vmatmul.mubr.f32.gmra.mxu0 %v2960
        %v3485 = vpop.f32.mrf.mxu0
        %v3486 = vadd.f32 %v3325, %v3485
        %v3487 = vpop.f32.mrf.mxu0
        %v3488 = vadd.f32 %v3327, %v3487
        %3489 = vmatprep.mubr.f32.mxu0 %v2967
        %3490 = vmatmul.mubr.f32.gmra.mxu0 %v2966
        %v3491 = vpop.f32.mrf.mxu0
        %v3492 = vadd.f32 %v3331, %v3491
        %v3493 = vpop.f32.mrf.mxu0
        %v3494 = vadd.f32 %v3333, %v3493
        %3495 = vmatprep.mubr.f32.mxu0 %v2973
        %3496 = vmatmul.mubr.f32.gmra.mxu0 %v2972
        %v3497 = vpop.f32.mrf.mxu0
        %v3498 = vadd.f32 %v3337, %v3497
        %v3499 = vpop.f32.mrf.mxu0
        %v3500 = vadd.f32 %v3339, %v3499
        %3501 = vmatprep.mubr.f32.mxu0 %v2979
        %3502 = vmatmul.mubr.f32.gmra.mxu0 %v2978
        %v3503 = vpop.f32.mrf.mxu0
        %v3504 = vadd.f32 %v3343, %v3503
        %v3505 = vpop.f32.mrf.mxu0
        %v3506 = vadd.f32 %v3345, %v3505
        %3507 = vmatprep.mubr.f32.mxu0 %v2985
        %3508 = vmatmul.mubr.f32.gmra.mxu0 %v2984
        %v3509 = vpop.f32.mrf.mxu0
        %v3510 = vadd.f32 %v3349, %v3509
        %v3511 = vpop.f32.mrf.mxu0
        %v3512 = vadd.f32 %v3351, %v3511
        %3513 = vmatprep.mubr.f32.mxu0 %v2991
        %3514 = vmatmul.mubr.f32.gmra.mxu0 %v2990
        %v3515 = vpop.f32.mrf.mxu0
        %v3516 = vadd.f32 %v3355, %v3515
        %v3517 = vpop.f32.mrf.mxu0
        %v3518 = vadd.f32 %v3357, %v3517
        %3519 = vmatprep.mubr.f32.mxu0 %v2997
        %3520 = vmatmul.mubr.f32.gmra.mxu0 %v2996
        %v3521 = vpop.f32.mrf.mxu0
        %v3522 = vadd.f32 %v3361, %v3521
        %v3523 = vpop.f32.mrf.mxu0
        %v3524 = vadd.f32 %v3363, %v3523
        %3525 = vmatprep.mubr.f32.mxu0 %v3003
        %3526 = vmatmul.mubr.f32.gmra.mxu0 %v3002
        %v3527 = vpop.f32.mrf.mxu0
        %v3528 = vadd.f32 %v3367, %v3527
        %v3529 = vpop.f32.mrf.mxu0
        %v3530 = vadd.f32 %v3369, %v3529
        %3531 = vmatprep.mubr.f32.mxu0 %v3009
        %3532 = vmatmul.mubr.f32.gmra.mxu0 %v3008
        %v3533 = vpop.f32.mrf.mxu0
        %v3534 = vadd.f32 %v3373, %v3533
        %v3535 = vpop.f32.mrf.mxu0
        %v3536 = vadd.f32 %v3375, %v3535
        %3537 = vmatprep.mubr.f32.mxu0 %v3015
        %3538 = vmatmul.mubr.f32.gmra.mxu0 %v3014
        %v3539 = vpop.f32.mrf.mxu0
        %v3540 = vadd.f32 %v3379, %v3539
        %v3541 = vpop.f32.mrf.mxu0
        %v3542 = vadd.f32 %v3381, %v3541
        %3543 = vdwg.mxu0
        %3544 = vmatprep.subr.mxu0 %v3177
        %3545 = vmatpush1.msra.mxu0 %v3176
        %3546 = vmatprep.subr.mxu0 %v3175
        %3547 = vmatpush1.msra.mxu0 %v3174
        %3548 = vmatprep.subr.mxu0 %v3173
        %3549 = vmatpush1.msra.mxu0 %v3172
        %3550 = vmatprep.subr.mxu0 %v3171
        %3551 = vmatpush1.msra.mxu0 %v3170
        %3552 = vmatprep.subr.mxu0 %v3169
        %3553 = vmatpush1.msra.mxu0 %v3168
        %3554 = vmatprep.subr.mxu0 %v3167
        %3555 = vmatpush1.msra.mxu0 %v3166
        %3556 = vmatprep.subr.mxu0 %v3165
        %3557 = vmatpush1.msra.mxu0 %v3164
        %3558 = vmatprep.subr.mxu0 %v3163
        %3559 = vmatpush1.msra.mxu0 %v3162
        %3560 = vmatprep.subr.mxu0 %v3161
        %3561 = vmatpush1.msra.mxu0 %v3160
        %3562 = vmatprep.subr.mxu0 %v3159
        %3563 = vmatpush1.msra.mxu0 %v3158
        %3564 = vmatprep.subr.mxu0 %v3157
        %3565 = vmatpush1.msra.mxu0 %v3156
        %3566 = vmatprep.subr.mxu0 %v3155
        %3567 = vmatpush1.msra.mxu0 %v3154
        %3568 = vmatprep.subr.mxu0 %v3153
        %3569 = vmatpush1.msra.mxu0 %v3152
        %3570 = vmatprep.subr.mxu0 %v3151
        %3571 = vmatpush1.msra.mxu0 %v3150
        %3572 = vmatprep.subr.mxu0 %v3149
        %3573 = vmatpush1.msra.mxu0 %v3148
        %3574 = vmatprep.subr.mxu0 %v3147
        %3575 = vmatpush1.msra.mxu0 %v3146
        %3576 = vmatprep.subr.mxu0 %v3209
        %3577 = vmatpush2.msra.mxu0 %v3208
        %3578 = vmatprep.subr.mxu0 %v3207
        %3579 = vmatpush2.msra.mxu0 %v3206
        %3580 = vmatprep.subr.mxu0 %v3205
        %3581 = vmatpush2.msra.mxu0 %v3204
        %3582 = vmatprep.subr.mxu0 %v3203
        %3583 = vmatpush2.msra.mxu0 %v3202
        %3584 = vmatprep.subr.mxu0 %v3201
        %3585 = vmatpush2.msra.mxu0 %v3200
        %3586 = vmatprep.subr.mxu0 %v3199
        %3587 = vmatpush2.msra.mxu0 %v3198
        %3588 = vmatprep.subr.mxu0 %v3197
        %3589 = vmatpush2.msra.mxu0 %v3196
        %3590 = vmatprep.subr.mxu0 %v3195
        %3591 = vmatpush2.msra.mxu0 %v3194
        %3592 = vmatprep.subr.mxu0 %v3193
        %3593 = vmatpush2.msra.mxu0 %v3192
        %3594 = vmatprep.subr.mxu0 %v3191
        %3595 = vmatpush2.msra.mxu0 %v3190
        %3596 = vmatprep.subr.mxu0 %v3189
        %3597 = vmatpush2.msra.mxu0 %v3188
        %3598 = vmatprep.subr.mxu0 %v3187
        %3599 = vmatpush2.msra.mxu0 %v3186
        %3600 = vmatprep.subr.mxu0 %v3185
        %3601 = vmatpush2.msra.mxu0 %v3184
        %3602 = vmatprep.subr.mxu0 %v3183
        %3603 = vmatpush2.msra.mxu0 %v3182
        %3604 = vmatprep.subr.mxu0 %v3181
        %3605 = vmatpush2.msra.mxu0 %v3180
        %3606 = vmatprep.subr.mxu0 %v3179
        %3607 = vmatpush2.msra.mxu0 %v3178
        %3608 = vmatprep.mubr.f32.mxu0 %v2927
        %3609 = vmatmul.mubr.f32.gmra.mxu0 %v2926
        %v3610 = vpop.f32.mrf.mxu0
        %v3611 = vadd.f32 %v3450, %v3610
        %v3612 = vpop.f32.mrf.mxu0
        %v3613 = vadd.f32 %v3452, %v3612
        %3614 = vmatprep.mubr.f32.mxu0 %v2933
        %3615 = vmatmul.mubr.f32.gmra.mxu0 %v2932
        %v3616 = vpop.f32.mrf.mxu0
        %v3617 = vadd.f32 %v3456, %v3616
        %v3618 = vpop.f32.mrf.mxu0
        %v3619 = vadd.f32 %v3458, %v3618
        %3620 = vmatprep.mubr.f32.mxu0 %v2939
        %3621 = vmatmul.mubr.f32.gmra.mxu0 %v2938
        %v3622 = vpop.f32.mrf.mxu0
        %v3623 = vadd.f32 %v3462, %v3622
        %v3624 = vpop.f32.mrf.mxu0
        %v3625 = vadd.f32 %v3464, %v3624
        %3626 = vmatprep.mubr.f32.mxu0 %v2945
        %3627 = vmatmul.mubr.f32.gmra.mxu0 %v2944
        %v3628 = vpop.f32.mrf.mxu0
        %v3629 = vadd.f32 %v3468, %v3628
        %v3630 = vpop.f32.mrf.mxu0
        %v3631 = vadd.f32 %v3470, %v3630
        %3632 = vmatprep.mubr.f32.mxu0 %v2951
        %3633 = vmatmul.mubr.f32.gmra.mxu0 %v2950
        %v3634 = vpop.f32.mrf.mxu0
        %v3635 = vadd.f32 %v3474, %v3634
        %v3636 = vpop.f32.mrf.mxu0
        %v3637 = vadd.f32 %v3476, %v3636
        %3638 = vmatprep.mubr.f32.mxu0 %v2957
        %3639 = vmatmul.mubr.f32.gmra.mxu0 %v2956
        %v3640 = vpop.f32.mrf.mxu0
        %v3641 = vadd.f32 %v3480, %v3640
        %v3642 = vpop.f32.mrf.mxu0
        %v3643 = vadd.f32 %v3482, %v3642
        %3644 = vmatprep.mubr.f32.mxu0 %v2963
        %3645 = vmatmul.mubr.f32.gmra.mxu0 %v2962
        %v3646 = vpop.f32.mrf.mxu0
        %v3647 = vadd.f32 %v3486, %v3646
        %v3648 = vpop.f32.mrf.mxu0
        %v3649 = vadd.f32 %v3488, %v3648
        %3650 = vmatprep.mubr.f32.mxu0 %v2969
        %3651 = vmatmul.mubr.f32.gmra.mxu0 %v2968
        %v3652 = vpop.f32.mrf.mxu0
        %v3653 = vadd.f32 %v3492, %v3652
        %v3654 = vpop.f32.mrf.mxu0
        %v3655 = vadd.f32 %v3494, %v3654
        %3656 = vmatprep.mubr.f32.mxu0 %v2975
        %3657 = vmatmul.mubr.f32.gmra.mxu0 %v2974
        %v3658 = vpop.f32.mrf.mxu0
        %v3659 = vadd.f32 %v3498, %v3658
        %v3660 = vpop.f32.mrf.mxu0
        %v3661 = vadd.f32 %v3500, %v3660
        %3662 = vmatprep.mubr.f32.mxu0 %v2981
        %3663 = vmatmul.mubr.f32.gmra.mxu0 %v2980
        %v3664 = vpop.f32.mrf.mxu0
        %v3665 = vadd.f32 %v3504, %v3664
        %v3666 = vpop.f32.mrf.mxu0
        %v3667 = vadd.f32 %v3506, %v3666
        %3668 = vmatprep.mubr.f32.mxu0 %v2987
        %3669 = vmatmul.mubr.f32.gmra.mxu0 %v2986
        %v3670 = vpop.f32.mrf.mxu0
        %v3671 = vadd.f32 %v3510, %v3670
        %v3672 = vpop.f32.mrf.mxu0
        %v3673 = vadd.f32 %v3512, %v3672
        %3674 = vmatprep.mubr.f32.mxu0 %v2993
        %3675 = vmatmul.mubr.f32.gmra.mxu0 %v2992
        %v3676 = vpop.f32.mrf.mxu0
        %v3677 = vadd.f32 %v3516, %v3676
        %v3678 = vpop.f32.mrf.mxu0
        %v3679 = vadd.f32 %v3518, %v3678
        %3680 = vmatprep.mubr.f32.mxu0 %v2999
        %3681 = vmatmul.mubr.f32.gmra.mxu0 %v2998
        %v3682 = vpop.f32.mrf.mxu0
        %v3683 = vadd.f32 %v3522, %v3682
        %v3684 = vpop.f32.mrf.mxu0
        %v3685 = vadd.f32 %v3524, %v3684
        %3686 = vmatprep.mubr.f32.mxu0 %v3005
        %3687 = vmatmul.mubr.f32.gmra.mxu0 %v3004
        %v3688 = vpop.f32.mrf.mxu0
        %v3689 = vadd.f32 %v3528, %v3688
        %v3690 = vpop.f32.mrf.mxu0
        %v3691 = vadd.f32 %v3530, %v3690
        %3692 = vmatprep.mubr.f32.mxu0 %v3011
        %3693 = vmatmul.mubr.f32.gmra.mxu0 %v3010
        %v3694 = vpop.f32.mrf.mxu0
        %v3695 = vadd.f32 %v3534, %v3694
        %v3696 = vpop.f32.mrf.mxu0
        %v3697 = vadd.f32 %v3536, %v3696
        %3698 = vmatprep.mubr.f32.mxu0 %v3017
        %3699 = vmatmul.mubr.f32.gmra.mxu0 %v3016
        %v3700 = vpop.f32.mrf.mxu0
        %v3701 = vadd.f32 %v3540, %v3700
        %v3702 = vpop.f32.mrf.mxu0
        %v3703 = vadd.f32 %v3542, %v3702
        %3704 = vdwg.mxu0
        %v3705 = vsub.f32 0.0, %v3611
        %v3706 = vsub.f32 0.0, %v3613
        %v3707 = vsub.f32 0.0, %v3617
        %v3708 = vsub.f32 0.0, %v3619
        %v3709 = vsub.f32 0.0, %v3623
        %v3710 = vsub.f32 0.0, %v3625
        %v3711 = vsub.f32 0.0, %v3629
        %v3712 = vsub.f32 0.0, %v3631
        %v3713 = vsub.f32 0.0, %v3635
        %v3714 = vsub.f32 0.0, %v3637
        %v3715 = vsub.f32 0.0, %v3641
        %v3716 = vsub.f32 0.0, %v3643
        %v3717 = vsub.f32 0.0, %v3647
        %v3718 = vsub.f32 0.0, %v3649
        %v3719 = vsub.f32 0.0, %v3653
        %v3720 = vsub.f32 0.0, %v3655
        %v3721 = vsub.f32 0.0, %v3659
        %v3722 = vsub.f32 0.0, %v3661
        %v3723 = vsub.f32 0.0, %v3665
        %v3724 = vsub.f32 0.0, %v3667
        %v3725 = vsub.f32 0.0, %v3671
        %v3726 = vsub.f32 0.0, %v3673
        %v3727 = vsub.f32 0.0, %v3677
        %v3728 = vsub.f32 0.0, %v3679
        %v3729 = vsub.f32 0.0, %v3683
        %v3730 = vsub.f32 0.0, %v3685
        %v3731 = vsub.f32 0.0, %v3689
        %v3732 = vsub.f32 0.0, %v3691
        %v3733 = vsub.f32 0.0, %v3695
        %v3734 = vsub.f32 0.0, %v3697
        %v3735 = vsub.f32 0.0, %v3701
        %v3736 = vsub.f32 0.0, %v3703
        %v3737 = vmul.f32 %v3705, 1.442695
        %v3738 = vpow.pop %v3737
        %v3739 = vmul.f32 %v3706, 1.442695
        %v3740 = vpow.pop %v3739
        %v3741 = vmul.f32 %v3707, 1.442695
        %v3742 = vpow.pop %v3741
        %v3743 = vmul.f32 %v3708, 1.442695
        %v3744 = vpow.pop %v3743
        %v3745 = vmul.f32 %v3709, 1.442695
        %v3746 = vpow.pop %v3745
        %v3747 = vmul.f32 %v3710, 1.442695
        %v3748 = vpow.pop %v3747
        %v3749 = vmul.f32 %v3711, 1.442695
        %v3750 = vpow.pop %v3749
        %v3751 = vmul.f32 %v3712, 1.442695
        %v3752 = vpow.pop %v3751
        %v3753 = vmul.f32 %v3713, 1.442695
        %v3754 = vpow.pop %v3753
        %v3755 = vmul.f32 %v3714, 1.442695
        %v3756 = vpow.pop %v3755
        %v3757 = vmul.f32 %v3715, 1.442695
        %v3758 = vpow.pop %v3757
        %v3759 = vmul.f32 %v3716, 1.442695
        %v3760 = vpow.pop %v3759
        %v3761 = vmul.f32 %v3717, 1.442695
        %v3762 = vpow.pop %v3761
        %v3763 = vmul.f32 %v3718, 1.442695
        %v3764 = vpow.pop %v3763
        %v3765 = vmul.f32 %v3719, 1.442695
        %v3766 = vpow.pop %v3765
        %v3767 = vmul.f32 %v3720, 1.442695
        %v3768 = vpow.pop %v3767
        %v3769 = vmul.f32 %v3721, 1.442695
        %v3770 = vpow.pop %v3769
        %v3771 = vmul.f32 %v3722, 1.442695
        %v3772 = vpow.pop %v3771
        %v3773 = vmul.f32 %v3723, 1.442695
        %v3774 = vpow.pop %v3773
        %v3775 = vmul.f32 %v3724, 1.442695
        %v3776 = vpow.pop %v3775
        %v3777 = vmul.f32 %v3725, 1.442695
        %v3778 = vpow.pop %v3777
        %v3779 = vmul.f32 %v3726, 1.442695
        %v3780 = vpow.pop %v3779
        %v3781 = vmul.f32 %v3727, 1.442695
        %v3782 = vpow.pop %v3781
        %v3783 = vmul.f32 %v3728, 1.442695
        %v3784 = vpow.pop %v3783
        %v3785 = vmul.f32 %v3729, 1.442695
        %v3786 = vpow.pop %v3785
        %v3787 = vmul.f32 %v3730, 1.442695
        %v3788 = vpow.pop %v3787
        %v3789 = vmul.f32 %v3731, 1.442695
        %v3790 = vpow.pop %v3789
        %v3791 = vmul.f32 %v3732, 1.442695
        %v3792 = vpow.pop %v3791
        %v3793 = vmul.f32 %v3733, 1.442695
        %v3794 = vpow.pop %v3793
        %v3795 = vmul.f32 %v3734, 1.442695
        %v3796 = vpow.pop %v3795
        %v3797 = vmul.f32 %v3735, 1.442695
        %v3798 = vpow.pop %v3797
        %v3799 = vmul.f32 %v3736, 1.442695
        %v3800 = vpow.pop %v3799
        %v3801 = vadd.f32 %v3738, 1.0
        %v3802 = vadd.f32 %v3740, 1.0
        %v3803 = vadd.f32 %v3742, 1.0
        %v3804 = vadd.f32 %v3744, 1.0
        %v3805 = vadd.f32 %v3746, 1.0
        %v3806 = vadd.f32 %v3748, 1.0
        %v3807 = vadd.f32 %v3750, 1.0
        %v3808 = vadd.f32 %v3752, 1.0
        %v3809 = vadd.f32 %v3754, 1.0
        %v3810 = vadd.f32 %v3756, 1.0
        %v3811 = vadd.f32 %v3758, 1.0
        %v3812 = vadd.f32 %v3760, 1.0
        %v3813 = vadd.f32 %v3762, 1.0
        %v3814 = vadd.f32 %v3764, 1.0
        %v3815 = vadd.f32 %v3766, 1.0
        %v3816 = vadd.f32 %v3768, 1.0
        %v3817 = vadd.f32 %v3770, 1.0
        %v3818 = vadd.f32 %v3772, 1.0
        %v3819 = vadd.f32 %v3774, 1.0
        %v3820 = vadd.f32 %v3776, 1.0
        %v3821 = vadd.f32 %v3778, 1.0
        %v3822 = vadd.f32 %v3780, 1.0
        %v3823 = vadd.f32 %v3782, 1.0
        %v3824 = vadd.f32 %v3784, 1.0
        %v3825 = vadd.f32 %v3786, 1.0
        %v3826 = vadd.f32 %v3788, 1.0
        %v3827 = vadd.f32 %v3790, 1.0
        %v3828 = vadd.f32 %v3792, 1.0
        %v3829 = vadd.f32 %v3794, 1.0
        %v3830 = vadd.f32 %v3796, 1.0
        %v3831 = vadd.f32 %v3798, 1.0
        %v3832 = vadd.f32 %v3800, 1.0
        %v3833 = vrcp.pop %v3801
        %v3834 = vrcp.pop %v3802
        %v3835 = vrcp.pop %v3803
        %v3836 = vrcp.pop %v3804
        %v3837 = vrcp.pop %v3805
        %v3838 = vrcp.pop %v3806
        %v3839 = vrcp.pop %v3807
        %v3840 = vrcp.pop %v3808
        %v3841 = vrcp.pop %v3809
        %v3842 = vrcp.pop %v3810
        %v3843 = vrcp.pop %v3811
        %v3844 = vrcp.pop %v3812
        %v3845 = vrcp.pop %v3813
        %v3846 = vrcp.pop %v3814
        %v3847 = vrcp.pop %v3815
        %v3848 = vrcp.pop %v3816
        %v3849 = vrcp.pop %v3817
        %v3850 = vrcp.pop %v3818
        %v3851 = vrcp.pop %v3819
        %v3852 = vrcp.pop %v3820
        %v3853 = vrcp.pop %v3821
        %v3854 = vrcp.pop %v3822
        %v3855 = vrcp.pop %v3823
        %v3856 = vrcp.pop %v3824
        %v3857 = vrcp.pop %v3825
        %v3858 = vrcp.pop %v3826
        %v3859 = vrcp.pop %v3827
        %v3860 = vrcp.pop %v3828
        %v3861 = vrcp.pop %v3829
        %v3862 = vrcp.pop %v3830
        %v3863 = vrcp.pop %v3831
        %v3864 = vrcp.pop %v3832
        %v3865 = vld [vmem:[#allocation10] sm:$0xff]
        %v3866 = vld [vmem:[#allocation10 + $0x8] sm:$0xff]
        %v3867 = vld [vmem:[#allocation10 + $0x10] sm:$0xff]
        %v3868 = vld [vmem:[#allocation10 + $0x18] sm:$0xff]
        %v3869 = vld [vmem:[#allocation10 + $0x20] sm:$0xff]
        %v3870 = vld [vmem:[#allocation10 + $0x28] sm:$0xff]
        %v3871 = vld [vmem:[#allocation10 + $0x30] sm:$0xff]
        %v3872 = vld [vmem:[#allocation10 + $0x38] sm:$0xff]
        %v3873 = vld [vmem:[#allocation10 + $0x40] sm:$0xff]
        %v3874 = vld [vmem:[#allocation10 + $0x48] sm:$0xff]
        %v3875 = vld [vmem:[#allocation10 + $0x50] sm:$0xff]
        %v3876 = vld [vmem:[#allocation10 + $0x58] sm:$0xff]
        %v3877 = vld [vmem:[#allocation10 + $0x60] sm:$0xff]
        %v3878 = vld [vmem:[#allocation10 + $0x68] sm:$0xff]
        %v3879 = vld [vmem:[#allocation10 + $0x70] sm:$0xff]
        %v3880 = vld [vmem:[#allocation10 + $0x78] sm:$0xff]
        %v3881 = vld [vmem:[#allocation10 + $0x80] sm:$0xff]
        %v3882 = vld [vmem:[#allocation10 + $0x88] sm:$0xff]
        %v3883 = vld [vmem:[#allocation10 + $0x90] sm:$0xff]
        %v3884 = vld [vmem:[#allocation10 + $0x98] sm:$0xff]
        %v3885 = vld [vmem:[#allocation10 + $0xa0] sm:$0xff]
        %v3886 = vld [vmem:[#allocation10 + $0xa8] sm:$0xff]
        %v3887 = vld [vmem:[#allocation10 + $0xb0] sm:$0xff]
        %v3888 = vld [vmem:[#allocation10 + $0xb8] sm:$0xff]
        %v3889 = vld [vmem:[#allocation10 + $0xc0] sm:$0xff]
        %v3890 = vld [vmem:[#allocation10 + $0xc8] sm:$0xff]
        %v3891 = vld [vmem:[#allocation10 + $0xd0] sm:$0xff]
        %v3892 = vld [vmem:[#allocation10 + $0xd8] sm:$0xff]
        %v3893 = vld [vmem:[#allocation10 + $0xe0] sm:$0xff]
        %v3894 = vld [vmem:[#allocation10 + $0xe8] sm:$0xff]
        %v3895 = vld [vmem:[#allocation10 + $0xf0] sm:$0xff]
        %v3896 = vld [vmem:[#allocation10 + $0xf8] sm:$0xff]
        %v3897 = vld [vmem:[#allocation10 + $0x100] sm:$0xff]
        %v3898 = vld [vmem:[#allocation10 + $0x108] sm:$0xff]
        %v3899 = vld [vmem:[#allocation10 + $0x110] sm:$0xff]
        %v3900 = vld [vmem:[#allocation10 + $0x118] sm:$0xff]
        %v3901 = vld [vmem:[#allocation10 + $0x120] sm:$0xff]
        %v3902 = vld [vmem:[#allocation10 + $0x128] sm:$0xff]
        %v3903 = vld [vmem:[#allocation10 + $0x130] sm:$0xff]
        %v3904 = vld [vmem:[#allocation10 + $0x138] sm:$0xff]
        %v3905 = vld [vmem:[#allocation10 + $0x140] sm:$0xff]
        %v3906 = vld [vmem:[#allocation10 + $0x148] sm:$0xff]
        %v3907 = vld [vmem:[#allocation10 + $0x150] sm:$0xff]
        %v3908 = vld [vmem:[#allocation10 + $0x158] sm:$0xff]
        %v3909 = vld [vmem:[#allocation10 + $0x160] sm:$0xff]
        %v3910 = vld [vmem:[#allocation10 + $0x168] sm:$0xff]
        %v3911 = vld [vmem:[#allocation10 + $0x170] sm:$0xff]
        %v3912 = vld [vmem:[#allocation10 + $0x178] sm:$0xff]
        %v3913 = vld [vmem:[#allocation10 + $0x180] sm:$0xff]
        %v3914 = vld [vmem:[#allocation10 + $0x188] sm:$0xff]
        %v3915 = vld [vmem:[#allocation10 + $0x190] sm:$0xff]
        %v3916 = vld [vmem:[#allocation10 + $0x198] sm:$0xff]
        %v3917 = vld [vmem:[#allocation10 + $0x1a0] sm:$0xff]
        %v3918 = vld [vmem:[#allocation10 + $0x1a8] sm:$0xff]
        %v3919 = vld [vmem:[#allocation10 + $0x1b0] sm:$0xff]
        %v3920 = vld [vmem:[#allocation10 + $0x1b8] sm:$0xff]
        %v3921 = vld [vmem:[#allocation10 + $0x1c0] sm:$0xff]
        %v3922 = vld [vmem:[#allocation10 + $0x1c8] sm:$0xff]
        %v3923 = vld [vmem:[#allocation10 + $0x1d0] sm:$0xff]
        %v3924 = vld [vmem:[#allocation10 + $0x1d8] sm:$0xff]
        %v3925 = vld [vmem:[#allocation10 + $0x1e0] sm:$0xff]
        %v3926 = vld [vmem:[#allocation10 + $0x1e8] sm:$0xff]
        %v3927 = vld [vmem:[#allocation10 + $0x1f0] sm:$0xff]
        %v3928 = vld [vmem:[#allocation10 + $0x1f8] sm:$0xff]
        %v3929 = vld [vmem:[#allocation12] sm:$0x3]
        %v3931 = vlaneseq
        %v3932 = vshrl.u32 %v3931, 7
        %v3933 = vsub.s32 0, %v3932
        %v3934 = vrot.slane %v3929, %v3933
        %v3935 = vlaneseq
        %v3936 = vshrl.u32 %v3935, 7
        %v3937 = vsub.s32 1, %v3936
        %v3938 = vrot.slane %v3929, %v3937
        %3941 = vmatprep.subr.mxu0 %v3896
        %3942 = vmatpush1.msra.mxu0 %v3895
        %3943 = vmatprep.subr.mxu0 %v3894
        %3944 = vmatpush1.msra.mxu0 %v3893
        %3945 = vmatprep.subr.mxu0 %v3892
        %3946 = vmatpush1.msra.mxu0 %v3891
        %3947 = vmatprep.subr.mxu0 %v3890
        %3948 = vmatpush1.msra.mxu0 %v3889
        %3949 = vmatprep.subr.mxu0 %v3888
        %3950 = vmatpush1.msra.mxu0 %v3887
        %3951 = vmatprep.subr.mxu0 %v3886
        %3952 = vmatpush1.msra.mxu0 %v3885
        %3953 = vmatprep.subr.mxu0 %v3884
        %3954 = vmatpush1.msra.mxu0 %v3883
        %3955 = vmatprep.subr.mxu0 %v3882
        %3956 = vmatpush1.msra.mxu0 %v3881
        %3957 = vmatprep.subr.mxu0 %v3880
        %3958 = vmatpush1.msra.mxu0 %v3879
        %3959 = vmatprep.subr.mxu0 %v3878
        %3960 = vmatpush1.msra.mxu0 %v3877
        %3961 = vmatprep.subr.mxu0 %v3876
        %3962 = vmatpush1.msra.mxu0 %v3875
        %3963 = vmatprep.subr.mxu0 %v3874
        %3964 = vmatpush1.msra.mxu0 %v3873
        %3965 = vmatprep.subr.mxu0 %v3872
        %3966 = vmatpush1.msra.mxu0 %v3871
        %3967 = vmatprep.subr.mxu0 %v3870
        %3968 = vmatpush1.msra.mxu0 %v3869
        %3969 = vmatprep.subr.mxu0 %v3868
        %3970 = vmatpush1.msra.mxu0 %v3867
        %3971 = vmatprep.subr.mxu0 %v3866
        %3972 = vmatpush1.msra.mxu0 %v3865
        %3973 = vmatprep.subr.mxu0 %v3928
        %3974 = vmatpush2.msra.mxu0 %v3927
        %3975 = vmatprep.subr.mxu0 %v3926
        %3976 = vmatpush2.msra.mxu0 %v3925
        %3977 = vmatprep.subr.mxu0 %v3924
        %3978 = vmatpush2.msra.mxu0 %v3923
        %3979 = vmatprep.subr.mxu0 %v3922
        %3980 = vmatpush2.msra.mxu0 %v3921
        %3981 = vmatprep.subr.mxu0 %v3920
        %3982 = vmatpush2.msra.mxu0 %v3919
        %3983 = vmatprep.subr.mxu0 %v3918
        %3984 = vmatpush2.msra.mxu0 %v3917
        %3985 = vmatprep.subr.mxu0 %v3916
        %3986 = vmatpush2.msra.mxu0 %v3915
        %3987 = vmatprep.subr.mxu0 %v3914
        %3988 = vmatpush2.msra.mxu0 %v3913
        %3989 = vmatprep.subr.mxu0 %v3912
        %3990 = vmatpush2.msra.mxu0 %v3911
        %3991 = vmatprep.subr.mxu0 %v3910
        %3992 = vmatpush2.msra.mxu0 %v3909
        %3993 = vmatprep.subr.mxu0 %v3908
        %3994 = vmatpush2.msra.mxu0 %v3907
        %3995 = vmatprep.subr.mxu0 %v3906
        %3996 = vmatpush2.msra.mxu0 %v3905
        %3997 = vmatprep.subr.mxu0 %v3904
        %3998 = vmatpush2.msra.mxu0 %v3903
        %3999 = vmatprep.subr.mxu0 %v3902
        %4000 = vmatpush2.msra.mxu0 %v3901
        %4001 = vmatprep.subr.mxu0 %v3900
        %4002 = vmatpush2.msra.mxu0 %v3899
        %4003 = vmatprep.subr.mxu0 %v3898
        %4004 = vmatpush2.msra.mxu0 %v3897
        %4005 = vmatprep.mubr.f32.mxu0 %v3834
        %4006 = vmatmul.mubr.f32.gmra.mxu0 %v3833
        %v4007 = vpop.f32.mrf.mxu0
        %v4008 = vadd.f32 %v3934, %v4007
        %v4009 = vpop.f32.mrf.mxu0
        %v4010 = vadd.f32 %v3938, %v4009
        %4011 = vmatprep.mubr.f32.mxu0 %v3836
        %4012 = vmatmul.mubr.f32.gmra.mxu0 %v3835
        %v4013 = vpop.f32.mrf.mxu0
        %v4014 = vadd.f32 %v3934, %v4013
        %v4015 = vpop.f32.mrf.mxu0
        %v4016 = vadd.f32 %v3938, %v4015
        %4017 = vmatprep.mubr.f32.mxu0 %v3838
        %4018 = vmatmul.mubr.f32.gmra.mxu0 %v3837
        %v4019 = vpop.f32.mrf.mxu0
        %v4020 = vadd.f32 %v3934, %v4019
        %v4021 = vpop.f32.mrf.mxu0
        %v4022 = vadd.f32 %v3938, %v4021
        %4023 = vmatprep.mubr.f32.mxu0 %v3840
        %4024 = vmatmul.mubr.f32.gmra.mxu0 %v3839
        %v4025 = vpop.f32.mrf.mxu0
        %v4026 = vadd.f32 %v3934, %v4025
        %v4027 = vpop.f32.mrf.mxu0
        %v4028 = vadd.f32 %v3938, %v4027
        %4029 = vmatprep.mubr.f32.mxu0 %v3842
        %4030 = vmatmul.mubr.f32.gmra.mxu0 %v3841
        %v4031 = vpop.f32.mrf.mxu0
        %v4032 = vadd.f32 %v3934, %v4031
        %v4033 = vpop.f32.mrf.mxu0
        %v4034 = vadd.f32 %v3938, %v4033
        %4035 = vmatprep.mubr.f32.mxu0 %v3844
        %4036 = vmatmul.mubr.f32.gmra.mxu0 %v3843
        %v4037 = vpop.f32.mrf.mxu0
        %v4038 = vadd.f32 %v3934, %v4037
        %v4039 = vpop.f32.mrf.mxu0
        %v4040 = vadd.f32 %v3938, %v4039
        %4041 = vmatprep.mubr.f32.mxu0 %v3846
        %4042 = vmatmul.mubr.f32.gmra.mxu0 %v3845
        %v4043 = vpop.f32.mrf.mxu0
        %v4044 = vadd.f32 %v3934, %v4043
        %v4045 = vpop.f32.mrf.mxu0
        %v4046 = vadd.f32 %v3938, %v4045
        %4047 = vmatprep.mubr.f32.mxu0 %v3848
        %4048 = vmatmul.mubr.f32.gmra.mxu0 %v3847
        %v4049 = vpop.f32.mrf.mxu0
        %v4050 = vadd.f32 %v3934, %v4049
        %v4051 = vpop.f32.mrf.mxu0
        %v4052 = vadd.f32 %v3938, %v4051
        %4053 = vmatprep.mubr.f32.mxu0 %v3850
        %4054 = vmatmul.mubr.f32.gmra.mxu0 %v3849
        %v4055 = vpop.f32.mrf.mxu0
        %v4056 = vadd.f32 %v3934, %v4055
        %v4057 = vpop.f32.mrf.mxu0
        %v4058 = vadd.f32 %v3938, %v4057
        %4059 = vmatprep.mubr.f32.mxu0 %v3852
        %4060 = vmatmul.mubr.f32.gmra.mxu0 %v3851
        %v4061 = vpop.f32.mrf.mxu0
        %v4062 = vadd.f32 %v3934, %v4061
        %v4063 = vpop.f32.mrf.mxu0
        %v4064 = vadd.f32 %v3938, %v4063
        %4065 = vmatprep.mubr.f32.mxu0 %v3854
        %4066 = vmatmul.mubr.f32.gmra.mxu0 %v3853
        %v4067 = vpop.f32.mrf.mxu0
        %v4068 = vadd.f32 %v3934, %v4067
        %v4069 = vpop.f32.mrf.mxu0
        %v4070 = vadd.f32 %v3938, %v4069
        %4071 = vmatprep.mubr.f32.mxu0 %v3856
        %4072 = vmatmul.mubr.f32.gmra.mxu0 %v3855
        %v4073 = vpop.f32.mrf.mxu0
        %v4074 = vadd.f32 %v3934, %v4073
        %v4075 = vpop.f32.mrf.mxu0
        %v4076 = vadd.f32 %v3938, %v4075
        %4077 = vmatprep.mubr.f32.mxu0 %v3858
        %4078 = vmatmul.mubr.f32.gmra.mxu0 %v3857
        %v4079 = vpop.f32.mrf.mxu0
        %v4080 = vadd.f32 %v3934, %v4079
        %v4081 = vpop.f32.mrf.mxu0
        %v4082 = vadd.f32 %v3938, %v4081
        %4083 = vmatprep.mubr.f32.mxu0 %v3860
        %4084 = vmatmul.mubr.f32.gmra.mxu0 %v3859
        %v4085 = vpop.f32.mrf.mxu0
        %v4086 = vadd.f32 %v3934, %v4085
        %v4087 = vpop.f32.mrf.mxu0
        %v4088 = vadd.f32 %v3938, %v4087
        %4089 = vmatprep.mubr.f32.mxu0 %v3862
        %4090 = vmatmul.mubr.f32.gmra.mxu0 %v3861
        %v4091 = vpop.f32.mrf.mxu0
        %v4092 = vadd.f32 %v3934, %v4091
        %v4093 = vpop.f32.mrf.mxu0
        %v4094 = vadd.f32 %v3938, %v4093
        %4095 = vmatprep.mubr.f32.mxu0 %v3864
        %4096 = vmatmul.mubr.f32.gmra.mxu0 %v3863
        %v4097 = vpop.f32.mrf.mxu0
        %v4098 = vadd.f32 %v3934, %v4097
        %v4099 = vpop.f32.mrf.mxu0
        %v4100 = vadd.f32 %v3938, %v4099
        %4101 = vdwg.mxu0
        %v4102 = vxor.u32 %v4008, 2147483648
        %v4103 = vxor.u32 %v4010, 2147483648
        %v4104 = vxor.u32 %v4014, 2147483648
        %v4105 = vxor.u32 %v4016, 2147483648
        %v4106 = vxor.u32 %v4020, 2147483648
        %v4107 = vxor.u32 %v4022, 2147483648
        %v4108 = vxor.u32 %v4026, 2147483648
        %v4109 = vxor.u32 %v4028, 2147483648
        %v4110 = vxor.u32 %v4032, 2147483648
        %v4111 = vxor.u32 %v4034, 2147483648
        %v4112 = vxor.u32 %v4038, 2147483648
        %v4113 = vxor.u32 %v4040, 2147483648
        %v4114 = vxor.u32 %v4044, 2147483648
        %v4115 = vxor.u32 %v4046, 2147483648
        %v4116 = vxor.u32 %v4050, 2147483648
        %v4117 = vxor.u32 %v4052, 2147483648
        %v4118 = vxor.u32 %v4056, 2147483648
        %v4119 = vxor.u32 %v4058, 2147483648
        %v4120 = vxor.u32 %v4062, 2147483648
        %v4121 = vxor.u32 %v4064, 2147483648
        %v4122 = vxor.u32 %v4068, 2147483648
        %v4123 = vxor.u32 %v4070, 2147483648
        %v4124 = vxor.u32 %v4074, 2147483648
        %v4125 = vxor.u32 %v4076, 2147483648
        %v4126 = vxor.u32 %v4080, 2147483648
        %v4127 = vxor.u32 %v4082, 2147483648
        %v4128 = vxor.u32 %v4086, 2147483648
        %v4129 = vxor.u32 %v4088, 2147483648
        %v4130 = vxor.u32 %v4092, 2147483648
        %v4131 = vxor.u32 %v4094, 2147483648
        %v4132 = vxor.u32 %v4098, 2147483648
        %v4133 = vxor.u32 %v4100, 2147483648
        %v4134 = vmul.f32 %v4102, 1.442695
        %v4135 = vpow.pop %v4134
        %v4136 = vmul.f32 %v4103, 1.442695
        %v4137 = vpow.pop %v4136
        %v4138 = vmul.f32 %v4104, 1.442695
        %v4139 = vpow.pop %v4138
        %v4140 = vmul.f32 %v4105, 1.442695
        %v4141 = vpow.pop %v4140
        %v4142 = vmul.f32 %v4106, 1.442695
        %v4143 = vpow.pop %v4142
        %v4144 = vmul.f32 %v4107, 1.442695
        %v4145 = vpow.pop %v4144
        %v4146 = vmul.f32 %v4108, 1.442695
        %v4147 = vpow.pop %v4146
        %v4148 = vmul.f32 %v4109, 1.442695
        %v4149 = vpow.pop %v4148
        %v4150 = vmul.f32 %v4110, 1.442695
        %v4151 = vpow.pop %v4150
        %v4152 = vmul.f32 %v4111, 1.442695
        %v4153 = vpow.pop %v4152
        %v4154 = vmul.f32 %v4112, 1.442695
        %v4155 = vpow.pop %v4154
        %v4156 = vmul.f32 %v4113, 1.442695
        %v4157 = vpow.pop %v4156
        %v4158 = vmul.f32 %v4114, 1.442695
        %v4159 = vpow.pop %v4158
        %v4160 = vmul.f32 %v4115, 1.442695
        %v4161 = vpow.pop %v4160
        %v4162 = vmul.f32 %v4116, 1.442695
        %v4163 = vpow.pop %v4162
        %v4164 = vmul.f32 %v4117, 1.442695
        %v4165 = vpow.pop %v4164
        %v4166 = vmul.f32 %v4118, 1.442695
        %v4167 = vpow.pop %v4166
        %v4168 = vmul.f32 %v4119, 1.442695
        %v4169 = vpow.pop %v4168
        %v4170 = vmul.f32 %v4120, 1.442695
        %v4171 = vpow.pop %v4170
        %v4172 = vmul.f32 %v4121, 1.442695
        %v4173 = vpow.pop %v4172
        %v4174 = vmul.f32 %v4122, 1.442695
        %v4175 = vpow.pop %v4174
        %v4176 = vmul.f32 %v4123, 1.442695
        %v4177 = vpow.pop %v4176
        %v4178 = vmul.f32 %v4124, 1.442695
        %v4179 = vpow.pop %v4178
        %v4180 = vmul.f32 %v4125, 1.442695
        %v4181 = vpow.pop %v4180
        %v4182 = vmul.f32 %v4126, 1.442695
        %v4183 = vpow.pop %v4182
        %v4184 = vmul.f32 %v4127, 1.442695
        %v4185 = vpow.pop %v4184
        %v4186 = vmul.f32 %v4128, 1.442695
        %v4187 = vpow.pop %v4186
        %v4188 = vmul.f32 %v4129, 1.442695
        %v4189 = vpow.pop %v4188
        %v4190 = vmul.f32 %v4130, 1.442695
        %v4191 = vpow.pop %v4190
        %v4192 = vmul.f32 %v4131, 1.442695
        %v4193 = vpow.pop %v4192
        %v4194 = vmul.f32 %v4132, 1.442695
        %v4195 = vpow.pop %v4194
        %v4196 = vmul.f32 %v4133, 1.442695
        %v4197 = vpow.pop %v4196
        %v4198 = vadd.f32 %v4135, 1.0
        %v4199 = vadd.f32 %v4137, 1.0
        %v4200 = vadd.f32 %v4139, 1.0
        %v4201 = vadd.f32 %v4141, 1.0
        %v4202 = vadd.f32 %v4143, 1.0
        %v4203 = vadd.f32 %v4145, 1.0
        %v4204 = vadd.f32 %v4147, 1.0
        %v4205 = vadd.f32 %v4149, 1.0
        %v4206 = vadd.f32 %v4151, 1.0
        %v4207 = vadd.f32 %v4153, 1.0
        %v4208 = vadd.f32 %v4155, 1.0
        %v4209 = vadd.f32 %v4157, 1.0
        %v4210 = vadd.f32 %v4159, 1.0
        %v4211 = vadd.f32 %v4161, 1.0
        %v4212 = vadd.f32 %v4163, 1.0
        %v4213 = vadd.f32 %v4165, 1.0
        %v4214 = vadd.f32 %v4167, 1.0
        %v4215 = vadd.f32 %v4169, 1.0
        %v4216 = vadd.f32 %v4171, 1.0
        %v4217 = vadd.f32 %v4173, 1.0
        %v4218 = vadd.f32 %v4175, 1.0
        %v4219 = vadd.f32 %v4177, 1.0
        %v4220 = vadd.f32 %v4179, 1.0
        %v4221 = vadd.f32 %v4181, 1.0
        %v4222 = vadd.f32 %v4183, 1.0
        %v4223 = vadd.f32 %v4185, 1.0
        %v4224 = vadd.f32 %v4187, 1.0
        %v4225 = vadd.f32 %v4189, 1.0
        %v4226 = vadd.f32 %v4191, 1.0
        %v4227 = vadd.f32 %v4193, 1.0
        %v4228 = vadd.f32 %v4195, 1.0
        %v4229 = vadd.f32 %v4197, 1.0
        %v4230 = vrcp.pop %v4198
        %v4231 = vmul.f32 1.0, %v4230
        %v4232 = vrcp.pop %v4199
        %v4233 = vmul.f32 1.0, %v4232
        %v4234 = vrcp.pop %v4200
        %v4235 = vmul.f32 1.0, %v4234
        %v4236 = vrcp.pop %v4201
        %v4237 = vmul.f32 1.0, %v4236
        %v4238 = vrcp.pop %v4202
        %v4239 = vmul.f32 1.0, %v4238
        %v4240 = vrcp.pop %v4203
        %v4241 = vmul.f32 1.0, %v4240
        %v4242 = vrcp.pop %v4204
        %v4243 = vmul.f32 1.0, %v4242
        %v4244 = vrcp.pop %v4205
        %v4245 = vmul.f32 1.0, %v4244
        %v4246 = vrcp.pop %v4206
        %v4247 = vmul.f32 1.0, %v4246
        %v4248 = vrcp.pop %v4207
        %v4249 = vmul.f32 1.0, %v4248
        %v4250 = vrcp.pop %v4208
        %v4251 = vmul.f32 1.0, %v4250
        %v4252 = vrcp.pop %v4209
        %v4253 = vmul.f32 1.0, %v4252
        %v4254 = vrcp.pop %v4210
        %v4255 = vmul.f32 1.0, %v4254
        %v4256 = vrcp.pop %v4211
        %v4257 = vmul.f32 1.0, %v4256
        %v4258 = vrcp.pop %v4212
        %v4259 = vmul.f32 1.0, %v4258
        %v4260 = vrcp.pop %v4213
        %v4261 = vmul.f32 1.0, %v4260
        %v4262 = vrcp.pop %v4214
        %v4263 = vmul.f32 1.0, %v4262
        %v4264 = vrcp.pop %v4215
        %v4265 = vmul.f32 1.0, %v4264
        %v4266 = vrcp.pop %v4216
        %v4267 = vmul.f32 1.0, %v4266
        %v4268 = vrcp.pop %v4217
        %v4269 = vmul.f32 1.0, %v4268
        %v4270 = vrcp.pop %v4218
        %v4271 = vmul.f32 1.0, %v4270
        %v4272 = vrcp.pop %v4219
        %v4273 = vmul.f32 1.0, %v4272
        %v4274 = vrcp.pop %v4220
        %v4275 = vmul.f32 1.0, %v4274
        %v4276 = vrcp.pop %v4221
        %v4277 = vmul.f32 1.0, %v4276
        %v4278 = vrcp.pop %v4222
        %v4279 = vmul.f32 1.0, %v4278
        %v4280 = vrcp.pop %v4223
        %v4281 = vmul.f32 1.0, %v4280
        %v4282 = vrcp.pop %v4224
        %v4283 = vmul.f32 1.0, %v4282
        %v4284 = vrcp.pop %v4225
        %v4285 = vmul.f32 1.0, %v4284
        %v4286 = vrcp.pop %v4226
        %v4287 = vmul.f32 1.0, %v4286
        %v4288 = vrcp.pop %v4227
        %v4289 = vmul.f32 1.0, %v4288
        %v4290 = vrcp.pop %v4228
        %v4291 = vmul.f32 1.0, %v4290
        %v4292 = vrcp.pop %v4229
        %v4293 = vmul.f32 1.0, %v4292
        %4294 = vst [vmem:[%s383] sm:$0xff] %v4231
        %4295 = vst [vmem:[%s383 + $0x8] sm:$0xff] %v4233
        %4296 = vst [vmem:[%s383 + $0x10] sm:$0xff] %v4235
        %4297 = vst [vmem:[%s383 + $0x18] sm:$0xff] %v4237
        %4298 = vst [vmem:[%s383 + $0x20] sm:$0xff] %v4239
        %4299 = vst [vmem:[%s383 + $0x28] sm:$0xff] %v4241
        %4300 = vst [vmem:[%s383 + $0x30] sm:$0xff] %v4243
        %4301 = vst [vmem:[%s383 + $0x38] sm:$0xff] %v4245
        %4302 = vst [vmem:[%s383 + $0x40] sm:$0xff] %v4247
        %4303 = vst [vmem:[%s383 + $0x48] sm:$0xff] %v4249
        %4304 = vst [vmem:[%s383 + $0x50] sm:$0xff] %v4251
        %4305 = vst [vmem:[%s383 + $0x58] sm:$0xff] %v4253
        %4306 = vst [vmem:[%s383 + $0x60] sm:$0xff] %v4255
        %4307 = vst [vmem:[%s383 + $0x68] sm:$0xff] %v4257
        %4308 = vst [vmem:[%s383 + $0x70] sm:$0xff] %v4259
        %4309 = vst [vmem:[%s383 + $0x78] sm:$0xff] %v4261
        %4310 = vst [vmem:[%s383 + $0x80] sm:$0xff] %v4263
        %4311 = vst [vmem:[%s383 + $0x88] sm:$0xff] %v4265
        %4312 = vst [vmem:[%s383 + $0x90] sm:$0xff] %v4267
        %4313 = vst [vmem:[%s383 + $0x98] sm:$0xff] %v4269
        %4314 = vst [vmem:[%s383 + $0xa0] sm:$0xff] %v4271
        %4315 = vst [vmem:[%s383 + $0xa8] sm:$0xff] %v4273
        %4316 = vst [vmem:[%s383 + $0xb0] sm:$0xff] %v4275
        %4317 = vst [vmem:[%s383 + $0xb8] sm:$0xff] %v4277
        %4318 = vst [vmem:[%s383 + $0xc0] sm:$0xff] %v4279
        %4319 = vst [vmem:[%s383 + $0xc8] sm:$0xff] %v4281
        %4320 = vst [vmem:[%s383 + $0xd0] sm:$0xff] %v4283
        %4321 = vst [vmem:[%s383 + $0xd8] sm:$0xff] %v4285
        %4322 = vst [vmem:[%s383 + $0xe0] sm:$0xff] %v4287
        %4323 = vst [vmem:[%s383 + $0xe8] sm:$0xff] %v4289
        %4324 = vst [vmem:[%s383 + $0xf0] sm:$0xff] %v4291
        %4325 = vst [vmem:[%s383 + $0xf8] sm:$0xff] %v4293
        %s4326 = smul.u32 16, %s24
        %p4327 = scmp.lt.s32.totalorder %s4326, 31
        %s4328 = scalar_select %p4327, %s4326, 31
        %s4329 = smul.addr %s4328, 2
        %s4330 = smul.addr %s4329, 8
        %s4331 = scalar_lea.vmem %s7, %s4330
        // Predicated region
        $region77: #{base_model_forward.1} parent=47 // pred_check
          %p4332 = pneg %p194
        $region78: #{base_model_forward.1} parent=47 // pred_check_branch
          %4334 = sbr.rel (%p4332) target = $region80
        $region79: #{base_model_forward.1} parent=47 // pred_region
          %s4335 = smul.u32 16, %s24
        $region80: #{base_model_forward.1} parent=47 // pred_fallthru
          _
      $region48: #{base_model_forward.1} parent=5 // pred_fallthru
        _
      %p4336 = scmp.le.s32.totalorder 2, %s19
      // Predicated region
      $region81: #{base_model_forward.1} parent=5 // pred_check
        %p4337 = pneg %p4336
      $region82: #{base_model_forward.1} parent=5 // pred_check_branch
        %4339 = sbr.rel (%p4337) target = $region84
      $region83: #{base_model_forward.1} parent=5 // pred_region
        %s4340 = ssub.s32 %s19, 2
        // Predicated region
        $region85: #{base_model_forward.1} parent=83 // pred_check
          %p4341 = pneg %p200
        $region86: #{base_model_forward.1} parent=83 // pred_check_branch
          %4343 = sbr.rel (%p4341) target = $region88
        $region87: #{base_model_forward.1} parent=83 // pred_region
          %s4344 = smul.u32 16, %s25
          %p4345 = scmp.lt.s32.totalorder %s4344, 31
          %s4346 = scalar_select %p4345, %s4344, 31
          %s4347 = smul.addr %s4346, 2
          %s4348 = smul.addr %s4347, 8
          %s4349 = scalar_lea.vmem %s7, %s4348
        $region88: #{base_model_forward.1} parent=83 // pred_fallthru
          _
      $region84: #{base_model_forward.1} parent=5 // pred_fallthru
        _
    $region6: #{base_model_forward.1} parent=1 // loop_footer
      %s23 = sadd.s32 1, %s19
    $region7: #{base_model_forward.1} parent=1 // loop_footer_branch
      %18 = sbr.rel target = $region3
    $region8: #{base_model_forward.1} parent=1 // loop_exit
      _
    %4350 = vsyncpa [#allocation3], 1
    %s4351 = scalar_lea.sflag [#allocation3], 1
    %4352 = vsyncpa %s4351, 1
    %4353 = vsyncpa [#allocation5], 1
    %4354 = vsyncpa [#allocation8], 1
    %4355 = vsyncpa [#allocation11], 1

</llo_original>
